<compile_context>
chip_gen: v7x
topology: tpu7x:2x2x1
jax: 0.10.0
libtpu: 0.0.40
codegen_flags: <defaults>
</compile_context>

<pallas_src>
import math

import jax
import jax.numpy as jnp
from jax import lax
from jax.experimental import pallas as pl
from jax.experimental.pallas import tpu as pltpu


def _default_vmem_limit():
    # v7x: 64 MiB VMEM/TC -> ~48 MiB limit; v5e/v6e: 128 MiB -> ~96-100 MiB.
    try:
        cap = pltpu.get_tpu_info().vmem_capacity_bytes
    except Exception:  # conservative fallback (safe on every generation)
        cap = 64 * 1024 * 1024
    return int(min(cap * 3 // 4, 100 * 1024 * 1024))


_VMEM_LIMIT = _default_vmem_limit()

# Fold the 3 dx taps into the contraction dim (K=3*Cin) only while Cin is small
# enough that it improves MXU fill.  128 is the safe choice for v5e; on
# v6e/v7x (256-deep MXU) 256 would also pay off for the 128-channel layers.
_FOLD_CIN_MAX = 128


# ---------------------------------------------------------------------------
# Kernels
# ---------------------------------------------------------------------------

def _make_conv_kernel(pool, fold, pack):
    """3x3 conv + folded BN (scale/shift) + ReLU on one row band, optionally
    with a fused 2x2/stride-2 maxpool and lane-dense channel packing.

    xm_ref:    (1, R, W, Cin)   bf16 aligned row band
    xt_ref:    (1, 1, W, Cin)   bf16 row above the band (clamped at the edge)
    xb_ref:    (1, 1, W, Cin)   bf16 row below the band (clamped at the edge)
    w_ref:     (3, 3*Cin, Cout) bf16 if fold else (9, Cin, Cout) bf16
    scale_ref: (1, Cout)        f32 folded BN scale (or ones)
    shift_ref: (1, Cout)        f32 folded BN shift (or conv bias)
    o_ref:     (1, Ro, Wo/pack, pack*Cout) bf16
    xp_ref:    (R+2, W+2, Cin)  bf16 VMEM halo scratch
    """

    def kernel(xm_ref, xt_ref, xb_ref, w_ref, scale_ref, shift_ref, o_ref,
               xp_ref):
        b = pl.program_id(1)
        nb = pl.num_programs(1)
        _, R, W, Cin = xm_ref.shape
        Cout = scale_ref.shape[1]

        # --- assemble the halo'd band; zero ONLY the halo strips -----------
        xp_ref[:, 0:1, :] = jnp.zeros((R + 2, 1, Cin), xp_ref.dtype)
        xp_ref[:, W + 1:W + 2, :] = jnp.zeros((R + 2, 1, Cin), xp_ref.dtype)
        xp_ref[1:R + 1, 1:W + 1, :] = xm_ref[0]
        xp_ref[0:1, 1:W + 1, :] = xt_ref[0]
        xp_ref[R + 1:R + 2, 1:W + 1, :] = xb_ref[0]

        @pl.when(b == 0)
        def _():  # top image edge: zero the top halo row
            xp_ref[0:1, 1:W + 1, :] = jnp.zeros((1, W, Cin), xp_ref.dtype)

        @pl.when(b == nb - 1)
        def _():  # bottom image edge: zero the bottom halo row
            xp_ref[R + 1:R + 2, 1:W + 1, :] = jnp.zeros((1, W, Cin),
                                                        xp_ref.dtype)

        # --- 3x3 conv as matmuls (accumulator init'ed by the first dot) ----
        acc = None
        if fold:
            for dy in range(3):
                rows = xp_ref[dy:dy + R, :, :]                  # (R, W+2, Cin)
                slab = jnp.concatenate(
                    [rows[:, 0:W, :], rows[:, 1:W + 1, :], rows[:, 2:W + 2, :]],
                    axis=-1).reshape(R * W, 3 * Cin)
                d = jnp.dot(slab, w_ref[dy],
                            preferred_element_type=jnp.float32)
                acc = d if acc is None else acc + d
        else:
            for dy in range(3):
                for dx in range(3):
                    patch = xp_ref[dy:dy + R, dx:dx + W, :].reshape(R * W, Cin)
                    d = jnp.dot(patch, w_ref[dy * 3 + dx],
                                preferred_element_type=jnp.float32)
                    acc = d if acc is None else acc + d

        # --- BN (scale/shift) + ReLU, then bf16 for pool / store path ------
        y = acc * scale_ref[0] + shift_ref[0]
        y = jnp.maximum(y, 0.0).astype(o_ref.dtype).reshape(R, W, Cout)

        if pool:
            # H-direction max first (major dim, cheap block slices), then W.
            y = y.reshape(R // 2, 2, W, Cout)
            y = jnp.maximum(y[:, 0, :, :], y[:, 1, :, :])       # (R/2, W, C)
            y = y.reshape(R // 2, W // 2, 2, Cout)
            y = jnp.maximum(y[:, :, 0, :], y[:, :, 1, :])       # (R/2, W/2, C)

        Ro, Wo = y.shape[0], y.shape[1]
        if pack > 1:
            # Pack `pack` adjacent W columns into a 128-lane last dim so the
            # output stores are unmasked full-width vst.  The flat layout is
            # identical to (Ro, Wo, Cout) row-major.
            y = y.reshape(Ro, Wo // pack, pack, Cout)
            y = jnp.concatenate([y[:, :, i, :] for i in range(pack)], axis=-1)

        o_ref[0] = y

    return kernel


def _maxpool2x2_kernel(x_ref, o_ref):
    """Standalone 2x2 / stride-2 max pool (only used when an 'M' entry does
    not directly follow a conv)."""
    _, H, W, C = x_ref.shape
    x = x_ref[0]                                                # (H, W, C)
    x = x.reshape(H // 2, 2, W, C)
    x = jnp.maximum(x[:, 0, :, :], x[:, 1, :, :])               # (H/2, W, C)
    x = x.reshape(H // 2, W // 2, 2, C)
    o_ref[0] = jnp.maximum(x[:, :, 0, :], x[:, :, 1, :])        # (H/2, W/2, C)


def _head_kernel(x_ref, w_ref, scale_ref, shift_ref, o_ref):
    """Classifier: 1x1 conv + folded BN + ReLU + AdaptiveAvgPool(1) + flatten.

    x_ref:     (1, H, W, C)  bf16
    w_ref:     (C, Kp)       bf16  (K padded to a multiple of 128 lanes)
    scale_ref: (1, Kp)       f32
    shift_ref: (1, Kp)       f32
    o_ref:     (1, Kp)       f32
    """
    _, H, W, C = x_ref.shape
    x = x_ref[0].reshape(H * W, C)
    y = jnp.dot(x, w_ref[...], preferred_element_type=jnp.float32)
    y = y * scale_ref[0] + shift_ref[0]
    y = jnp.maximum(y, 0.0)
    y = jnp.sum(y, axis=0, keepdims=True) * (1.0 / (H * W))     # global avg
    o_ref[...] = y.astype(o_ref.dtype)


# ---------------------------------------------------------------------------
# Band-size selection (VMEM-budget aware)
# ---------------------------------------------------------------------------

def _pick_band_rows(N, H, W, Cin, Cout, pool, fold):
    budget = max(_VMEM_LIMIT // 2, 4 * 1024 * 1024)

    def est(r):
        ro, wo = (r // 2, W // 2) if pool else (r, W)
        byt = 2 * r * W * Cin * 2            # double-buffered band input
        byt += 2 * 2 * W * Cin * 2           # halo rows (2 bufs x 2 rows)
        byt += (r + 2) * (W + 2) * Cin * 2   # halo scratch
        if fold:
            byt += r * W * 3 * Cin * 2       # folded (R*W, 3*Cin) slab
        byt += r * W * Cout * 4              # f32 accumulator
        byt += r * W * Cout * 2              # bf16 epilogue value
        byt += 2 * ro * wo * Cout * 2        # double-buffered output band
        byt += 2 * 9 * Cin * Cout * 2        # double-buffered weights
        return byt

    cands = [r for r in range(H, 0, -1)
             if H % r == 0 and (not pool or r % 2 == 0)]
    fitting = [r for r in cands if est(r) <= budget]
    if not fitting:
        return cands[-1]                     # smallest valid band; best effort
    if N == 1:
        # v7x has 2 TensorCores: prefer >=2 grid steps on the band axis.
        multi = [r for r in fitting if H // r >= 2]
        if multi:
            return multi[0]
    return fitting[0]


# ---------------------------------------------------------------------------
# Wrappers (glue: dtype casts, weight packing, BlockSpecs)
# ---------------------------------------------------------------------------

def conv3x3_bn_relu(x, w, scale, shift, pool, band_rows=None):
    """x: (N,H,W,Cin) NHWC; w: (3,3,Cin,Cout); scale/shift: (Cout,)."""
    N, H, W, Cin = x.shape
    Cout = w.shape[-1]
    if pool:
        assert H % 2 == 0 and W % 2 == 0, "2x2/stride-2 pool needs even H, W"
    fold = Cin < _FOLD_CIN_MAX

    R = _pick_band_rows(N, H, W, Cin, Cout, pool, fold) \
        if band_rows is None else band_rows
    assert H % R == 0 and (not pool or R % 2 == 0), (H, R, pool)
    NB = H // R
    Ho, Wo = (H // 2, W // 2) if pool else (H, W)
    Ro = R // 2 if pool else R

    # Lane-dense channel packing for small Cout (dense 128-lane stores).
    pack = 1
    if Cout < 128 and 128 % Cout == 0 and Wo % (128 // Cout) == 0:
        pack = 128 // Cout

    if fold:
        wk = w.reshape(3, 3 * Cin, Cout).astype(jnp.bfloat16)
        w_spec = pl.BlockSpec((3, 3 * Cin, Cout), lambda n, b: (0, 0, 0))
    else:
        wk = w.reshape(9, Cin, Cout).astype(jnp.bfloat16)
        w_spec = pl.BlockSpec((9, Cin, Cout), lambda n, b: (0, 0, 0))

    if pack > 1:
        out_struct = jax.ShapeDtypeStruct((N, Ho, Wo // pack, pack * Cout),
                                          jnp.bfloat16)
        out_spec = pl.BlockSpec((1, Ro, Wo // pack, pack * Cout),
                                lambda n, b: (n, b, 0, 0))
    else:
        out_struct = jax.ShapeDtypeStruct((N, Ho, Wo, Cout), jnp.bfloat16)
        out_spec = pl.BlockSpec((1, Ro, Wo, Cout), lambda n, b: (n, b, 0, 0))

    cost = pl.CostEstimate(
        flops=2 * N * H * W * 9 * Cin * Cout,
        transcendentals=0,
        bytes_accessed=2 * (N * H * W * Cin + N * Ho * Wo * Cout
                            + 9 * Cin * Cout))

    xb = x.astype(jnp.bfloat16)
    out = pl.pallas_call(
        _make_conv_kernel(pool, fold, pack),
        out_shape=out_struct,
        grid=(N, NB),
        in_specs=[
            # aligned R-row band
            pl.BlockSpec((1, R, W, Cin), lambda n, b: (n, b, 0, 0)),
            # 1-row top halo (clamped; zeroed in-kernel when b == 0)
            pl.BlockSpec((1, 1, W, Cin),
                         lambda n, b: (n, jnp.maximum(b * R - 1, 0), 0, 0)),
            # 1-row bottom halo (clamped; zeroed in-kernel when b == last)
            pl.BlockSpec((1, 1, W, Cin),
                         lambda n, b: (n, jnp.minimum((b + 1) * R, H - 1),
                                       0, 0)),
            w_spec,
            pl.BlockSpec((1, Cout), lambda n, b: (0, 0)),
            pl.BlockSpec((1, Cout), lambda n, b: (0, 0)),
        ],
        out_specs=out_spec,
        scratch_shapes=[pltpu.VMEM((R + 2, W + 2, Cin), jnp.bfloat16)],
        compiler_params=pltpu.CompilerParams(
            dimension_semantics=("parallel", "parallel"),
            vmem_limit_bytes=_VMEM_LIMIT),
        cost_estimate=cost,
    )(xb, xb, xb, wk,
      scale.reshape(1, Cout).astype(jnp.float32),
      shift.reshape(1, Cout).astype(jnp.float32))

    if pack > 1:
        out = out.reshape(N, Ho, Wo, Cout)   # contiguous collapse: metadata only
    return out


def maxpool2x2(x):
    N, H, W, C = x.shape
    return pl.pallas_call(
        _maxpool2x2_kernel,
        out_shape=jax.ShapeDtypeStruct((N, H // 2, W // 2, C), x.dtype),
        grid=(N,),
        in_specs=[pl.BlockSpec((1, H, W, C), lambda n: (n, 0, 0, 0))],
        out_specs=pl.BlockSpec((1, H // 2, W // 2, C), lambda n: (n, 0, 0, 0)),
        compiler_params=pltpu.CompilerParams(
            dimension_semantics=("parallel",),
            vmem_limit_bytes=_VMEM_LIMIT),
    )(x)


def head_1x1_bn_relu_gap(x, w, scale, shift):
    """x: (N,H,W,C); w: (C,K) -> (N,K). Output lanes padded to 128, sliced back."""
    N, H, W, C = x.shape
    K = w.shape[1]
    Kp = ((K + 127) // 128) * 128
    wp = jnp.zeros((C, Kp), jnp.float32).at[:, :K].set(w).astype(jnp.bfloat16)
    sp = jnp.zeros((1, Kp), jnp.float32).at[0, :K].set(scale)
    bp = jnp.zeros((1, Kp), jnp.float32).at[0, :K].set(shift)
    out = pl.pallas_call(
        _head_kernel,
        out_shape=jax.ShapeDtypeStruct((N, Kp), jnp.float32),
        grid=(N,),
        in_specs=[
            pl.BlockSpec((1, H, W, C), lambda n: (n, 0, 0, 0)),
            pl.BlockSpec((C, Kp), lambda n: (0, 0)),
            pl.BlockSpec((1, Kp), lambda n: (0, 0)),
            pl.BlockSpec((1, Kp), lambda n: (0, 0)),
        ],
        out_specs=pl.BlockSpec((1, Kp), lambda n: (n, 0)),
        compiler_params=pltpu.CompilerParams(
            dimension_semantics=("parallel",),
            vmem_limit_bytes=_VMEM_LIMIT),
    )(x.astype(jnp.bfloat16), wp, sp, bp)
    return out[:, :K]                                           # Flatten() + unpad


# ---------------------------------------------------------------------------
# Parameter init (deterministic, PyTorch-style uniform bounds) and forward
# ---------------------------------------------------------------------------

_BN_EPS = 1e-5


def _fold_bn(bias, cout):
    # BN at deterministic init: gamma=1, beta=0, running_mean=0, running_var=1.
    gamma = jnp.ones((cout,), jnp.float32)
    beta = jnp.zeros((cout,), jnp.float32)
    mean = jnp.zeros((cout,), jnp.float32)
    var = jnp.ones((cout,), jnp.float32)
    scale = gamma / jnp.sqrt(var + _BN_EPS)
    shift = beta + (bias - mean) * scale
    return scale, shift


def init_params(key, in_channels, cfg, num_classes, batch_norm):
    params = {"features": [], "head": None}
    c = in_channels
    for v in cfg:
        if v == "M":
            continue
        key, kw, kb = jax.random.split(key, 3)
        bound = 1.0 / math.sqrt(c * 9)
        w = jax.random.uniform(kw, (3, 3, c, v), jnp.float32, -bound, bound)
        b = jax.random.uniform(kb, (v,), jnp.float32, -bound, bound)
        if batch_norm:
            scale, shift = _fold_bn(b, v)
        else:
            scale, shift = jnp.ones((v,), jnp.float32), b
        params["features"].append((w, scale, shift))
        c = v

    # Classifier: Conv2dBnRelu(512, num_classes, 1)
    key, kw, kb = jax.random.split(key, 3)
    bound = 1.0 / math.sqrt(512)
    wh = jax.random.uniform(kw, (512, num_classes), jnp.float32, -bound, bound)
    bh = jax.random.uniform(kb, (num_classes,), jnp.float32, -bound, bound)
    hscale, hshift = _fold_bn(bh, num_classes)
    params["head"] = (wh, hscale, hshift)
    return params


def vgg_forward(params, x_nchw, cfg):
    # PyTorch NCHW -> NHWC once at the boundary.
    x = jnp.transpose(x_nchw, (0, 2, 3, 1))
    li = 0
    i = 0
    while i < len(cfg):
        v = cfg[i]
        if v == "M":
            # Only hit when an 'M' does not follow a conv.
            x = maxpool2x2(x)
            i += 1
        else:
            w, scale, shift = params["features"][li]
            fuse = (i + 1 < len(cfg)) and (cfg[i + 1] == "M")
            x = conv3x3_bn_relu(x, w, scale, shift, pool=fuse)
            li += 1
            i += 2 if fuse else 1
    wh, hscale, hshift = params["head"]
    assert x.shape[-1] == wh.shape[0], "classifier expects 512 input channels"
    return head_1x1_bn_relu_gap(x, wh, hscale, hshift)


# ---------------------------------------------------------------------------
# Pure-JAX reference for a single conv layer (correctness check)
# ---------------------------------------------------------------------------

def _conv_reference(x, w, scale, shift, pool):
    # Emulate the kernel's bf16 inputs with f32 accumulation.
    xb = x.astype(jnp.bfloat16).astype(jnp.float32)
    wb = w.astype(jnp.bfloat16).astype(jnp.float32)
    y = lax.conv_general_dilated(
        xb, wb, window_strides=(1, 1), padding=((1, 1), (1, 1)),
        dimension_numbers=("NHWC", "HWIO", "NHWC"),
        precision=lax.Precision.HIGHEST)
    y = y * scale + shift
    y = jnp.maximum(y, 0.0)
    if pool:
        y = lax.reduce_window(y, -jnp.inf, lax.max,
                              (1, 2, 2, 1), (1, 2, 2, 1), "VALID")
    return y


# ---------------------------------------------------------------------------

if __name__ == "__main__":
    key = jax.random.PRNGKey(0)

    # 1) Single conv layer (fused pool, lane packing) vs pure-JAX reference.
    key, kx, kw, kb = jax.random.split(key, 4)
    xs = jax.random.normal(kx, (2, 16, 16, 3), jnp.float32)
    ws = 0.2 * jax.random.normal(kw, (3, 3, 3, 64), jnp.float32)
    bs = 0.1 * jax.random.normal(kb, (64,), jnp.float32)
    ss = jnp.ones((64,), jnp.float32)
    got = conv3x3_bn_relu(xs, ws, ss, bs, pool=True).astype(jnp.float32)
    want = _conv_reference(xs, ws, ss, bs, pool=True).astype(jnp.float32)
    err = float(jnp.max(jnp.abs(got - want)))
    assert got.shape == want.shape, (got.shape, want.shape)
    assert err < 5e-2, f"conv vs reference mismatch: max abs err {err}"

    # 2) Multi-band tiling must agree with whole-image tiling (halo logic).
    key, kx, kw, kb = jax.random.split(key, 4)
    x2 = jax.random.normal(kx, (1, 32, 16, 8), jnp.float32)
    w2 = 0.2 * jax.random.normal(kw, (3, 3, 8, 16), jnp.float32)
    b2 = 0.1 * jax.random.normal(kb, (16,), jnp.float32)
    s2 = jnp.ones((16,), jnp.float32)
    for p in (False, True):
        whole = conv3x3_bn_relu(x2, w2, s2, b2, pool=p,
                                band_rows=32).astype(jnp.float32)
        banded = conv3x3_bn_relu(x2, w2, s2, b2, pool=p,
                                 band_rows=8).astype(jnp.float32)
        berr = float(jnp.max(jnp.abs(whole - banded)))
        assert berr < 1e-5, f"band tiling mismatch (pool={p}): {berr}"

    # 3) Full _VGG forward (features + classifier head).
    cfg = [64, "M", 128, "M", 512]   # last conv must emit 512 (head expects it)
    in_channels, num_classes = 3, 10
    batch, spatial = 2, 16
    key, pkey, xkey = jax.random.split(key, 3)
    params = init_params(pkey, in_channels, cfg, num_classes, batch_norm=True)
    x = jax.random.normal(xkey, (batch, in_channels, spatial, spatial),
                          jnp.float32)
    out = jax.block_until_ready(vgg_forward(params, x, cfg))
    assert out.shape == (batch, num_classes), out.shape
    assert bool(jnp.all(jnp.isfinite(out)))
    print("KERNEL_OK")
</pallas_src>

<mosaic_0001>
module attributes {stable_mosaic.version = 11 : i64} {
  func.func @kernel(%arg0: i32, %arg1: i32, %arg2: memref<1x16x16x3xbf16, #tpu.memory_space<vmem>>, %arg3: memref<1x1x16x3xbf16, #tpu.memory_space<vmem>>, %arg4: memref<1x1x16x3xbf16, #tpu.memory_space<vmem>>, %arg5: memref<3x9x64xbf16, #tpu.memory_space<vmem>>, %arg6: memref<1x64xf32, #tpu.memory_space<vmem>>, %arg7: memref<1x64xf32, #tpu.memory_space<vmem>>, %arg8: memref<1x8x4x128xbf16, #tpu.memory_space<vmem>>, %arg9: memref<18x18x3xbf16, #tpu.memory_space<vmem>>) attributes {dimension_semantics = [#tpu.dimension_semantics<parallel>, #tpu.dimension_semantics<parallel>], iteration_bounds = array<i64: 2, 1>, scalar_prefetch = 0 : i64, scratch_operands = 1 : i64, tpu.core_type = #tpu.core_type<tc>, window_params = [{transform_indices = @transform_0, window_bounds = array<i64: 1, 16, 16, 3>}, {transform_indices = @transform_1, window_bounds = array<i64: 1, 1, 16, 3>}, {transform_indices = @transform_2, window_bounds = array<i64: 1, 1, 16, 3>}, {pipeline_mode = #tpu.pipeline_mode<synchronous>, transform_indices = @transform_3, window_bounds = array<i64: 3, 9, 64>}, {pipeline_mode = #tpu.pipeline_mode<synchronous>, transform_indices = @transform_4, window_bounds = array<i64: 1, 64>}, {pipeline_mode = #tpu.pipeline_mode<synchronous>, transform_indices = @transform_5, window_bounds = array<i64: 1, 64>}, {transform_indices = @transform_6, window_bounds = array<i64: 1, 8, 4, 128>}]} {
    %cst = arith.constant 0.000000e+00 : bf16
    %0 = vector.broadcast %cst : bf16 to vector<18x1x3xbf16>
    %c0 = arith.constant 0 : index
    %c0_0 = arith.constant 0 : index
    %c0_1 = arith.constant 0 : index
    %1 = vector.load %arg9[%c0, %c0_0, %c0_1] : memref<18x18x3xbf16, #tpu.memory_space<vmem>>, vector<18x1x3xbf16>
    tpu.vector_store %arg9[%c0, %c0_0, %c0_1], %0 {strides = array<i32>} : memref<18x18x3xbf16, #tpu.memory_space<vmem>>, vector<18x1x3xbf16>,
    %cst_2 = arith.constant 0.000000e+00 : bf16
    %2 = vector.broadcast %cst_2 : bf16 to vector<18x1x3xbf16>
    %c0_3 = arith.constant 0 : index
    %c17 = arith.constant 17 : index
    %c0_4 = arith.constant 0 : index
    %3 = vector.load %arg9[%c0_3, %c17, %c0_4] : memref<18x18x3xbf16, #tpu.memory_space<vmem>>, vector<18x1x3xbf16>
    tpu.vector_store %arg9[%c0_3, %c17, %c0_4], %2 {strides = array<i32>} : memref<18x18x3xbf16, #tpu.memory_space<vmem>>, vector<18x1x3xbf16>,
    %c0_5 = arith.constant 0 : index
    %c0_6 = arith.constant 0 : index
    %c0_7 = arith.constant 0 : index
    %c0_8 = arith.constant 0 : index
    %4 = vector.load %arg2[%c0_5, %c0_6, %c0_7, %c0_8] : memref<1x16x16x3xbf16, #tpu.memory_space<vmem>>, vector<1x16x16x3xbf16>
    %5 = vector.shape_cast %4 : vector<1x16x16x3xbf16> to vector<16x16x3xbf16>
    %c1 = arith.constant 1 : index
    %c1_9 = arith.constant 1 : index
    %c0_10 = arith.constant 0 : index
    %6 = vector.load %arg9[%c1, %c1_9, %c0_10] : memref<18x18x3xbf16, #tpu.memory_space<vmem>>, vector<16x16x3xbf16>
    tpu.vector_store %arg9[%c1, %c1_9, %c0_10], %5 {strides = array<i32>} : memref<18x18x3xbf16, #tpu.memory_space<vmem>>, vector<16x16x3xbf16>,
    %c0_11 = arith.constant 0 : index
    %c0_12 = arith.constant 0 : index
    %c0_13 = arith.constant 0 : index
    %c0_14 = arith.constant 0 : index
    %7 = vector.load %arg3[%c0_11, %c0_12, %c0_13, %c0_14] : memref<1x1x16x3xbf16, #tpu.memory_space<vmem>>, vector<1x1x16x3xbf16>
    %8 = vector.shape_cast %7 : vector<1x1x16x3xbf16> to vector<1x16x3xbf16>
    %c0_15 = arith.constant 0 : index
    %c1_16 = arith.constant 1 : index
    %c0_17 = arith.constant 0 : index
    %9 = vector.load %arg9[%c0_15, %c1_16, %c0_17] : memref<18x18x3xbf16, #tpu.memory_space<vmem>>, vector<1x16x3xbf16>
    tpu.vector_store %arg9[%c0_15, %c1_16, %c0_17], %8 {strides = array<i32>} : memref<18x18x3xbf16, #tpu.memory_space<vmem>>, vector<1x16x3xbf16>,
    %c0_18 = arith.constant 0 : index
    %c0_19 = arith.constant 0 : index
    %c0_20 = arith.constant 0 : index
    %c0_21 = arith.constant 0 : index
    %10 = vector.load %arg4[%c0_18, %c0_19, %c0_20, %c0_21] : memref<1x1x16x3xbf16, #tpu.memory_space<vmem>>, vector<1x1x16x3xbf16>
    %11 = vector.shape_cast %10 : vector<1x1x16x3xbf16> to vector<1x16x3xbf16>
    %c17_22 = arith.constant 17 : index
    %c1_23 = arith.constant 1 : index
    %c0_24 = arith.constant 0 : index
    %12 = vector.load %arg9[%c17_22, %c1_23, %c0_24] : memref<18x18x3xbf16, #tpu.memory_space<vmem>>, vector<1x16x3xbf16>
    tpu.vector_store %arg9[%c17_22, %c1_23, %c0_24], %11 {strides = array<i32>} : memref<18x18x3xbf16, #tpu.memory_space<vmem>>, vector<1x16x3xbf16>,
    %c0_i32 = arith.constant 0 : i32
    %13 = arith.cmpi eq, %arg1, %c0_i32 : i32
    %14 = arith.extui %13 : i1 to i32
    %c0_i32_25 = arith.constant 0 : i32
    %15 = arith.cmpi ne, %14, %c0_i32_25 : i32
    scf.if %15 {
      %cst_57 = arith.constant 0.000000e+00 : bf16
      %83 = vector.broadcast %cst_57 : bf16 to vector<1x16x3xbf16>
      %c0_58 = arith.constant 0 : index
      %c1_59 = arith.constant 1 : index
      %c0_60 = arith.constant 0 : index
      %84 = vector.load %arg9[%c0_58, %c1_59, %c0_60] : memref<18x18x3xbf16, #tpu.memory_space<vmem>>, vector<1x16x3xbf16>
      tpu.vector_store %arg9[%c0_58, %c1_59, %c0_60], %83 {strides = array<i32>} : memref<18x18x3xbf16, #tpu.memory_space<vmem>>, vector<1x16x3xbf16>,
    } else {
    }
    %c0_i32_26 = arith.constant 0 : i32
    %16 = arith.cmpi eq, %arg1, %c0_i32_26 : i32
    %17 = arith.extui %16 : i1 to i32
    %c0_i32_27 = arith.constant 0 : i32
    %18 = arith.cmpi ne, %17, %c0_i32_27 : i32
    scf.if %18 {
      %cst_57 = arith.constant 0.000000e+00 : bf16
      %83 = vector.broadcast %cst_57 : bf16 to vector<1x16x3xbf16>
      %c17_58 = arith.constant 17 : index
      %c1_59 = arith.constant 1 : index
      %c0_60 = arith.constant 0 : index
      %84 = vector.load %arg9[%c17_58, %c1_59, %c0_60] : memref<18x18x3xbf16, #tpu.memory_space<vmem>>, vector<1x16x3xbf16>
      tpu.vector_store %arg9[%c17_58, %c1_59, %c0_60], %83 {strides = array<i32>} : memref<18x18x3xbf16, #tpu.memory_space<vmem>>, vector<1x16x3xbf16>,
    } else {
    }
    %c0_28 = arith.constant 0 : index
    %c0_29 = arith.constant 0 : index
    %c0_30 = arith.constant 0 : index
    %19 = vector.load %arg9[%c0_28, %c0_29, %c0_30] : memref<18x18x3xbf16, #tpu.memory_space<vmem>>, vector<16x18x3xbf16>
    %20 = vector.extract_strided_slice %19 {offsets = [0, 0, 0], sizes = [16, 16, 3], strides = [1, 1, 1]} : vector<16x18x3xbf16> to vector<16x16x3xbf16>
    %21 = vector.extract_strided_slice %19 {offsets = [0, 1, 0], sizes = [16, 16, 3], strides = [1, 1, 1]} : vector<16x18x3xbf16> to vector<16x16x3xbf16>
    %22 = vector.extract_strided_slice %19 {offsets = [0, 2, 0], sizes = [16, 16, 3], strides = [1, 1, 1]} : vector<16x18x3xbf16> to vector<16x16x3xbf16>
    %23 = tpu.concatenate %20, %21, %22 in 2 : vector<16x16x3xbf16>, vector<16x16x3xbf16>, vector<16x16x3xbf16> -> vector<16x16x9xbf16>
    %24 = vector.shape_cast %23 : vector<16x16x9xbf16> to vector<256x9xbf16>
    %c0_31 = arith.constant 0 : index
    %c0_32 = arith.constant 0 : index
    %c0_33 = arith.constant 0 : index
    %25 = vector.load %arg5[%c0_31, %c0_32, %c0_33] : memref<3x9x64xbf16, #tpu.memory_space<vmem>>, vector<1x9x64xbf16>
    %26 = vector.shape_cast %25 : vector<1x9x64xbf16> to vector<9x64xbf16>
    %cst_34 = arith.constant dense<0.000000e+00> : vector<256x64xf32>
    %27 = tpu.matmul %24, %26, %cst_34 {dimension_numbers = #tpu.dot_dimension_numbers<[1], [0], [0], [1], [0, 0, 1, 1], [], []>} : vector<256x9xbf16>, vector<9x64xbf16>, vector<256x64xf32> -> vector<256x64xf32>
    %c1_35 = arith.constant 1 : index
    %c0_36 = arith.constant 0 : index
    %c0_37 = arith.constant 0 : index
    %28 = vector.load %arg9[%c1_35, %c0_36, %c0_37] : memref<18x18x3xbf16, #tpu.memory_space<vmem>>, vector<16x18x3xbf16>
    %29 = vector.extract_strided_slice %28 {offsets = [0, 0, 0], sizes = [16, 16, 3], strides = [1, 1, 1]} : vector<16x18x3xbf16> to vector<16x16x3xbf16>
    %30 = vector.extract_strided_slice %28 {offsets = [0, 1, 0], sizes = [16, 16, 3], strides = [1, 1, 1]} : vector<16x18x3xbf16> to vector<16x16x3xbf16>
    %31 = vector.extract_strided_slice %28 {offsets = [0, 2, 0], sizes = [16, 16, 3], strides = [1, 1, 1]} : vector<16x18x3xbf16> to vector<16x16x3xbf16>
    %32 = tpu.concatenate %29, %30, %31 in 2 : vector<16x16x3xbf16>, vector<16x16x3xbf16>, vector<16x16x3xbf16> -> vector<16x16x9xbf16>
    %33 = vector.shape_cast %32 : vector<16x16x9xbf16> to vector<256x9xbf16>
    %c1_38 = arith.constant 1 : index
    %c0_39 = arith.constant 0 : index
    %c0_40 = arith.constant 0 : index
    %34 = vector.load %arg5[%c1_38, %c0_39, %c0_40] : memref<3x9x64xbf16, #tpu.memory_space<vmem>>, vector<1x9x64xbf16>
    %35 = vector.shape_cast %34 : vector<1x9x64xbf16> to vector<9x64xbf16>
    %cst_41 = arith.constant dense<0.000000e+00> : vector<256x64xf32>
    %36 = tpu.matmul %33, %35, %cst_41 {dimension_numbers = #tpu.dot_dimension_numbers<[1], [0], [0], [1], [0, 0, 1, 1], [], []>} : vector<256x9xbf16>, vector<9x64xbf16>, vector<256x64xf32> -> vector<256x64xf32>
    %37 = arith.addf %27, %36 : vector<256x64xf32>
    %c2 = arith.constant 2 : index
    %c0_42 = arith.constant 0 : index
    %c0_43 = arith.constant 0 : index
    %38 = vector.load %arg9[%c2, %c0_42, %c0_43] : memref<18x18x3xbf16, #tpu.memory_space<vmem>>, vector<16x18x3xbf16>
    %39 = vector.extract_strided_slice %38 {offsets = [0, 0, 0], sizes = [16, 16, 3], strides = [1, 1, 1]} : vector<16x18x3xbf16> to vector<16x16x3xbf16>
    %40 = vector.extract_strided_slice %38 {offsets = [0, 1, 0], sizes = [16, 16, 3], strides = [1, 1, 1]} : vector<16x18x3xbf16> to vector<16x16x3xbf16>
    %41 = vector.extract_strided_slice %38 {offsets = [0, 2, 0], sizes = [16, 16, 3], strides = [1, 1, 1]} : vector<16x18x3xbf16> to vector<16x16x3xbf16>
    %42 = tpu.concatenate %39, %40, %41 in 2 : vector<16x16x3xbf16>, vector<16x16x3xbf16>, vector<16x16x3xbf16> -> vector<16x16x9xbf16>
    %43 = vector.shape_cast %42 : vector<16x16x9xbf16> to vector<256x9xbf16>
    %c2_44 = arith.constant 2 : index
    %c0_45 = arith.constant 0 : index
    %c0_46 = arith.constant 0 : index
    %44 = vector.load %arg5[%c2_44, %c0_45, %c0_46] : memref<3x9x64xbf16, #tpu.memory_space<vmem>>, vector<1x9x64xbf16>
    %45 = vector.shape_cast %44 : vector<1x9x64xbf16> to vector<9x64xbf16>
    %cst_47 = arith.constant dense<0.000000e+00> : vector<256x64xf32>
    %46 = tpu.matmul %43, %45, %cst_47 {dimension_numbers = #tpu.dot_dimension_numbers<[1], [0], [0], [1], [0, 0, 1, 1], [], []>} : vector<256x9xbf16>, vector<9x64xbf16>, vector<256x64xf32> -> vector<256x64xf32>
    %47 = arith.addf %37, %46 : vector<256x64xf32>
    %c0_48 = arith.constant 0 : index
    %c0_49 = arith.constant 0 : index
    %48 = vector.load %arg6[%c0_48, %c0_49] : memref<1x64xf32, #tpu.memory_space<vmem>>, vector<1x64xf32>
    %49 = vector.shape_cast %48 : vector<1x64xf32> to vector<64xf32>
    %50 = vector.shape_cast %49 : vector<64xf32> to vector<1x64xf32>
    %51 = vector.broadcast %50 : vector<1x64xf32> to vector<256x64xf32>
    %52 = arith.mulf %47, %51 : vector<256x64xf32>
    %c0_50 = arith.constant 0 : index
    %c0_51 = arith.constant 0 : index
    %53 = vector.load %arg7[%c0_50, %c0_51] : memref<1x64xf32, #tpu.memory_space<vmem>>, vector<1x64xf32>
    %54 = vector.shape_cast %53 : vector<1x64xf32> to vector<64xf32>
    %55 = vector.shape_cast %54 : vector<64xf32> to vector<1x64xf32>
    %56 = vector.broadcast %55 : vector<1x64xf32> to vector<256x64xf32>
    %57 = arith.addf %52, %56 : vector<256x64xf32>
    %cst_52 = arith.constant 0.000000e+00 : f32
    %58 = vector.broadcast %cst_52 : f32 to vector<256x64xf32>
    %59 = arith.maximumf %57, %58 : vector<256x64xf32>
    %60 = arith.truncf %59 : vector<256x64xf32> to vector<256x64xbf16>
    %61 = vector.shape_cast %60 : vector<256x64xbf16> to vector<16x16x64xbf16>
    %62 = vector.shape_cast %61 : vector<16x16x64xbf16> to vector<8x2x16x64xbf16>
    %63 = vector.extract_strided_slice %62 {offsets = [0, 0, 0, 0], sizes = [8, 1, 16, 64], strides = [1, 1, 1, 1]} : vector<8x2x16x64xbf16> to vector<8x1x16x64xbf16>
    %64 = vector.shape_cast %63 : vector<8x1x16x64xbf16> to vector<8x16x64xbf16>
    %65 = vector.extract_strided_slice %62 {offsets = [0, 1, 0, 0], sizes = [8, 1, 16, 64], strides = [1, 1, 1, 1]} : vector<8x2x16x64xbf16> to vector<8x1x16x64xbf16>
    %66 = vector.shape_cast %65 : vector<8x1x16x64xbf16> to vector<8x16x64xbf16>
    %67 = arith.maximumf %64, %66 : vector<8x16x64xbf16>
    %68 = vector.shape_cast %67 : vector<8x16x64xbf16> to vector<8x8x2x64xbf16>
    %69 = vector.extract_strided_slice %68 {offsets = [0, 0, 0, 0], sizes = [8, 8, 1, 64], strides = [1, 1, 1, 1]} : vector<8x8x2x64xbf16> to vector<8x8x1x64xbf16>
    %70 = vector.shape_cast %69 : vector<8x8x1x64xbf16> to vector<8x8x64xbf16>
    %71 = vector.extract_strided_slice %68 {offsets = [0, 0, 1, 0], sizes = [8, 8, 1, 64], strides = [1, 1, 1, 1]} : vector<8x8x2x64xbf16> to vector<8x8x1x64xbf16>
    %72 = vector.shape_cast %71 : vector<8x8x1x64xbf16> to vector<8x8x64xbf16>
    %73 = arith.maximumf %70, %72 : vector<8x8x64xbf16>
    %74 = vector.shape_cast %73 : vector<8x8x64xbf16> to vector<8x4x2x64xbf16>
    %75 = vector.extract_strided_slice %74 {offsets = [0, 0, 0, 0], sizes = [8, 4, 1, 64], strides = [1, 1, 1, 1]} : vector<8x4x2x64xbf16> to vector<8x4x1x64xbf16>
    %76 = vector.shape_cast %75 : vector<8x4x1x64xbf16> to vector<8x4x64xbf16>
    %77 = vector.extract_strided_slice %74 {offsets = [0, 0, 1, 0], sizes = [8, 4, 1, 64], strides = [1, 1, 1, 1]} : vector<8x4x2x64xbf16> to vector<8x4x1x64xbf16>
    %78 = vector.shape_cast %77 : vector<8x4x1x64xbf16> to vector<8x4x64xbf16>
    %79 = tpu.concatenate %76, %78 in 2 : vector<8x4x64xbf16>, vector<8x4x64xbf16> -> vector<8x4x128xbf16>
    %c0_53 = arith.constant 0 : index
    %c0_54 = arith.constant 0 : index
    %c0_55 = arith.constant 0 : index
    %c0_56 = arith.constant 0 : index
    %80 = vector.load %arg8[%c0_53, %c0_54, %c0_55, %c0_56] : memref<1x8x4x128xbf16, #tpu.memory_space<vmem>>, vector<1x8x4x128xbf16>
    %81 = vector.shape_cast %80 : vector<1x8x4x128xbf16> to vector<8x4x128xbf16>
    %82 = vector.shape_cast %79 : vector<8x4x128xbf16> to vector<1x8x4x128xbf16>
    tpu.vector_store %arg8[%c0_53, %c0_54, %c0_55, %c0_56], %82 {strides = array<i32>} : memref<1x8x4x128xbf16, #tpu.memory_space<vmem>>, vector<1x8x4x128xbf16>,
    return
  }
  func.func @transform_0(%arg0: i32, %arg1: i32) -> (i32, i32, i32, i32) {
    %c0_i32 = arith.constant 0 : i32
    %c0_i32_0 = arith.constant 0 : i32
    %c0_i32_1 = arith.constant 0 : i32
    return %arg0, %arg1, %c0_i32, %c0_i32_0 : i32, i32, i32, i32
  }
  func.func @transform_1(%arg0: i32, %arg1: i32) -> (i32, i32, i32, i32) {
    %c16_i32 = arith.constant 16 : i32
    %0 = arith.muli %arg1, %c16_i32 : i32
    %c1_i32 = arith.constant 1 : i32
    %1 = arith.subi %0, %c1_i32 : i32
    %c0_i32 = arith.constant 0 : i32
    %2 = arith.maxsi %1, %c0_i32 : i32
    %c0_i32_0 = arith.constant 0 : i32
    %c0_i32_1 = arith.constant 0 : i32
    %c0_i32_2 = arith.constant 0 : i32
    return %arg0, %2, %c0_i32_0, %c0_i32_1 : i32, i32, i32, i32
  }
  func.func @transform_2(%arg0: i32, %arg1: i32) -> (i32, i32, i32, i32) {
    %c1_i32 = arith.constant 1 : i32
    %0 = arith.addi %arg1, %c1_i32 : i32
    %c16_i32 = arith.constant 16 : i32
    %1 = arith.muli %0, %c16_i32 : i32
    %c15_i32 = arith.constant 15 : i32
    %2 = arith.minsi %1, %c15_i32 : i32
    %c0_i32 = arith.constant 0 : i32
    %c0_i32_0 = arith.constant 0 : i32
    %c0_i32_1 = arith.constant 0 : i32
    return %arg0, %2, %c0_i32, %c0_i32_0 : i32, i32, i32, i32
  }
  func.func @transform_3(%arg0: i32, %arg1: i32) -> (i32, i32, i32) {
    %c0_i32 = arith.constant 0 : i32
    %c0_i32_0 = arith.constant 0 : i32
    %c0_i32_1 = arith.constant 0 : i32
    %c0_i32_2 = arith.constant 0 : i32
    return %c0_i32, %c0_i32_0, %c0_i32_1 : i32, i32, i32
  }
  func.func @transform_4(%arg0: i32, %arg1: i32) -> (i32, i32) {
    %c0_i32 = arith.constant 0 : i32
    %c0_i32_0 = arith.constant 0 : i32
    %c0_i32_1 = arith.constant 0 : i32
    return %c0_i32, %c0_i32_0 : i32, i32
  }
  func.func @transform_5(%arg0: i32, %arg1: i32) -> (i32, i32) {
    %c0_i32 = arith.constant 0 : i32
    %c0_i32_0 = arith.constant 0 : i32
    %c0_i32_1 = arith.constant 0 : i32
    return %c0_i32, %c0_i32_0 : i32, i32
  }
  func.func @transform_6(%arg0: i32, %arg1: i32) -> (i32, i32, i32, i32) {
    %c0_i32 = arith.constant 0 : i32
    %c0_i32_0 = arith.constant 0 : i32
    %c0_i32_1 = arith.constant 0 : i32
    return %arg0, %arg1, %c0_i32, %c0_i32_0 : i32, i32, i32, i32
  }
}

</mosaic_0001>

<llo_original>
// kernel: tpu_custom_call.1
$region0: #{tpu_custom_call.1}
  #allocation0 [shape = 'u32[]', space=smem, size = 0x4, offset = 0x4, fixed_abs, tag = 'smem constant byte address 0x4 - core index']
  #allocation1 [shape = 'u32[144,128]{1,0:T(1,128)}', space=vmem, size = 0x12000, scoped, tag = 'internal scratch']
  #allocation2 [shape = 'bf16[18,18,3]{2,1,0:T(8,128)(2,1)}', space=vmem, size = 0x1b000, scoped, tag = 'scratch operand']
  %s0 = inlined_call_operand.vmem [shape: bf16[2,16,16,3], index: 0, kind: input, shape index: {}]
  %s1 = inlined_call_operand.vmem [shape: bf16[2,16,16,3], index: 1, kind: input, shape index: {}]
  %s2 = inlined_call_operand.vmem [shape: bf16[2,16,16,3], index: 2, kind: input, shape index: {}]
  %s3 = inlined_call_operand.vmem [shape: bf16[3,9,64], index: 3, kind: input, shape index: {}]
  %s4 = inlined_call_operand.vmem [shape: f32[1,64], index: 4, kind: input, shape index: {}]
  %s5 = inlined_call_operand.vmem [shape: f32[1,64], index: 5, kind: input, shape index: {}]
  %s6 = inlined_call_operand.hbm [shape: bf16[2,8,4,128], index: 6, kind: output, shape index: {}]
  %s7 = sld [smem:[#allocation0]]
  $region61: #{tpu_custom_call.1} parent=0
    _
  %s9 = ssub.s32 1, %s7
  %s10 = scalar_select 0, %s9, %s7
  $region1: #{tpu_custom_call.1} parent=0
    #allocation3 [shape = 'u8[16384]{0}', space=vmem, size = 0x4000, scoped, tag = 'output window, operand 0']
    #allocation4 [shape = 's32[2]{0}', space=sflag, size = 0x8, scoped, tag = 'scoped memory for tpu_custom_call.1']
    %11 = vsyncpa [#allocation4], 0
    %s12 = scalar_lea.sflag [#allocation4], 1
    %13 = vsyncpa %s12, 0
    loop: start=0, step=1, limit=4
    $region2: #{tpu_custom_call.1} parent=1 // loop_pre_header
      _
    $region3: #{tpu_custom_call.1} parent=1 // loop_header
      %s15 = sphi 0, %s19
      %p16 = scmp.ge.s32.totalorder %s15, 4
      %s22 = sphi 0, %s34
      %s23 = sphi 0, %s30
      %s24 = sphi 0, %s22
      %s25 = sphi 0, %s23
      %s26 = sphi 0, %s24
      %s27 = sphi 0, %s25
      %s39 = sphi 0, %s41
      %s42 = sphi 0, %s39
      %s43 = sphi 0, %s42
      %s59 = sphi 0, %s43
      %s75 = sphi 0, %s77
      %s78 = sphi 0, %s75
      %s79 = sphi 0, %s78
      %s95 = sphi 0, %s79
      %s111 = sphi 0, %s113
      %s114 = sphi 0, %s111
      %s115 = sphi 0, %s114
      %s131 = sphi 0, %s115
      %s135 = sphi 0, %s135
      %s137 = sphi 0, %s135
      %s138 = sphi 0, %s137
      %s152 = sphi 0, %s138
      %s156 = sphi 0, %s156
      %s158 = sphi 0, %s156
      %s159 = sphi 0, %s158
      %s173 = sphi 0, %s159
      %s177 = sphi 0, %s177
      %s179 = sphi 0, %s177
      %s180 = sphi 0, %s179
      %s194 = sphi 0, %s180
      %s202 = sphi 0, %s204
      %s205 = sphi 0, %s202
      %s206 = sphi 0, %s205
      %s222 = sphi 0, %s206
    $region4: #{tpu_custom_call.1} parent=1 // loop_header_branch
      %18 = sbr.rel (%p16) target = $region8
    $region5: #{tpu_custom_call.1} parent=1 // loop_body
      %s20 = ssub.s32 %s15, 1
      %s21 = ssub.s32 %s15, 2
      %s28 = sadd.s32 1, %s23
      %p29 = scmp.ge.s32.totalorder %s28, 1
      %s30 = scalar_select %p29, 0, %s28
      %s31 = sadd.s32 1, %s22
      %s32 = scalar_select %p29, %s31, %s22
      %p33 = scmp.ge.s32.totalorder %s32, 2
      %s34 = scalar_select %p33, 0, %s32
      %s35 = ssub.s32 %s22, %s34
      %s36 = ssub.s32 %s23, %s30
      %s37 = sor.u32 %s35, %s36
      %p38 = scmp.eq.s32.totalorder %s37, 0
      %s40 = sadd.s32 %s39, 1
      %s41 = scalar_select %p38, %s39, %s40
      %p44 = pneg %p38
      %p45 = scmp.eq.s32.totalorder %s15, 1
      %p46 = por %p44, %p45
      %p47 = scmp.ne.s32.totalorder %s39, %s42
      %p48 = scmp.eq.s32.totalorder %s15, 0
      %p49 = por %p47, %p48
      %p50 = scmp.ne.s32.totalorder %s39, %s42
      %p51 = scmp.eq.s32.totalorder %s20, 1
      %p52 = por %p50, %p51
      %p53 = scmp.ne.s32.totalorder %s42, %s43
      %p54 = scmp.eq.s32.totalorder %s20, 0
      %p55 = por %p53, %p54
      %p56 = scmp.ne.s32.totalorder %s42, %s43
      %p57 = scmp.eq.s32.totalorder %s21, 1
      %p58 = por %p56, %p57
      %p60 = scmp.ne.s32.totalorder %s43, %s59
      %p61 = scmp.eq.s32.totalorder %s21, 0
      %p62 = por %p60, %p61
      %s63 = smul.u32 %s23, 16
      %s64 = ssub.s32 %s63, 1
      %p65 = scmp.gt.s32.totalorder %s64, 0
      %s66 = scalar_select %p65, %s64, 0
      %s67 = smul.u32 %s30, 16
      %s68 = ssub.s32 %s67, 1
      %p69 = scmp.gt.s32.totalorder %s68, 0
      %s70 = scalar_select %p69, %s68, 0
      %s71 = ssub.s32 %s22, %s34
      %s72 = ssub.s32 %s66, %s70
      %s73 = sor.u32 %s71, %s72
      %p74 = scmp.eq.s32.totalorder %s73, 0
      %s76 = sadd.s32 %s75, 1
      %s77 = scalar_select %p74, %s75, %s76
      %p80 = pneg %p74
      %p81 = scmp.eq.s32.totalorder %s15, 1
      %p82 = por %p80, %p81
      %p83 = scmp.ne.s32.totalorder %s75, %s78
      %p84 = scmp.eq.s32.totalorder %s15, 0
      %p85 = por %p83, %p84
      %p86 = scmp.ne.s32.totalorder %s75, %s78
      %p87 = scmp.eq.s32.totalorder %s20, 1
      %p88 = por %p86, %p87
      %p89 = scmp.ne.s32.totalorder %s78, %s79
      %p90 = scmp.eq.s32.totalorder %s20, 0
      %p91 = por %p89, %p90
      %p92 = scmp.ne.s32.totalorder %s78, %s79
      %p93 = scmp.eq.s32.totalorder %s21, 1
      %p94 = por %p92, %p93
      %p96 = scmp.ne.s32.totalorder %s79, %s95
      %p97 = scmp.eq.s32.totalorder %s21, 0
      %p98 = por %p96, %p97
      %s99 = sadd.s32 %s23, 1
      %s100 = smul.u32 %s99, 16
      %p101 = scmp.lt.s32.totalorder %s100, 15
      %s102 = scalar_select %p101, %s100, 15
      %s103 = sadd.s32 %s30, 1
      %s104 = smul.u32 %s103, 16
      %p105 = scmp.lt.s32.totalorder %s104, 15
      %s106 = scalar_select %p105, %s104, 15
      %s107 = ssub.s32 %s22, %s34
      %s108 = ssub.s32 %s102, %s106
      %s109 = sor.u32 %s107, %s108
      %p110 = scmp.eq.s32.totalorder %s109, 0
      %s112 = sadd.s32 %s111, 1
      %s113 = scalar_select %p110, %s111, %s112
      %p116 = pneg %p110
      %p117 = scmp.eq.s32.totalorder %s15, 1
      %p118 = por %p116, %p117
      %p119 = scmp.ne.s32.totalorder %s111, %s114
      %p120 = scmp.eq.s32.totalorder %s15, 0
      %p121 = por %p119, %p120
      %p122 = scmp.ne.s32.totalorder %s111, %s114
      %p123 = scmp.eq.s32.totalorder %s20, 1
      %p124 = por %p122, %p123
      %p125 = scmp.ne.s32.totalorder %s114, %s115
      %p126 = scmp.eq.s32.totalorder %s20, 0
      %p127 = por %p125, %p126
      %p128 = scmp.ne.s32.totalorder %s114, %s115
      %p129 = scmp.eq.s32.totalorder %s21, 1
      %p130 = por %p128, %p129
      %p132 = scmp.ne.s32.totalorder %s115, %s131
      %p133 = scmp.eq.s32.totalorder %s21, 0
      %p134 = por %p132, %p133
      %s136 = sadd.s32 %s135, 1
      %p139 = scmp.eq.s32.totalorder %s15, 1
      %p140 = scmp.ne.s32.totalorder %s135, %s137
      %p141 = scmp.eq.s32.totalorder %s15, 0
      %p142 = por %p140, %p141
      %p143 = scmp.ne.s32.totalorder %s135, %s137
      %p144 = scmp.eq.s32.totalorder %s20, 1
      %p145 = por %p143, %p144
      %p146 = scmp.ne.s32.totalorder %s137, %s138
      %p147 = scmp.eq.s32.totalorder %s20, 0
      %p148 = por %p146, %p147
      %p149 = scmp.ne.s32.totalorder %s137, %s138
      %p150 = scmp.eq.s32.totalorder %s21, 1
      %p151 = por %p149, %p150
      %p153 = scmp.ne.s32.totalorder %s138, %s152
      %p154 = scmp.eq.s32.totalorder %s21, 0
      %p155 = por %p153, %p154
      %s157 = sadd.s32 %s156, 1
      %p160 = scmp.eq.s32.totalorder %s15, 1
      %p161 = scmp.ne.s32.totalorder %s156, %s158
      %p162 = scmp.eq.s32.totalorder %s15, 0
      %p163 = por %p161, %p162
      %p164 = scmp.ne.s32.totalorder %s156, %s158
      %p165 = scmp.eq.s32.totalorder %s20, 1
      %p166 = por %p164, %p165
      %p167 = scmp.ne.s32.totalorder %s158, %s159
      %p168 = scmp.eq.s32.totalorder %s20, 0
      %p169 = por %p167, %p168
      %p170 = scmp.ne.s32.totalorder %s158, %s159
      %p171 = scmp.eq.s32.totalorder %s21, 1
      %p172 = por %p170, %p171
      %p174 = scmp.ne.s32.totalorder %s159, %s173
      %p175 = scmp.eq.s32.totalorder %s21, 0
      %p176 = por %p174, %p175
      %s178 = sadd.s32 %s177, 1
      %p181 = scmp.eq.s32.totalorder %s15, 1
      %p182 = scmp.ne.s32.totalorder %s177, %s179
      %p183 = scmp.eq.s32.totalorder %s15, 0
      %p184 = por %p182, %p183
      %p185 = scmp.ne.s32.totalorder %s177, %s179
      %p186 = scmp.eq.s32.totalorder %s20, 1
      %p187 = por %p185, %p186
      %p188 = scmp.ne.s32.totalorder %s179, %s180
      %p189 = scmp.eq.s32.totalorder %s20, 0
      %p190 = por %p188, %p189
      %p191 = scmp.ne.s32.totalorder %s179, %s180
      %p192 = scmp.eq.s32.totalorder %s21, 1
      %p193 = por %p191, %p192
      %p195 = scmp.ne.s32.totalorder %s180, %s194
      %p196 = scmp.eq.s32.totalorder %s21, 0
      %p197 = por %p195, %p196
      %s198 = ssub.s32 %s22, %s34
      %s199 = ssub.s32 %s23, %s30
      %s200 = sor.u32 %s198, %s199
      %p201 = scmp.eq.s32.totalorder %s200, 0
      %s203 = sadd.s32 %s202, 1
      %s204 = scalar_select %p201, %s202, %s203
      %p207 = pneg %p201
      %p208 = scmp.eq.s32.totalorder %s15, 1
      %p209 = por %p207, %p208
      %p210 = scmp.ne.s32.totalorder %s202, %s205
      %p211 = scmp.eq.s32.totalorder %s15, 0
      %p212 = por %p210, %p211
      %p213 = scmp.ne.s32.totalorder %s202, %s205
      %p214 = scmp.eq.s32.totalorder %s20, 1
      %p215 = por %p213, %p214
      %p216 = scmp.ne.s32.totalorder %s205, %s206
      %p217 = scmp.eq.s32.totalorder %s20, 0
      %p218 = por %p216, %p217
      %p219 = scmp.ne.s32.totalorder %s205, %s206
      %p220 = scmp.eq.s32.totalorder %s21, 1
      %p221 = por %p219, %p220
      %p223 = scmp.ne.s32.totalorder %s206, %s222
      %p224 = scmp.eq.s32.totalorder %s21, 0
      %p225 = por %p223, %p224
      %p226 = scmp.le.s32.totalorder 1, %s15
      %p227 = scmp.lt.s32.totalorder %s15, 3
      %p228 = pnand %p226, %p227
      %p229 = pneg %p228
      // Predicated region
      $region9: #{tpu_custom_call.1} parent=5 // pred_check
        _
      $region10: #{tpu_custom_call.1} parent=5 // pred_check_branch
        %231 = sbr.rel (%p228) target = $region12
      $region11: #{tpu_custom_call.1} parent=5 // pred_region
        %s232 = ssub.s32 %s15, 1
        // Predicated region
        $region13: #{tpu_custom_call.1} parent=11 // pred_check
          %p233 = pneg %p148
        $region14: #{tpu_custom_call.1} parent=11 // pred_check_branch
          %235 = sbr.rel (%p233) target = $region16
        $region15: #{tpu_custom_call.1} parent=11 // pred_region
          _
        $region16: #{tpu_custom_call.1} parent=11 // pred_fallthru
          _
        // Predicated region
        $region17: #{tpu_custom_call.1} parent=11 // pred_check
          %p236 = pneg %p169
        $region18: #{tpu_custom_call.1} parent=11 // pred_check_branch
          %238 = sbr.rel (%p236) target = $region20
        $region19: #{tpu_custom_call.1} parent=11 // pred_region
          _
        $region20: #{tpu_custom_call.1} parent=11 // pred_fallthru
          _
        // Predicated region
        $region21: #{tpu_custom_call.1} parent=11 // pred_check
          %p239 = pneg %p190
        $region22: #{tpu_custom_call.1} parent=11 // pred_check_branch
          %241 = sbr.rel (%p239) target = $region24
        $region23: #{tpu_custom_call.1} parent=11 // pred_region
          _
        $region24: #{tpu_custom_call.1} parent=11 // pred_fallthru
          _
      $region12: #{tpu_custom_call.1} parent=5 // pred_fallthru
        _
      %p242 = scmp.lt.s32.totalorder %s15, 2
      // Predicated region
      $region25: #{tpu_custom_call.1} parent=5 // pred_check
        %p243 = pneg %p242
      $region26: #{tpu_custom_call.1} parent=5 // pred_check_branch
        %245 = sbr.rel (%p243) target = $region28
      $region27: #{tpu_custom_call.1} parent=5 // pred_region
        // Predicated region
        $region29: #{tpu_custom_call.1} parent=27 // pred_check
          %p246 = pneg %p49
        $region30: #{tpu_custom_call.1} parent=27 // pred_check_branch
          %248 = sbr.rel (%p246) target = $region32
        $region31: #{tpu_custom_call.1} parent=27 // pred_region
          %s249 = smul.u32 16, %s23
          %p250 = scmp.lt.s32.totalorder %s22, 1
          %s251 = scalar_select %p250, %s22, 1
          %p252 = scmp.lt.s32.totalorder %s249, 15
          %s253 = scalar_select %p252, %s249, 15
          %s254 = smul.addr %s253, 2
          %s255 = smul.addr %s251, 32
          %s256 = sadd.s32 %s254, %s255
          %s257 = smul.addr %s256, 4
          %s258 = scalar_lea.vmem %s0, %s257
          %s259 = smul.u32 16, %s23
        $region32: #{tpu_custom_call.1} parent=27 // pred_fallthru
          _
        // Predicated region
        $region33: #{tpu_custom_call.1} parent=27 // pred_check
          %p260 = pneg %p85
        $region34: #{tpu_custom_call.1} parent=27 // pred_check_branch
          %262 = sbr.rel (%p260) target = $region36
        $region35: #{tpu_custom_call.1} parent=27 // pred_region
          %s263 = smul.u32 %s23, 16
          %s264 = ssub.s32 %s263, 1
          %p265 = scmp.gt.s32.totalorder %s264, 0
          %s266 = scalar_select %p265, %s264, 0
          %p267 = scmp.lt.s32.totalorder %s22, 1
          %s268 = scalar_select %p267, %s22, 1
          %p269 = scmp.lt.s32.totalorder %s266, 15
          %s270 = scalar_select %p269, %s266, 15
          %s271 = smul.addr %s270, 2
          %s272 = smul.addr %s268, 32
          %s273 = sadd.s32 %s271, %s272
          %s274 = smul.addr %s273, 4
          %s275 = scalar_lea.vmem %s1, %s274
          %s276 = smul.u32 %s23, 16
          %s277 = ssub.s32 %s276, 1
          %p278 = scmp.gt.s32.totalorder %s277, 0
          %s279 = scalar_select %p278, %s277, 0
        $region36: #{tpu_custom_call.1} parent=27 // pred_fallthru
          _
        // Predicated region
        $region37: #{tpu_custom_call.1} parent=27 // pred_check
          %p280 = pneg %p121
        $region38: #{tpu_custom_call.1} parent=27 // pred_check_branch
          %282 = sbr.rel (%p280) target = $region40
        $region39: #{tpu_custom_call.1} parent=27 // pred_region
          %s283 = sadd.s32 %s23, 1
          %s284 = smul.u32 %s283, 16
          %p285 = scmp.lt.s32.totalorder %s284, 15
          %s286 = scalar_select %p285, %s284, 15
          %p287 = scmp.lt.s32.totalorder %s22, 1
          %s288 = scalar_select %p287, %s22, 1
          %p289 = scmp.lt.s32.totalorder %s286, 15
          %s290 = scalar_select %p289, %s286, 15
          %s291 = smul.addr %s290, 2
          %s292 = smul.addr %s288, 32
          %s293 = sadd.s32 %s291, %s292
          %s294 = smul.addr %s293, 4
          %s295 = scalar_lea.vmem %s2, %s294
          %s296 = sadd.s32 %s23, 1
          %s297 = smul.u32 %s296, 16
          %p298 = scmp.lt.s32.totalorder %s297, 15
          %s299 = scalar_select %p298, %s297, 15
        $region40: #{tpu_custom_call.1} parent=27 // pred_fallthru
          _
      $region28: #{tpu_custom_call.1} parent=5 // pred_fallthru
        _
      %p300 = scmp.le.s32.totalorder 1, %s15
      %p301 = scmp.lt.s32.totalorder %s15, 3
      %p302 = pnand %p300, %p301
      %p303 = pneg %p302
      // Predicated region
      $region41: #{tpu_custom_call.1} parent=5 // pred_check
        _
      $region42: #{tpu_custom_call.1} parent=5 // pred_check_branch
        %305 = sbr.rel (%p302) target = $region44
      $region43: #{tpu_custom_call.1} parent=5 // pred_region
        %s306 = ssub.s32 %s15, 1
        %s307 = smul.u32 16, %s25
        %p308 = scmp.lt.s32.totalorder %s24, 1
        %s309 = scalar_select %p308, %s24, 1
        %p310 = scmp.lt.s32.totalorder %s307, 15
        %s311 = scalar_select %p310, %s307, 15
        %s312 = smul.addr %s311, 2
        %s313 = smul.addr %s309, 32
        %s314 = sadd.s32 %s312, %s313
        %s315 = smul.addr %s314, 4
        %s316 = scalar_lea.vmem %s0, %s315
        %p317 = pneg %p55
        %p318 = pneg %p52
        %s319 = smul.u32 %s25, 16
        %s320 = ssub.s32 %s319, 1
        %p321 = scmp.gt.s32.totalorder %s320, 0
        %s322 = scalar_select %p321, %s320, 0
        %p323 = scmp.lt.s32.totalorder %s24, 1
        %s324 = scalar_select %p323, %s24, 1
        %p325 = scmp.lt.s32.totalorder %s322, 15
        %s326 = scalar_select %p325, %s322, 15
        %s327 = smul.addr %s326, 2
        %s328 = smul.addr %s324, 32
        %s329 = sadd.s32 %s327, %s328
        %s330 = smul.addr %s329, 4
        %s331 = scalar_lea.vmem %s1, %s330
        %p332 = pneg %p91
        %p333 = pneg %p88
        %s334 = sadd.s32 %s25, 1
        %s335 = smul.u32 %s334, 16
        %p336 = scmp.lt.s32.totalorder %s335, 15
        %s337 = scalar_select %p336, %s335, 15
        %p338 = scmp.lt.s32.totalorder %s24, 1
        %s339 = scalar_select %p338, %s24, 1
        %p340 = scmp.lt.s32.totalorder %s337, 15
        %s341 = scalar_select %p340, %s337, 15
        %s342 = smul.addr %s341, 2
        %s343 = smul.addr %s339, 32
        %s344 = sadd.s32 %s342, %s343
        %s345 = smul.addr %s344, 4
        %s346 = scalar_lea.vmem %s2, %s345
        %p347 = pneg %p127
        %p348 = pneg %p124
        %p349 = pneg %p148
        %p350 = pneg %p145
        %p351 = pneg %p169
        %p352 = pneg %p166
        %p353 = pneg %p190
        %p354 = pneg %p187
        %p355 = pneg %p218
        %p356 = pneg %p215
        %s357 = sand.u32 %s205, 1
        %s358 = scalar_lea.sflag [#allocation4], %s357
        %s359 = sand.u32 %s205, 1
        %s360 = smul.addr %s359, 16
        %s361 = scalar_lea.vmem [#allocation3], %s360
        %s362 = smul.u32 16, %s25
        %p363 = scmp.lt.s32.totalorder %s24, 1
        %s364 = scalar_select %p363, %s24, 1
        %p365 = scmp.lt.s32.totalorder %s362, 15
        %s366 = scalar_select %p365, %s362, 15
        %s367 = smul.addr %s366, 2
        %s368 = smul.addr %s364, 32
        %s369 = sadd.s32 %s367, %s368
        %s370 = smul.addr %s369, 4
        %s371 = scalar_lea.vmem %s0, %s370
        %s372 = smul.u32 16, %s25
        %s373 = smul.u32 %s25, 16
        %s374 = ssub.s32 %s373, 1
        %p375 = scmp.gt.s32.totalorder %s374, 0
        %s376 = scalar_select %p375, %s374, 0
        %p377 = scmp.lt.s32.totalorder %s24, 1
        %s378 = scalar_select %p377, %s24, 1
        %p379 = scmp.lt.s32.totalorder %s376, 15
        %s380 = scalar_select %p379, %s376, 15
        %s381 = smul.addr %s380, 2
        %s382 = smul.addr %s378, 32
        %s383 = sadd.s32 %s381, %s382
        %s384 = smul.addr %s383, 4
        %s385 = scalar_lea.vmem %s1, %s384
        %s386 = smul.u32 %s25, 16
        %s387 = ssub.s32 %s386, 1
        %p388 = scmp.gt.s32.totalorder %s387, 0
        %s389 = scalar_select %p388, %s387, 0
        %s390 = sadd.s32 %s25, 1
        %s391 = smul.u32 %s390, 16
        %p392 = scmp.lt.s32.totalorder %s391, 15
        %s393 = scalar_select %p392, %s391, 15
        %p394 = scmp.lt.s32.totalorder %s24, 1
        %s395 = scalar_select %p394, %s24, 1
        %p396 = scmp.lt.s32.totalorder %s393, 15
        %s397 = scalar_select %p396, %s393, 15
        %s398 = smul.addr %s397, 2
        %s399 = smul.addr %s395, 32
        %s400 = sadd.s32 %s398, %s399
        %s401 = smul.addr %s400, 4
        %s402 = scalar_lea.vmem %s2, %s401
        %s403 = sadd.s32 %s25, 1
        %s404 = smul.u32 %s403, 16
        %p405 = scmp.lt.s32.totalorder %s404, 15
        %s406 = scalar_select %p405, %s404, 15
        %s407 = smul.u32 8, %s25
        %vm409 = vcmask 16384
        %vm410 = vsmask.f32 256
        %vm411 = vmand %vm409, %vm410
        %v412 = vld [vmem:[#allocation2] sm:$0x1]
        %v413 = vsel %vm411, 0, %v412
        %414 = vst [vmem:[#allocation2] sm:$0x1] %v413
        %v415 = vld [vmem:[#allocation2 + $0xc] sm:$0x1]
        %v416 = vsel %vm411, 0, %v415
        %417 = vst [vmem:[#allocation2 + $0xc] sm:$0x1] %v416
        %v418 = vld [vmem:[#allocation2 + $0x18] sm:$0x1]
        %v419 = vsel %vm411, 0, %v418
        %420 = vst [vmem:[#allocation2 + $0x18] sm:$0x1] %v419
        %v421 = vld [vmem:[#allocation2 + $0x24] sm:$0x1]
        %v422 = vsel %vm411, 0, %v421
        %423 = vst [vmem:[#allocation2 + $0x24] sm:$0x1] %v422
        %v424 = vld [vmem:[#allocation2 + $0x30] sm:$0x1]
        %v425 = vsel %vm411, 0, %v424
        %426 = vst [vmem:[#allocation2 + $0x30] sm:$0x1] %v425
        %v427 = vld [vmem:[#allocation2 + $0x3c] sm:$0x1]
        %v428 = vsel %vm411, 0, %v427
        %429 = vst [vmem:[#allocation2 + $0x3c] sm:$0x1] %v428
        %v430 = vld [vmem:[#allocation2 + $0x48] sm:$0x1]
        %v431 = vsel %vm411, 0, %v430
        %432 = vst [vmem:[#allocation2 + $0x48] sm:$0x1] %v431
        %v433 = vld [vmem:[#allocation2 + $0x54] sm:$0x1]
        %v434 = vsel %vm411, 0, %v433
        %435 = vst [vmem:[#allocation2 + $0x54] sm:$0x1] %v434
        %v436 = vld [vmem:[#allocation2 + $0x60] sm:$0x1]
        %v437 = vsel %vm411, 0, %v436
        %438 = vst [vmem:[#allocation2 + $0x60] sm:$0x1] %v437
        %v439 = vld [vmem:[#allocation2 + $0x6c] sm:$0x1]
        %v440 = vsel %vm411, 0, %v439
        %441 = vst [vmem:[#allocation2 + $0x6c] sm:$0x1] %v440
        %v442 = vld [vmem:[#allocation2 + $0x78] sm:$0x1]
        %v443 = vsel %vm411, 0, %v442
        %444 = vst [vmem:[#allocation2 + $0x78] sm:$0x1] %v443
        %v445 = vld [vmem:[#allocation2 + $0x84] sm:$0x1]
        %v446 = vsel %vm411, 0, %v445
        %447 = vst [vmem:[#allocation2 + $0x84] sm:$0x1] %v446
        %v448 = vld [vmem:[#allocation2 + $0x90] sm:$0x1]
        %v449 = vsel %vm411, 0, %v448
        %450 = vst [vmem:[#allocation2 + $0x90] sm:$0x1] %v449
        %v451 = vld [vmem:[#allocation2 + $0x9c] sm:$0x1]
        %v452 = vsel %vm411, 0, %v451
        %453 = vst [vmem:[#allocation2 + $0x9c] sm:$0x1] %v452
        %v454 = vld [vmem:[#allocation2 + $0xa8] sm:$0x1]
        %v455 = vsel %vm411, 0, %v454
        %456 = vst [vmem:[#allocation2 + $0xa8] sm:$0x1] %v455
        %v457 = vld [vmem:[#allocation2 + $0xb4] sm:$0x1]
        %v458 = vsel %vm411, 0, %v457
        %459 = vst [vmem:[#allocation2 + $0xb4] sm:$0x1] %v458
        %v460 = vld [vmem:[#allocation2 + $0xc0] sm:$0x1]
        %v461 = vsel %vm411, 0, %v460
        %462 = vst [vmem:[#allocation2 + $0xc0] sm:$0x1] %v461
        %v463 = vld [vmem:[#allocation2 + $0xcc] sm:$0x1]
        %v464 = vsel %vm411, 0, %v463
        %465 = vst [vmem:[#allocation2 + $0xcc] sm:$0x1] %v464
        %vm466 = vsmask.f32 7938
        %vm467 = vmand %vm409, %vm466
        %v468 = vld [vmem:[#allocation2 + $0x8] sm:$0x1]
        %v469 = vsel %vm467, 0, %v468
        %470 = vst [vmem:[#allocation2 + $0x8] sm:$0x1] %v469
        %v471 = vld [vmem:[#allocation2 + $0x14] sm:$0x1]
        %v472 = vsel %vm467, 0, %v471
        %473 = vst [vmem:[#allocation2 + $0x14] sm:$0x1] %v472
        %v474 = vld [vmem:[#allocation2 + $0x20] sm:$0x1]
        %v475 = vsel %vm467, 0, %v474
        %476 = vst [vmem:[#allocation2 + $0x20] sm:$0x1] %v475
        %v477 = vld [vmem:[#allocation2 + $0x2c] sm:$0x1]
        %v478 = vsel %vm467, 0, %v477
        %479 = vst [vmem:[#allocation2 + $0x2c] sm:$0x1] %v478
        %v480 = vld [vmem:[#allocation2 + $0x38] sm:$0x1]
        %v481 = vsel %vm467, 0, %v480
        %482 = vst [vmem:[#allocation2 + $0x38] sm:$0x1] %v481
        %v483 = vld [vmem:[#allocation2 + $0x44] sm:$0x1]
        %v484 = vsel %vm467, 0, %v483
        %485 = vst [vmem:[#allocation2 + $0x44] sm:$0x1] %v484
        %v486 = vld [vmem:[#allocation2 + $0x50] sm:$0x1]
        %v487 = vsel %vm467, 0, %v486
        %488 = vst [vmem:[#allocation2 + $0x50] sm:$0x1] %v487
        %v489 = vld [vmem:[#allocation2 + $0x5c] sm:$0x1]
        %v490 = vsel %vm467, 0, %v489
        %491 = vst [vmem:[#allocation2 + $0x5c] sm:$0x1] %v490
        %v492 = vld [vmem:[#allocation2 + $0x68] sm:$0x1]
        %v493 = vsel %vm467, 0, %v492
        %494 = vst [vmem:[#allocation2 + $0x68] sm:$0x1] %v493
        %v495 = vld [vmem:[#allocation2 + $0x74] sm:$0x1]
        %v496 = vsel %vm467, 0, %v495
        %497 = vst [vmem:[#allocation2 + $0x74] sm:$0x1] %v496
        %v498 = vld [vmem:[#allocation2 + $0x80] sm:$0x1]
        %v499 = vsel %vm467, 0, %v498
        %500 = vst [vmem:[#allocation2 + $0x80] sm:$0x1] %v499
        %v501 = vld [vmem:[#allocation2 + $0x8c] sm:$0x1]
        %v502 = vsel %vm467, 0, %v501
        %503 = vst [vmem:[#allocation2 + $0x8c] sm:$0x1] %v502
        %v504 = vld [vmem:[#allocation2 + $0x98] sm:$0x1]
        %v505 = vsel %vm467, 0, %v504
        %506 = vst [vmem:[#allocation2 + $0x98] sm:$0x1] %v505
        %v507 = vld [vmem:[#allocation2 + $0xa4] sm:$0x1]
        %v508 = vsel %vm467, 0, %v507
        %509 = vst [vmem:[#allocation2 + $0xa4] sm:$0x1] %v508
        %v510 = vld [vmem:[#allocation2 + $0xb0] sm:$0x1]
        %v511 = vsel %vm467, 0, %v510
        %512 = vst [vmem:[#allocation2 + $0xb0] sm:$0x1] %v511
        %v513 = vld [vmem:[#allocation2 + $0xbc] sm:$0x1]
        %v514 = vsel %vm467, 0, %v513
        %515 = vst [vmem:[#allocation2 + $0xbc] sm:$0x1] %v514
        %v516 = vld [vmem:[#allocation2 + $0xc8] sm:$0x1]
        %v517 = vsel %vm467, 0, %v516
        %518 = vst [vmem:[#allocation2 + $0xc8] sm:$0x1] %v517
        %v519 = vld [vmem:[#allocation2 + $0xd4] sm:$0x1]
        %v520 = vsel %vm467, 0, %v519
        %521 = vst [vmem:[#allocation2 + $0xd4] sm:$0x1] %v520
        %v522 = vld [vmem:[%s371] sm:$0xf]
        %v523 = vld [vmem:[%s371 + $0x4] sm:$0xf]
        %v524 = vld [vmem:[%s371 + $0x8] sm:$0xf]
        %v525 = vld [vmem:[%s371 + $0xc] sm:$0xf]
        %v526 = vld [vmem:[%s371 + $0x10] sm:$0xf]
        %v527 = vld [vmem:[%s371 + $0x14] sm:$0xf]
        %v528 = vld [vmem:[%s371 + $0x18] sm:$0xf]
        %v529 = vld [vmem:[%s371 + $0x1c] sm:$0xf]
        %v530 = vld [vmem:[%s371 + $0x20] sm:$0xf]
        %v531 = vld [vmem:[%s371 + $0x24] sm:$0xf]
        %v532 = vld [vmem:[%s371 + $0x28] sm:$0xf]
        %v533 = vld [vmem:[%s371 + $0x2c] sm:$0xf]
        %v534 = vld [vmem:[%s371 + $0x30] sm:$0xf]
        %v535 = vld [vmem:[%s371 + $0x34] sm:$0xf]
        %v536 = vld [vmem:[%s371 + $0x38] sm:$0xf]
        %v537 = vld [vmem:[%s371 + $0x3c] sm:$0xf]
        %v538 = vld [vmem:[%s371 + $0x40] sm:$0xf]
        %v539 = vld [vmem:[%s371 + $0x44] sm:$0xf]
        %v540 = vld [vmem:[%s371 + $0x48] sm:$0xf]
        %v541 = vld [vmem:[%s371 + $0x4c] sm:$0xf]
        %v542 = vld [vmem:[%s371 + $0x50] sm:$0xf]
        %v543 = vld [vmem:[%s371 + $0x54] sm:$0xf]
        %v544 = vld [vmem:[%s371 + $0x58] sm:$0xf]
        %v545 = vld [vmem:[%s371 + $0x5c] sm:$0xf]
        %v546 = vld [vmem:[%s371 + $0x60] sm:$0xf]
        %v547 = vld [vmem:[%s371 + $0x64] sm:$0xf]
        %v548 = vld [vmem:[%s371 + $0x68] sm:$0xf]
        %v549 = vld [vmem:[%s371 + $0x6c] sm:$0xf]
        %v550 = vld [vmem:[%s371 + $0x70] sm:$0xf]
        %v551 = vld [vmem:[%s371 + $0x74] sm:$0xf]
        %v552 = vld [vmem:[%s371 + $0x78] sm:$0xf]
        %v553 = vld [vmem:[%s371 + $0x7c] sm:$0xf]
        %vm554 = vsmask.f32 4368
        %vm555 = vmor %vm410, %vm554
        %v557 = vshrl.u32 %v522, 16
        %v559 = vrot.slane %v557, 7
        %v560 = vshll.u32 %v522, 16
        %v562 = vor.u32 %v559, %v560
        %v563 = vrot.slane %v559, 4
        %v565 = vshrl.u32 %v523, 16
        %v567 = vrot.slane %v565, 7
        %v568 = vshll.u32 %v523, 16
        %v570 = vor.u32 %v567, %v568
        %v571 = vsel %vm555, %v563, %v570
        %v572 = vrot.slane %v567, 4
        %v574 = vshrl.u32 %v524, 16
        %v576 = vrot.slane %v574, 7
        %v577 = vshll.u32 %v524, 16
        %v579 = vor.u32 %v576, %v577
        %v580 = vrot.slane %v576, 4
        %v582 = vshrl.u32 %v525, 16
        %v584 = vrot.slane %v582, 7
        %v585 = vshll.u32 %v525, 16
        %v587 = vor.u32 %v584, %v585
        %v588 = vsel %vm555, %v580, %v587
        %v589 = vrot.slane %v584, 4
        %v591 = vshrl.u32 %v526, 16
        %v593 = vrot.slane %v591, 7
        %v594 = vshll.u32 %v526, 16
        %v596 = vor.u32 %v593, %v594
        %v597 = vrot.slane %v593, 4
        %v599 = vshrl.u32 %v527, 16
        %v601 = vrot.slane %v599, 7
        %v602 = vshll.u32 %v527, 16
        %v604 = vor.u32 %v601, %v602
        %v605 = vsel %vm555, %v597, %v604
        %v606 = vrot.slane %v601, 4
        %v608 = vshrl.u32 %v528, 16
        %v610 = vrot.slane %v608, 7
        %v611 = vshll.u32 %v528, 16
        %v613 = vor.u32 %v610, %v611
        %v614 = vrot.slane %v610, 4
        %v616 = vshrl.u32 %v529, 16
        %v618 = vrot.slane %v616, 7
        %v619 = vshll.u32 %v529, 16
        %v621 = vor.u32 %v618, %v619
        %v622 = vsel %vm555, %v614, %v621
        %v623 = vrot.slane %v618, 4
        %v625 = vshrl.u32 %v530, 16
        %v627 = vrot.slane %v625, 7
        %v628 = vshll.u32 %v530, 16
        %v630 = vor.u32 %v627, %v628
        %v631 = vrot.slane %v627, 4
        %v633 = vshrl.u32 %v531, 16
        %v635 = vrot.slane %v633, 7
        %v636 = vshll.u32 %v531, 16
        %v638 = vor.u32 %v635, %v636
        %v639 = vsel %vm555, %v631, %v638
        %v640 = vrot.slane %v635, 4
        %v642 = vshrl.u32 %v532, 16
        %v644 = vrot.slane %v642, 7
        %v645 = vshll.u32 %v532, 16
        %v647 = vor.u32 %v644, %v645
        %v648 = vrot.slane %v644, 4
        %v650 = vshrl.u32 %v533, 16
        %v652 = vrot.slane %v650, 7
        %v653 = vshll.u32 %v533, 16
        %v655 = vor.u32 %v652, %v653
        %v656 = vsel %vm555, %v648, %v655
        %v657 = vrot.slane %v652, 4
        %v659 = vshrl.u32 %v534, 16
        %v661 = vrot.slane %v659, 7
        %v662 = vshll.u32 %v534, 16
        %v664 = vor.u32 %v661, %v662
        %v665 = vrot.slane %v661, 4
        %v667 = vshrl.u32 %v535, 16
        %v669 = vrot.slane %v667, 7
        %v670 = vshll.u32 %v535, 16
        %v672 = vor.u32 %v669, %v670
        %v673 = vsel %vm555, %v665, %v672
        %v674 = vrot.slane %v669, 4
        %v676 = vshrl.u32 %v536, 16
        %v678 = vrot.slane %v676, 7
        %v679 = vshll.u32 %v536, 16
        %v681 = vor.u32 %v678, %v679
        %v682 = vrot.slane %v678, 4
        %v684 = vshrl.u32 %v537, 16
        %v686 = vrot.slane %v684, 7
        %v687 = vshll.u32 %v537, 16
        %v689 = vor.u32 %v686, %v687
        %v690 = vsel %vm555, %v682, %v689
        %v691 = vrot.slane %v686, 4
        %v693 = vshrl.u32 %v538, 16
        %v695 = vrot.slane %v693, 7
        %v696 = vshll.u32 %v538, 16
        %v698 = vor.u32 %v695, %v696
        %v699 = vrot.slane %v695, 4
        %v701 = vshrl.u32 %v539, 16
        %v703 = vrot.slane %v701, 7
        %v704 = vshll.u32 %v539, 16
        %v706 = vor.u32 %v703, %v704
        %v707 = vsel %vm555, %v699, %v706
        %v708 = vrot.slane %v703, 4
        %v710 = vshrl.u32 %v540, 16
        %v712 = vrot.slane %v710, 7
        %v713 = vshll.u32 %v540, 16
        %v715 = vor.u32 %v712, %v713
        %v716 = vrot.slane %v712, 4
        %v718 = vshrl.u32 %v541, 16
        %v720 = vrot.slane %v718, 7
        %v721 = vshll.u32 %v541, 16
        %v723 = vor.u32 %v720, %v721
        %v724 = vsel %vm555, %v716, %v723
        %v725 = vrot.slane %v720, 4
        %v727 = vshrl.u32 %v542, 16
        %v729 = vrot.slane %v727, 7
        %v730 = vshll.u32 %v542, 16
        %v732 = vor.u32 %v729, %v730
        %v733 = vrot.slane %v729, 4
        %v735 = vshrl.u32 %v543, 16
        %v737 = vrot.slane %v735, 7
        %v738 = vshll.u32 %v543, 16
        %v740 = vor.u32 %v737, %v738
        %v741 = vsel %vm555, %v733, %v740
        %v742 = vrot.slane %v737, 4
        %v744 = vshrl.u32 %v544, 16
        %v746 = vrot.slane %v744, 7
        %v747 = vshll.u32 %v544, 16
        %v749 = vor.u32 %v746, %v747
        %v750 = vrot.slane %v746, 4
        %v752 = vshrl.u32 %v545, 16
        %v754 = vrot.slane %v752, 7
        %v755 = vshll.u32 %v545, 16
        %v757 = vor.u32 %v754, %v755
        %v758 = vsel %vm555, %v750, %v757
        %v759 = vrot.slane %v754, 4
        %v761 = vshrl.u32 %v546, 16
        %v763 = vrot.slane %v761, 7
        %v764 = vshll.u32 %v546, 16
        %v766 = vor.u32 %v763, %v764
        %v767 = vrot.slane %v763, 4
        %v769 = vshrl.u32 %v547, 16
        %v771 = vrot.slane %v769, 7
        %v772 = vshll.u32 %v547, 16
        %v774 = vor.u32 %v771, %v772
        %v775 = vsel %vm555, %v767, %v774
        %v776 = vrot.slane %v771, 4
        %v778 = vshrl.u32 %v548, 16
        %v780 = vrot.slane %v778, 7
        %v781 = vshll.u32 %v548, 16
        %v783 = vor.u32 %v780, %v781
        %v784 = vrot.slane %v780, 4
        %v786 = vshrl.u32 %v549, 16
        %v788 = vrot.slane %v786, 7
        %v789 = vshll.u32 %v549, 16
        %v791 = vor.u32 %v788, %v789
        %v792 = vsel %vm555, %v784, %v791
        %v793 = vrot.slane %v788, 4
        %v795 = vshrl.u32 %v550, 16
        %v797 = vrot.slane %v795, 7
        %v798 = vshll.u32 %v550, 16
        %v800 = vor.u32 %v797, %v798
        %v801 = vrot.slane %v797, 4
        %v803 = vshrl.u32 %v551, 16
        %v805 = vrot.slane %v803, 7
        %v806 = vshll.u32 %v551, 16
        %v808 = vor.u32 %v805, %v806
        %v809 = vsel %vm555, %v801, %v808
        %v810 = vrot.slane %v805, 4
        %v812 = vshrl.u32 %v552, 16
        %v814 = vrot.slane %v812, 7
        %v815 = vshll.u32 %v552, 16
        %v817 = vor.u32 %v814, %v815
        %v818 = vrot.slane %v814, 4
        %v820 = vshrl.u32 %v553, 16
        %v822 = vrot.slane %v820, 7
        %v823 = vshll.u32 %v553, 16
        %v825 = vor.u32 %v822, %v823
        %v826 = vsel %vm555, %v818, %v825
        %v827 = vrot.slane %v822, 4
        %s876 = scalar_lea.vmem [#allocation2], 12
        %vm877 = vcmask 19456
        %vm878 = vmand %vm877, %vm466
        %v879 = vld [vmem:[%s876] sm:$0xf]
        %v880 = vsel %vm878, %v562, %v879
        %881 = vst [vmem:[%s876] sm:$0xf] %v880
        %vm882 = vcmask 19456
        %883 = vst.msk [vmem:[%s876 + $0x4] sm:$0xf] %vm882, %v571
        %v884 = vld [vmem:[%s876 + $0x8] sm:$0x1]
        %v885 = vsel %vm411, %v572, %v884
        %886 = vst [vmem:[%s876 + $0x8] sm:$0x1] %v885
        %v887 = vld [vmem:[%s876 + $0xc] sm:$0xf]
        %v888 = vsel %vm878, %v579, %v887
        %889 = vst [vmem:[%s876 + $0xc] sm:$0xf] %v888
        %890 = vst.msk [vmem:[%s876 + $0x10] sm:$0xf] %vm882, %v588
        %v891 = vld [vmem:[%s876 + $0x14] sm:$0x1]
        %v892 = vsel %vm411, %v589, %v891
        %893 = vst [vmem:[%s876 + $0x14] sm:$0x1] %v892
        %v894 = vld [vmem:[%s876 + $0x18] sm:$0xf]
        %v895 = vsel %vm878, %v596, %v894
        %896 = vst [vmem:[%s876 + $0x18] sm:$0xf] %v895
        %897 = vst.msk [vmem:[%s876 + $0x1c] sm:$0xf] %vm882, %v605
        %v898 = vld [vmem:[%s876 + $0x20] sm:$0x1]
        %v899 = vsel %vm411, %v606, %v898
        %900 = vst [vmem:[%s876 + $0x20] sm:$0x1] %v899
        %v901 = vld [vmem:[%s876 + $0x24] sm:$0xf]
        %v902 = vsel %vm878, %v613, %v901
        %903 = vst [vmem:[%s876 + $0x24] sm:$0xf] %v902
        %904 = vst.msk [vmem:[%s876 + $0x28] sm:$0xf] %vm882, %v622
        %v905 = vld [vmem:[%s876 + $0x2c] sm:$0x1]
        %v906 = vsel %vm411, %v623, %v905
        %907 = vst [vmem:[%s876 + $0x2c] sm:$0x1] %v906
        %v908 = vld [vmem:[%s876 + $0x30] sm:$0xf]
        %v909 = vsel %vm878, %v630, %v908
        %910 = vst [vmem:[%s876 + $0x30] sm:$0xf] %v909
        %911 = vst.msk [vmem:[%s876 + $0x34] sm:$0xf] %vm882, %v639
        %v912 = vld [vmem:[%s876 + $0x38] sm:$0x1]
        %v913 = vsel %vm411, %v640, %v912
        %914 = vst [vmem:[%s876 + $0x38] sm:$0x1] %v913
        %v915 = vld [vmem:[%s876 + $0x3c] sm:$0xf]
        %v916 = vsel %vm878, %v647, %v915
        %917 = vst [vmem:[%s876 + $0x3c] sm:$0xf] %v916
        %918 = vst.msk [vmem:[%s876 + $0x40] sm:$0xf] %vm882, %v656
        %v919 = vld [vmem:[%s876 + $0x44] sm:$0x1]
        %v920 = vsel %vm411, %v657, %v919
        %921 = vst [vmem:[%s876 + $0x44] sm:$0x1] %v920
        %v922 = vld [vmem:[%s876 + $0x48] sm:$0xf]
        %v923 = vsel %vm878, %v664, %v922
        %924 = vst [vmem:[%s876 + $0x48] sm:$0xf] %v923
        %925 = vst.msk [vmem:[%s876 + $0x4c] sm:$0xf] %vm882, %v673
        %v926 = vld [vmem:[%s876 + $0x50] sm:$0x1]
        %v927 = vsel %vm411, %v674, %v926
        %928 = vst [vmem:[%s876 + $0x50] sm:$0x1] %v927
        %v929 = vld [vmem:[%s876 + $0x54] sm:$0xf]
        %v930 = vsel %vm878, %v681, %v929
        %931 = vst [vmem:[%s876 + $0x54] sm:$0xf] %v930
        %932 = vst.msk [vmem:[%s876 + $0x58] sm:$0xf] %vm882, %v690
        %v933 = vld [vmem:[%s876 + $0x5c] sm:$0x1]
        %v934 = vsel %vm411, %v691, %v933
        %935 = vst [vmem:[%s876 + $0x5c] sm:$0x1] %v934
        %v936 = vld [vmem:[%s876 + $0x60] sm:$0xf]
        %v937 = vsel %vm878, %v698, %v936
        %938 = vst [vmem:[%s876 + $0x60] sm:$0xf] %v937
        %939 = vst.msk [vmem:[%s876 + $0x64] sm:$0xf] %vm882, %v707
        %v940 = vld [vmem:[%s876 + $0x68] sm:$0x1]
        %v941 = vsel %vm411, %v708, %v940
        %942 = vst [vmem:[%s876 + $0x68] sm:$0x1] %v941
        %v943 = vld [vmem:[%s876 + $0x6c] sm:$0xf]
        %v944 = vsel %vm878, %v715, %v943
        %945 = vst [vmem:[%s876 + $0x6c] sm:$0xf] %v944
        %946 = vst.msk [vmem:[%s876 + $0x70] sm:$0xf] %vm882, %v724
        %v947 = vld [vmem:[%s876 + $0x74] sm:$0x1]
        %v948 = vsel %vm411, %v725, %v947
        %949 = vst [vmem:[%s876 + $0x74] sm:$0x1] %v948
        %v950 = vld [vmem:[%s876 + $0x78] sm:$0xf]
        %v951 = vsel %vm878, %v732, %v950
        %952 = vst [vmem:[%s876 + $0x78] sm:$0xf] %v951
        %953 = vst.msk [vmem:[%s876 + $0x7c] sm:$0xf] %vm882, %v741
        %v954 = vld [vmem:[%s876 + $0x80] sm:$0x1]
        %v955 = vsel %vm411, %v742, %v954
        %956 = vst [vmem:[%s876 + $0x80] sm:$0x1] %v955
        %v957 = vld [vmem:[%s876 + $0x84] sm:$0xf]
        %v958 = vsel %vm878, %v749, %v957
        %959 = vst [vmem:[%s876 + $0x84] sm:$0xf] %v958
        %960 = vst.msk [vmem:[%s876 + $0x88] sm:$0xf] %vm882, %v758
        %v961 = vld [vmem:[%s876 + $0x8c] sm:$0x1]
        %v962 = vsel %vm411, %v759, %v961
        %963 = vst [vmem:[%s876 + $0x8c] sm:$0x1] %v962
        %v964 = vld [vmem:[%s876 + $0x90] sm:$0xf]
        %v965 = vsel %vm878, %v766, %v964
        %966 = vst [vmem:[%s876 + $0x90] sm:$0xf] %v965
        %967 = vst.msk [vmem:[%s876 + $0x94] sm:$0xf] %vm882, %v775
        %v968 = vld [vmem:[%s876 + $0x98] sm:$0x1]
        %v969 = vsel %vm411, %v776, %v968
        %970 = vst [vmem:[%s876 + $0x98] sm:$0x1] %v969
        %v971 = vld [vmem:[%s876 + $0x9c] sm:$0xf]
        %v972 = vsel %vm878, %v783, %v971
        %973 = vst [vmem:[%s876 + $0x9c] sm:$0xf] %v972
        %974 = vst.msk [vmem:[%s876 + $0xa0] sm:$0xf] %vm882, %v792
        %v975 = vld [vmem:[%s876 + $0xa4] sm:$0x1]
        %v976 = vsel %vm411, %v793, %v975
        %977 = vst [vmem:[%s876 + $0xa4] sm:$0x1] %v976
        %v978 = vld [vmem:[%s876 + $0xa8] sm:$0xf]
        %v979 = vsel %vm878, %v800, %v978
        %980 = vst [vmem:[%s876 + $0xa8] sm:$0xf] %v979
        %981 = vst.msk [vmem:[%s876 + $0xac] sm:$0xf] %vm882, %v809
        %v982 = vld [vmem:[%s876 + $0xb0] sm:$0x1]
        %v983 = vsel %vm411, %v810, %v982
        %984 = vst [vmem:[%s876 + $0xb0] sm:$0x1] %v983
        %v985 = vld [vmem:[%s876 + $0xb4] sm:$0xf]
        %v986 = vsel %vm878, %v817, %v985
        %987 = vst [vmem:[%s876 + $0xb4] sm:$0xf] %v986
        %988 = vst.msk [vmem:[%s876 + $0xb8] sm:$0xf] %vm882, %v826
        %v989 = vld [vmem:[%s876 + $0xbc] sm:$0x1]
        %v990 = vsel %vm411, %v827, %v989
        %991 = vst [vmem:[%s876 + $0xbc] sm:$0x1] %v990
        %v992 = vld [vmem:[%s385] sm:$0xf]
        %v993 = vld [vmem:[%s385 + $0x4] sm:$0xf]
        %v995 = vshrl.u32 %v992, 16
        %v997 = vrot.slane %v995, 7
        %v998 = vshll.u32 %v992, 16
        %v1000 = vor.u32 %v997, %v998
        %v1001 = vrot.slane %v997, 4
        %v1003 = vshrl.u32 %v993, 16
        %v1005 = vrot.slane %v1003, 7
        %v1006 = vshll.u32 %v993, 16
        %v1008 = vor.u32 %v1005, %v1006
        %v1009 = vsel %vm555, %v1001, %v1008
        %v1010 = vrot.slane %v1005, 4
        %v1014 = vld [vmem:[#allocation2] sm:$0xf]
        %v1015 = vsel %vm878, %v1000, %v1014
        %1016 = vst [vmem:[#allocation2] sm:$0xf] %v1015
        %1017 = vst.msk [vmem:[#allocation2 + $0x4] sm:$0xf] %vm882, %v1009
        %v1018 = vld [vmem:[#allocation2 + $0x8] sm:$0x1]
        %v1019 = vsel %vm411, %v1010, %v1018
        %1020 = vst [vmem:[#allocation2 + $0x8] sm:$0x1] %v1019
        %v1021 = vld [vmem:[%s402] sm:$0xf]
        %v1022 = vld [vmem:[%s402 + $0x4] sm:$0xf]
        %v1024 = vshrl.u32 %v1021, 16
        %v1026 = vrot.slane %v1024, 7
        %v1027 = vshll.u32 %v1021, 16
        %v1029 = vor.u32 %v1026, %v1027
        %v1030 = vrot.slane %v1026, 4
        %v1032 = vshrl.u32 %v1022, 16
        %v1034 = vrot.slane %v1032, 7
        %v1035 = vshll.u32 %v1022, 16
        %v1037 = vor.u32 %v1034, %v1035
        %v1038 = vsel %vm555, %v1030, %v1037
        %v1039 = vrot.slane %v1034, 4
        %s1043 = scalar_lea.vmem [#allocation2], 204
        %v1044 = vld [vmem:[%s1043] sm:$0xf]
        %v1045 = vsel %vm878, %v1029, %v1044
        %1046 = vst [vmem:[%s1043] sm:$0xf] %v1045
        %1047 = vst.msk [vmem:[%s1043 + $0x4] sm:$0xf] %vm882, %v1038
        %v1048 = vld [vmem:[%s1043 + $0x8] sm:$0x1]
        %v1049 = vsel %vm411, %v1039, %v1048
        %1050 = vst [vmem:[%s1043 + $0x8] sm:$0x1] %v1049
        %p1051 = scmp.eq.s32.totalorder %s25, 0
        // Predicated region
        $region45: #{tpu_custom_call.1} parent=43 // pred_check
          %p1052 = pneg %p1051
        $region46: #{tpu_custom_call.1} parent=43 // pred_check_branch
          %1054 = sbr.rel (%p1052) target = $region48
        $region47: #{tpu_custom_call.1} parent=43 // pred_region
          %v1055 = vld [vmem:[#allocation2] sm:$0xf]
          %v1056 = vsel %vm878, 0, %v1055
          %1057 = vst [vmem:[#allocation2] sm:$0xf] %v1056
          %1058 = vst.msk [vmem:[#allocation2 + $0x4] sm:$0xf] %vm882, 0
          %v1059 = vld [vmem:[#allocation2 + $0x8] sm:$0x1]
          %v1060 = vsel %vm411, 0, %v1059
          %1061 = vst [vmem:[#allocation2 + $0x8] sm:$0x1] %v1060
          %v1062 = vld [vmem:[%s1043] sm:$0xf]
          %v1063 = vsel %vm878, 0, %v1062
          %1064 = vst [vmem:[%s1043] sm:$0xf] %v1063
          %1065 = vst.msk [vmem:[%s1043 + $0x4] sm:$0xf] %vm882, 0
          %v1066 = vld [vmem:[%s1043 + $0x8] sm:$0x1]
          %v1067 = vsel %vm411, 0, %v1066
          %1068 = vst [vmem:[%s1043 + $0x8] sm:$0x1] %v1067
        $region48: #{tpu_custom_call.1} parent=43 // pred_fallthru
          _
        %v1069 = vld [vmem:[#allocation2] sm:$0xf]
        %v1070 = vld [vmem:[#allocation2 + $0x4] sm:$0xf]
        %v1071 = vld [vmem:[#allocation2 + $0x8] sm:$0x1]
        %v1072 = vld [vmem:[#allocation2 + $0xc] sm:$0xf]
        %v1073 = vld [vmem:[#allocation2 + $0x10] sm:$0xf]
        %v1074 = vld [vmem:[#allocation2 + $0x14] sm:$0x1]
        %v1075 = vld [vmem:[#allocation2 + $0x18] sm:$0xf]
        %v1076 = vld [vmem:[#allocation2 + $0x1c] sm:$0xf]
        %v1077 = vld [vmem:[#allocation2 + $0x20] sm:$0x1]
        %v1078 = vld [vmem:[#allocation2 + $0x24] sm:$0xf]
        %v1079 = vld [vmem:[#allocation2 + $0x28] sm:$0xf]
        %v1080 = vld [vmem:[#allocation2 + $0x2c] sm:$0x1]
        %v1081 = vld [vmem:[#allocation2 + $0x30] sm:$0xf]
        %v1082 = vld [vmem:[#allocation2 + $0x34] sm:$0xf]
        %v1083 = vld [vmem:[#allocation2 + $0x38] sm:$0x1]
        %v1084 = vld [vmem:[#allocation2 + $0x3c] sm:$0xf]
        %v1085 = vld [vmem:[#allocation2 + $0x40] sm:$0xf]
        %v1086 = vld [vmem:[#allocation2 + $0x44] sm:$0x1]
        %v1087 = vld [vmem:[#allocation2 + $0x48] sm:$0xf]
        %v1088 = vld [vmem:[#allocation2 + $0x4c] sm:$0xf]
        %v1089 = vld [vmem:[#allocation2 + $0x50] sm:$0x1]
        %v1090 = vld [vmem:[#allocation2 + $0x54] sm:$0xf]
        %v1091 = vld [vmem:[#allocation2 + $0x58] sm:$0xf]
        %v1092 = vld [vmem:[#allocation2 + $0x5c] sm:$0x1]
        %v1093 = vld [vmem:[#allocation2 + $0x60] sm:$0xf]
        %v1094 = vld [vmem:[#allocation2 + $0x64] sm:$0xf]
        %v1095 = vld [vmem:[#allocation2 + $0x68] sm:$0x1]
        %v1096 = vld [vmem:[#allocation2 + $0x6c] sm:$0xf]
        %v1097 = vld [vmem:[#allocation2 + $0x70] sm:$0xf]
        %v1098 = vld [vmem:[#allocation2 + $0x74] sm:$0x1]
        %v1099 = vld [vmem:[#allocation2 + $0x78] sm:$0xf]
        %v1100 = vld [vmem:[#allocation2 + $0x7c] sm:$0xf]
        %v1101 = vld [vmem:[#allocation2 + $0x80] sm:$0x1]
        %v1102 = vld [vmem:[#allocation2 + $0x84] sm:$0xf]
        %v1103 = vld [vmem:[#allocation2 + $0x88] sm:$0xf]
        %v1104 = vld [vmem:[#allocation2 + $0x8c] sm:$0x1]
        %v1105 = vld [vmem:[#allocation2 + $0x90] sm:$0xf]
        %v1106 = vld [vmem:[#allocation2 + $0x94] sm:$0xf]
        %v1107 = vld [vmem:[#allocation2 + $0x98] sm:$0x1]
        %v1108 = vld [vmem:[#allocation2 + $0x9c] sm:$0xf]
        %v1109 = vld [vmem:[#allocation2 + $0xa0] sm:$0xf]
        %v1110 = vld [vmem:[#allocation2 + $0xa4] sm:$0x1]
        %v1111 = vld [vmem:[#allocation2 + $0xa8] sm:$0xf]
        %v1112 = vld [vmem:[#allocation2 + $0xac] sm:$0xf]
        %v1113 = vld [vmem:[#allocation2 + $0xb0] sm:$0x1]
        %v1114 = vld [vmem:[#allocation2 + $0xb4] sm:$0xf]
        %v1115 = vld [vmem:[#allocation2 + $0xb8] sm:$0xf]
        %v1116 = vld [vmem:[#allocation2 + $0xbc] sm:$0x1]
        %v1149 = vunpack.c.l.b16 %v1069
        %v1150 = vunpack.c.l.b16 %v1070
        %v1151 = vunpack.c.l.b16 %v1072
        %v1152 = vunpack.c.l.b16 %v1073
        %v1153 = vunpack.c.l.b16 %v1075
        %v1154 = vunpack.c.l.b16 %v1076
        %v1155 = vunpack.c.l.b16 %v1078
        %v1156 = vunpack.c.l.b16 %v1079
        %v1157 = vunpack.c.l.b16 %v1081
        %v1158 = vunpack.c.l.b16 %v1082
        %v1159 = vunpack.c.l.b16 %v1084
        %v1160 = vunpack.c.l.b16 %v1085
        %v1161 = vunpack.c.l.b16 %v1087
        %v1162 = vunpack.c.l.b16 %v1088
        %v1163 = vunpack.c.l.b16 %v1090
        %v1164 = vunpack.c.l.b16 %v1091
        %v1165 = vunpack.c.l.b16 %v1093
        %v1166 = vunpack.c.l.b16 %v1094
        %v1167 = vunpack.c.l.b16 %v1096
        %v1168 = vunpack.c.l.b16 %v1097
        %v1169 = vunpack.c.l.b16 %v1099
        %v1170 = vunpack.c.l.b16 %v1100
        %v1171 = vunpack.c.l.b16 %v1102
        %v1172 = vunpack.c.l.b16 %v1103
        %v1173 = vunpack.c.l.b16 %v1105
        %v1174 = vunpack.c.l.b16 %v1106
        %v1175 = vunpack.c.l.b16 %v1108
        %v1176 = vunpack.c.l.b16 %v1109
        %v1177 = vunpack.c.l.b16 %v1111
        %v1178 = vunpack.c.l.b16 %v1112
        %v1179 = vunpack.c.l.b16 %v1114
        %v1180 = vunpack.c.l.b16 %v1115
        %v1181 = vpack.c.b16 %v1150, %v1149
        %v1182 = vpack.c.b16 %v1152, %v1151
        %v1183 = vpack.c.b16 %v1154, %v1153
        %v1184 = vpack.c.b16 %v1156, %v1155
        %v1185 = vpack.c.b16 %v1158, %v1157
        %v1186 = vpack.c.b16 %v1160, %v1159
        %v1187 = vpack.c.b16 %v1162, %v1161
        %v1188 = vpack.c.b16 %v1164, %v1163
        %v1189 = vpack.c.b16 %v1166, %v1165
        %v1190 = vpack.c.b16 %v1168, %v1167
        %v1191 = vpack.c.b16 %v1170, %v1169
        %v1192 = vpack.c.b16 %v1172, %v1171
        %v1193 = vpack.c.b16 %v1174, %v1173
        %v1194 = vpack.c.b16 %v1176, %v1175
        %v1195 = vpack.c.b16 %v1178, %v1177
        %v1196 = vpack.c.b16 %v1180, %v1179
        %v1213 = vunpack.c.l.b16 %v1071
        %v1214 = vunpack.c.l.b16 %v1074
        %v1215 = vunpack.c.l.b16 %v1077
        %v1216 = vunpack.c.l.b16 %v1080
        %v1217 = vunpack.c.l.b16 %v1083
        %v1218 = vunpack.c.l.b16 %v1086
        %v1219 = vunpack.c.l.b16 %v1089
        %v1220 = vunpack.c.l.b16 %v1092
        %v1221 = vunpack.c.l.b16 %v1095
        %v1222 = vunpack.c.l.b16 %v1098
        %v1223 = vunpack.c.l.b16 %v1101
        %v1224 = vunpack.c.l.b16 %v1104
        %v1225 = vunpack.c.l.b16 %v1107
        %v1226 = vunpack.c.l.b16 %v1110
        %v1227 = vunpack.c.l.b16 %v1113
        %v1228 = vunpack.c.l.b16 %v1116
        %v1229 = vpack.c.b16 %v1213, %v1213
        %v1230 = vpack.c.b16 %v1214, %v1214
        %v1231 = vpack.c.b16 %v1215, %v1215
        %v1232 = vpack.c.b16 %v1216, %v1216
        %v1233 = vpack.c.b16 %v1217, %v1217
        %v1234 = vpack.c.b16 %v1218, %v1218
        %v1235 = vpack.c.b16 %v1219, %v1219
        %v1236 = vpack.c.b16 %v1220, %v1220
        %v1237 = vpack.c.b16 %v1221, %v1221
        %v1238 = vpack.c.b16 %v1222, %v1222
        %v1239 = vpack.c.b16 %v1223, %v1223
        %v1240 = vpack.c.b16 %v1224, %v1224
        %v1241 = vpack.c.b16 %v1225, %v1225
        %v1242 = vpack.c.b16 %v1226, %v1226
        %v1243 = vpack.c.b16 %v1227, %v1227
        %v1244 = vpack.c.b16 %v1228, %v1228
        %vm1245 = vsmask.f32 7424
        %v1247 = vshrl.u32 %v1181, 16
        %v1249 = vshll.u32 %v1181, 16
        %v1251 = vrot.slane %v1249, 1
        %v1252 = vor.u32 %v1247, %v1251
        %v1254 = vshll.u32 %v1229, 16
        %v1256 = vrot.slane %v1254, 1
        %v1257 = vsel %vm1245, %v1252, %v1256
        %v1259 = vshrl.u32 %v1182, 16
        %v1261 = vshll.u32 %v1182, 16
        %v1263 = vrot.slane %v1261, 1
        %v1264 = vor.u32 %v1259, %v1263
        %v1266 = vshll.u32 %v1230, 16
        %v1268 = vrot.slane %v1266, 1
        %v1269 = vsel %vm1245, %v1264, %v1268
        %v1271 = vshrl.u32 %v1183, 16
        %v1273 = vshll.u32 %v1183, 16
        %v1275 = vrot.slane %v1273, 1
        %v1276 = vor.u32 %v1271, %v1275
        %v1278 = vshll.u32 %v1231, 16
        %v1280 = vrot.slane %v1278, 1
        %v1281 = vsel %vm1245, %v1276, %v1280
        %v1283 = vshrl.u32 %v1184, 16
        %v1285 = vshll.u32 %v1184, 16
        %v1287 = vrot.slane %v1285, 1
        %v1288 = vor.u32 %v1283, %v1287
        %v1290 = vshll.u32 %v1232, 16
        %v1292 = vrot.slane %v1290, 1
        %v1293 = vsel %vm1245, %v1288, %v1292
        %v1295 = vshrl.u32 %v1185, 16
        %v1297 = vshll.u32 %v1185, 16
        %v1299 = vrot.slane %v1297, 1
        %v1300 = vor.u32 %v1295, %v1299
        %v1302 = vshll.u32 %v1233, 16
        %v1304 = vrot.slane %v1302, 1
        %v1305 = vsel %vm1245, %v1300, %v1304
        %v1307 = vshrl.u32 %v1186, 16
        %v1309 = vshll.u32 %v1186, 16
        %v1311 = vrot.slane %v1309, 1
        %v1312 = vor.u32 %v1307, %v1311
        %v1314 = vshll.u32 %v1234, 16
        %v1316 = vrot.slane %v1314, 1
        %v1317 = vsel %vm1245, %v1312, %v1316
        %v1319 = vshrl.u32 %v1187, 16
        %v1321 = vshll.u32 %v1187, 16
        %v1323 = vrot.slane %v1321, 1
        %v1324 = vor.u32 %v1319, %v1323
        %v1326 = vshll.u32 %v1235, 16
        %v1328 = vrot.slane %v1326, 1
        %v1329 = vsel %vm1245, %v1324, %v1328
        %v1331 = vshrl.u32 %v1188, 16
        %v1333 = vshll.u32 %v1188, 16
        %v1335 = vrot.slane %v1333, 1
        %v1336 = vor.u32 %v1331, %v1335
        %v1338 = vshll.u32 %v1236, 16
        %v1340 = vrot.slane %v1338, 1
        %v1341 = vsel %vm1245, %v1336, %v1340
        %v1343 = vshrl.u32 %v1189, 16
        %v1345 = vshll.u32 %v1189, 16
        %v1347 = vrot.slane %v1345, 1
        %v1348 = vor.u32 %v1343, %v1347
        %v1350 = vshll.u32 %v1237, 16
        %v1352 = vrot.slane %v1350, 1
        %v1353 = vsel %vm1245, %v1348, %v1352
        %v1355 = vshrl.u32 %v1190, 16
        %v1357 = vshll.u32 %v1190, 16
        %v1359 = vrot.slane %v1357, 1
        %v1360 = vor.u32 %v1355, %v1359
        %v1362 = vshll.u32 %v1238, 16
        %v1364 = vrot.slane %v1362, 1
        %v1365 = vsel %vm1245, %v1360, %v1364
        %v1367 = vshrl.u32 %v1191, 16
        %v1369 = vshll.u32 %v1191, 16
        %v1371 = vrot.slane %v1369, 1
        %v1372 = vor.u32 %v1367, %v1371
        %v1374 = vshll.u32 %v1239, 16
        %v1376 = vrot.slane %v1374, 1
        %v1377 = vsel %vm1245, %v1372, %v1376
        %v1379 = vshrl.u32 %v1192, 16
        %v1381 = vshll.u32 %v1192, 16
        %v1383 = vrot.slane %v1381, 1
        %v1384 = vor.u32 %v1379, %v1383
        %v1386 = vshll.u32 %v1240, 16
        %v1388 = vrot.slane %v1386, 1
        %v1389 = vsel %vm1245, %v1384, %v1388
        %v1391 = vshrl.u32 %v1193, 16
        %v1393 = vshll.u32 %v1193, 16
        %v1395 = vrot.slane %v1393, 1
        %v1396 = vor.u32 %v1391, %v1395
        %v1398 = vshll.u32 %v1241, 16
        %v1400 = vrot.slane %v1398, 1
        %v1401 = vsel %vm1245, %v1396, %v1400
        %v1403 = vshrl.u32 %v1194, 16
        %v1405 = vshll.u32 %v1194, 16
        %v1407 = vrot.slane %v1405, 1
        %v1408 = vor.u32 %v1403, %v1407
        %v1410 = vshll.u32 %v1242, 16
        %v1412 = vrot.slane %v1410, 1
        %v1413 = vsel %vm1245, %v1408, %v1412
        %v1415 = vshrl.u32 %v1195, 16
        %v1417 = vshll.u32 %v1195, 16
        %v1419 = vrot.slane %v1417, 1
        %v1420 = vor.u32 %v1415, %v1419
        %v1422 = vshll.u32 %v1243, 16
        %v1424 = vrot.slane %v1422, 1
        %v1425 = vsel %vm1245, %v1420, %v1424
        %v1427 = vshrl.u32 %v1196, 16
        %v1429 = vshll.u32 %v1196, 16
        %v1431 = vrot.slane %v1429, 1
        %v1432 = vor.u32 %v1427, %v1431
        %v1434 = vshll.u32 %v1244, 16
        %v1436 = vrot.slane %v1434, 1
        %v1437 = vsel %vm1245, %v1432, %v1436
        %1438 = vrot.lane.b32.xlu0 %v1257, 3
        %v1439 = vpop.permute.xlu0 %1438
        %1440 = vrot.lane.b32.xlu0 %v1269, 3
        %v1441 = vpop.permute.xlu0 %1440
        %1442 = vrot.lane.b32.xlu0 %v1281, 3
        %v1443 = vpop.permute.xlu0 %1442
        %1444 = vrot.lane.b32.xlu0 %v1293, 3
        %v1445 = vpop.permute.xlu0 %1444
        %1446 = vrot.lane.b32.xlu0 %v1305, 3
        %v1447 = vpop.permute.xlu0 %1446
        %1448 = vrot.lane.b32.xlu0 %v1317, 3
        %v1449 = vpop.permute.xlu0 %1448
        %1450 = vrot.lane.b32.xlu0 %v1329, 3
        %v1451 = vpop.permute.xlu0 %1450
        %1452 = vrot.lane.b32.xlu0 %v1341, 3
        %v1453 = vpop.permute.xlu0 %1452
        %1454 = vrot.lane.b32.xlu0 %v1353, 3
        %v1455 = vpop.permute.xlu0 %1454
        %1456 = vrot.lane.b32.xlu0 %v1365, 3
        %v1457 = vpop.permute.xlu0 %1456
        %1458 = vrot.lane.b32.xlu0 %v1377, 3
        %v1459 = vpop.permute.xlu0 %1458
        %1460 = vrot.lane.b32.xlu0 %v1389, 3
        %v1461 = vpop.permute.xlu0 %1460
        %1462 = vrot.lane.b32.xlu0 %v1401, 3
        %v1463 = vpop.permute.xlu0 %1462
        %1464 = vrot.lane.b32.xlu0 %v1413, 3
        %v1465 = vpop.permute.xlu0 %1464
        %1466 = vrot.lane.b32.xlu0 %v1425, 3
        %v1467 = vpop.permute.xlu0 %1466
        %1468 = vrot.lane.b32.xlu0 %v1437, 3
        %v1469 = vpop.permute.xlu0 %1468
        %vm1470 = vcmask 1046528
        %v1471 = vrot.slane %v1181, 1
        %v1472 = vrot.slane %v1229, 1
        %v1473 = vsel %vm1470, %v1471, %v1472
        %v1474 = vrot.slane %v1182, 1
        %v1475 = vrot.slane %v1230, 1
        %v1476 = vsel %vm1470, %v1474, %v1475
        %v1477 = vrot.slane %v1183, 1
        %v1478 = vrot.slane %v1231, 1
        %v1479 = vsel %vm1470, %v1477, %v1478
        %v1480 = vrot.slane %v1184, 1
        %v1481 = vrot.slane %v1232, 1
        %v1482 = vsel %vm1470, %v1480, %v1481
        %v1483 = vrot.slane %v1185, 1
        %v1484 = vrot.slane %v1233, 1
        %v1485 = vsel %vm1470, %v1483, %v1484
        %v1486 = vrot.slane %v1186, 1
        %v1487 = vrot.slane %v1234, 1
        %v1488 = vsel %vm1470, %v1486, %v1487
        %v1489 = vrot.slane %v1187, 1
        %v1490 = vrot.slane %v1235, 1
        %v1491 = vsel %vm1470, %v1489, %v1490
        %v1492 = vrot.slane %v1188, 1
        %v1493 = vrot.slane %v1236, 1
        %v1494 = vsel %vm1470, %v1492, %v1493
        %v1495 = vrot.slane %v1189, 1
        %v1496 = vrot.slane %v1237, 1
        %v1497 = vsel %vm1470, %v1495, %v1496
        %v1498 = vrot.slane %v1190, 1
        %v1499 = vrot.slane %v1238, 1
        %v1500 = vsel %vm1470, %v1498, %v1499
        %v1501 = vrot.slane %v1191, 1
        %v1502 = vrot.slane %v1239, 1
        %v1503 = vsel %vm1470, %v1501, %v1502
        %v1504 = vrot.slane %v1192, 1
        %v1505 = vrot.slane %v1240, 1
        %v1506 = vsel %vm1470, %v1504, %v1505
        %v1507 = vrot.slane %v1193, 1
        %v1508 = vrot.slane %v1241, 1
        %v1509 = vsel %vm1470, %v1507, %v1508
        %v1510 = vrot.slane %v1194, 1
        %v1511 = vrot.slane %v1242, 1
        %v1512 = vsel %vm1470, %v1510, %v1511
        %v1513 = vrot.slane %v1195, 1
        %v1514 = vrot.slane %v1243, 1
        %v1515 = vsel %vm1470, %v1513, %v1514
        %v1516 = vrot.slane %v1196, 1
        %v1517 = vrot.slane %v1244, 1
        %v1518 = vsel %vm1470, %v1516, %v1517
        %1519 = vrot.lane.b32.xlu0 %v1473, 6
        %v1520 = vpop.permute.xlu0 %1519
        %1521 = vrot.lane.b32.xlu0 %v1476, 6
        %v1522 = vpop.permute.xlu0 %1521
        %1523 = vrot.lane.b32.xlu0 %v1479, 6
        %v1524 = vpop.permute.xlu0 %1523
        %1525 = vrot.lane.b32.xlu0 %v1482, 6
        %v1526 = vpop.permute.xlu0 %1525
        %1527 = vrot.lane.b32.xlu0 %v1485, 6
        %v1528 = vpop.permute.xlu0 %1527
        %1529 = vrot.lane.b32.xlu0 %v1488, 6
        %v1530 = vpop.permute.xlu0 %1529
        %1531 = vrot.lane.b32.xlu0 %v1491, 6
        %v1532 = vpop.permute.xlu0 %1531
        %1533 = vrot.lane.b32.xlu0 %v1494, 6
        %v1534 = vpop.permute.xlu0 %1533
        %1535 = vrot.lane.b32.xlu0 %v1497, 6
        %v1536 = vpop.permute.xlu0 %1535
        %1537 = vrot.lane.b32.xlu0 %v1500, 6
        %v1538 = vpop.permute.xlu0 %1537
        %1539 = vrot.lane.b32.xlu0 %v1503, 6
        %v1540 = vpop.permute.xlu0 %1539
        %1541 = vrot.lane.b32.xlu0 %v1506, 6
        %v1542 = vpop.permute.xlu0 %1541
        %1543 = vrot.lane.b32.xlu0 %v1509, 6
        %v1544 = vpop.permute.xlu0 %1543
        %1545 = vrot.lane.b32.xlu0 %v1512, 6
        %v1546 = vpop.permute.xlu0 %1545
        %1547 = vrot.lane.b32.xlu0 %v1515, 6
        %v1548 = vpop.permute.xlu0 %1547
        %1549 = vrot.lane.b32.xlu0 %v1518, 6
        %v1550 = vpop.permute.xlu0 %1549
        %vm1551 = vcmask 23552
        %v1553 = vsel %vm1551, %v1181, %v1439
        %v1555 = vsel %vm1551, %v1182, %v1441
        %v1557 = vsel %vm1551, %v1183, %v1443
        %v1559 = vsel %vm1551, %v1184, %v1445
        %v1561 = vsel %vm1551, %v1185, %v1447
        %v1563 = vsel %vm1551, %v1186, %v1449
        %v1565 = vsel %vm1551, %v1187, %v1451
        %v1567 = vsel %vm1551, %v1188, %v1453
        %v1569 = vsel %vm1551, %v1189, %v1455
        %v1571 = vsel %vm1551, %v1190, %v1457
        %v1573 = vsel %vm1551, %v1191, %v1459
        %v1575 = vsel %vm1551, %v1192, %v1461
        %v1577 = vsel %vm1551, %v1193, %v1463
        %v1579 = vsel %vm1551, %v1194, %v1465
        %v1581 = vsel %vm1551, %v1195, %v1467
        %v1583 = vsel %vm1551, %v1196, %v1469
        %vm1584 = vcmask 48128
        %v1586 = vsel %vm1584, %v1553, %v1520
        %v1588 = vsel %vm1584, %v1555, %v1522
        %v1590 = vsel %vm1584, %v1557, %v1524
        %v1592 = vsel %vm1584, %v1559, %v1526
        %v1594 = vsel %vm1584, %v1561, %v1528
        %v1596 = vsel %vm1584, %v1563, %v1530
        %v1598 = vsel %vm1584, %v1565, %v1532
        %v1600 = vsel %vm1584, %v1567, %v1534
        %v1602 = vsel %vm1584, %v1569, %v1536
        %v1604 = vsel %vm1584, %v1571, %v1538
        %v1606 = vsel %vm1584, %v1573, %v1540
        %v1608 = vsel %vm1584, %v1575, %v1542
        %v1610 = vsel %vm1584, %v1577, %v1544
        %v1612 = vsel %vm1584, %v1579, %v1546
        %v1614 = vsel %vm1584, %v1581, %v1548
        %v1616 = vsel %vm1584, %v1583, %v1550
        %v1617 = vld [vmem:[%s3] sm:$0xf]
        %v1618 = vld [vmem:[%s3 + $0x4] sm:$0x1]
        %v1619 = vld [vmem:[%s876] sm:$0xf]
        %v1620 = vld [vmem:[%s876 + $0x4] sm:$0xf]
        %v1621 = vld [vmem:[%s876 + $0x8] sm:$0x1]
        %v1622 = vld [vmem:[%s876 + $0xc] sm:$0xf]
        %v1623 = vld [vmem:[%s876 + $0x10] sm:$0xf]
        %v1624 = vld [vmem:[%s876 + $0x14] sm:$0x1]
        %v1625 = vld [vmem:[%s876 + $0x18] sm:$0xf]
        %v1626 = vld [vmem:[%s876 + $0x1c] sm:$0xf]
        %v1627 = vld [vmem:[%s876 + $0x20] sm:$0x1]
        %v1628 = vld [vmem:[%s876 + $0x24] sm:$0xf]
        %v1629 = vld [vmem:[%s876 + $0x28] sm:$0xf]
        %v1630 = vld [vmem:[%s876 + $0x2c] sm:$0x1]
        %v1631 = vld [vmem:[%s876 + $0x30] sm:$0xf]
        %v1632 = vld [vmem:[%s876 + $0x34] sm:$0xf]
        %v1633 = vld [vmem:[%s876 + $0x38] sm:$0x1]
        %v1634 = vld [vmem:[%s876 + $0x3c] sm:$0xf]
        %v1635 = vld [vmem:[%s876 + $0x40] sm:$0xf]
        %v1636 = vld [vmem:[%s876 + $0x44] sm:$0x1]
        %v1637 = vld [vmem:[%s876 + $0x48] sm:$0xf]
        %v1638 = vld [vmem:[%s876 + $0x4c] sm:$0xf]
        %v1639 = vld [vmem:[%s876 + $0x50] sm:$0x1]
        %v1640 = vld [vmem:[%s876 + $0x54] sm:$0xf]
        %v1641 = vld [vmem:[%s876 + $0x58] sm:$0xf]
        %v1642 = vld [vmem:[%s876 + $0x5c] sm:$0x1]
        %v1643 = vld [vmem:[%s876 + $0x60] sm:$0xf]
        %v1644 = vld [vmem:[%s876 + $0x64] sm:$0xf]
        %v1645 = vld [vmem:[%s876 + $0x68] sm:$0x1]
        %v1646 = vld [vmem:[%s876 + $0x6c] sm:$0xf]
        %v1647 = vld [vmem:[%s876 + $0x70] sm:$0xf]
        %v1648 = vld [vmem:[%s876 + $0x74] sm:$0x1]
        %v1649 = vld [vmem:[%s876 + $0x78] sm:$0xf]
        %v1650 = vld [vmem:[%s876 + $0x7c] sm:$0xf]
        %v1651 = vld [vmem:[%s876 + $0x80] sm:$0x1]
        %v1652 = vld [vmem:[%s876 + $0x84] sm:$0xf]
        %v1653 = vld [vmem:[%s876 + $0x88] sm:$0xf]
        %v1654 = vld [vmem:[%s876 + $0x8c] sm:$0x1]
        %v1655 = vld [vmem:[%s876 + $0x90] sm:$0xf]
        %v1656 = vld [vmem:[%s876 + $0x94] sm:$0xf]
        %v1657 = vld [vmem:[%s876 + $0x98] sm:$0x1]
        %v1658 = vld [vmem:[%s876 + $0x9c] sm:$0xf]
        %v1659 = vld [vmem:[%s876 + $0xa0] sm:$0xf]
        %v1660 = vld [vmem:[%s876 + $0xa4] sm:$0x1]
        %v1661 = vld [vmem:[%s876 + $0xa8] sm:$0xf]
        %v1662 = vld [vmem:[%s876 + $0xac] sm:$0xf]
        %v1663 = vld [vmem:[%s876 + $0xb0] sm:$0x1]
        %v1664 = vld [vmem:[%s876 + $0xb4] sm:$0xf]
        %v1665 = vld [vmem:[%s876 + $0xb8] sm:$0xf]
        %v1666 = vld [vmem:[%s876 + $0xbc] sm:$0x1]
        %v1699 = vunpack.c.l.b16 %v1619
        %v1700 = vunpack.c.l.b16 %v1620
        %v1701 = vunpack.c.l.b16 %v1622
        %v1702 = vunpack.c.l.b16 %v1623
        %v1703 = vunpack.c.l.b16 %v1625
        %v1704 = vunpack.c.l.b16 %v1626
        %v1705 = vunpack.c.l.b16 %v1628
        %v1706 = vunpack.c.l.b16 %v1629
        %v1707 = vunpack.c.l.b16 %v1631
        %v1708 = vunpack.c.l.b16 %v1632
        %v1709 = vunpack.c.l.b16 %v1634
        %v1710 = vunpack.c.l.b16 %v1635
        %v1711 = vunpack.c.l.b16 %v1637
        %v1712 = vunpack.c.l.b16 %v1638
        %v1713 = vunpack.c.l.b16 %v1640
        %v1714 = vunpack.c.l.b16 %v1641
        %v1715 = vunpack.c.l.b16 %v1643
        %v1716 = vunpack.c.l.b16 %v1644
        %v1717 = vunpack.c.l.b16 %v1646
        %v1718 = vunpack.c.l.b16 %v1647
        %v1719 = vunpack.c.l.b16 %v1649
        %v1720 = vunpack.c.l.b16 %v1650
        %v1721 = vunpack.c.l.b16 %v1652
        %v1722 = vunpack.c.l.b16 %v1653
        %v1723 = vunpack.c.l.b16 %v1655
        %v1724 = vunpack.c.l.b16 %v1656
        %v1725 = vunpack.c.l.b16 %v1658
        %v1726 = vunpack.c.l.b16 %v1659
        %v1727 = vunpack.c.l.b16 %v1661
        %v1728 = vunpack.c.l.b16 %v1662
        %v1729 = vunpack.c.l.b16 %v1664
        %v1730 = vunpack.c.l.b16 %v1665
        %v1731 = vpack.c.b16 %v1700, %v1699
        %v1732 = vpack.c.b16 %v1702, %v1701
        %v1733 = vpack.c.b16 %v1704, %v1703
        %v1734 = vpack.c.b16 %v1706, %v1705
        %v1735 = vpack.c.b16 %v1708, %v1707
        %v1736 = vpack.c.b16 %v1710, %v1709
        %v1737 = vpack.c.b16 %v1712, %v1711
        %v1738 = vpack.c.b16 %v1714, %v1713
        %v1739 = vpack.c.b16 %v1716, %v1715
        %v1740 = vpack.c.b16 %v1718, %v1717
        %v1741 = vpack.c.b16 %v1720, %v1719
        %v1742 = vpack.c.b16 %v1722, %v1721
        %v1743 = vpack.c.b16 %v1724, %v1723
        %v1744 = vpack.c.b16 %v1726, %v1725
        %v1745 = vpack.c.b16 %v1728, %v1727
        %v1746 = vpack.c.b16 %v1730, %v1729
        %v1763 = vunpack.c.l.b16 %v1621
        %v1764 = vunpack.c.l.b16 %v1624
        %v1765 = vunpack.c.l.b16 %v1627
        %v1766 = vunpack.c.l.b16 %v1630
        %v1767 = vunpack.c.l.b16 %v1633
        %v1768 = vunpack.c.l.b16 %v1636
        %v1769 = vunpack.c.l.b16 %v1639
        %v1770 = vunpack.c.l.b16 %v1642
        %v1771 = vunpack.c.l.b16 %v1645
        %v1772 = vunpack.c.l.b16 %v1648
        %v1773 = vunpack.c.l.b16 %v1651
        %v1774 = vunpack.c.l.b16 %v1654
        %v1775 = vunpack.c.l.b16 %v1657
        %v1776 = vunpack.c.l.b16 %v1660
        %v1777 = vunpack.c.l.b16 %v1663
        %v1778 = vunpack.c.l.b16 %v1666
        %v1779 = vpack.c.b16 %v1763, %v1763
        %v1780 = vpack.c.b16 %v1764, %v1764
        %v1781 = vpack.c.b16 %v1765, %v1765
        %v1782 = vpack.c.b16 %v1766, %v1766
        %v1783 = vpack.c.b16 %v1767, %v1767
        %v1784 = vpack.c.b16 %v1768, %v1768
        %v1785 = vpack.c.b16 %v1769, %v1769
        %v1786 = vpack.c.b16 %v1770, %v1770
        %v1787 = vpack.c.b16 %v1771, %v1771
        %v1788 = vpack.c.b16 %v1772, %v1772
        %v1789 = vpack.c.b16 %v1773, %v1773
        %v1790 = vpack.c.b16 %v1774, %v1774
        %v1791 = vpack.c.b16 %v1775, %v1775
        %v1792 = vpack.c.b16 %v1776, %v1776
        %v1793 = vpack.c.b16 %v1777, %v1777
        %v1794 = vpack.c.b16 %v1778, %v1778
        %v1796 = vshrl.u32 %v1731, 16
        %v1798 = vshll.u32 %v1731, 16
        %v1800 = vrot.slane %v1798, 1
        %v1801 = vor.u32 %v1796, %v1800
        %v1803 = vshll.u32 %v1779, 16
        %v1805 = vrot.slane %v1803, 1
        %v1806 = vsel %vm1245, %v1801, %v1805
        %v1808 = vshrl.u32 %v1732, 16
        %v1810 = vshll.u32 %v1732, 16
        %v1812 = vrot.slane %v1810, 1
        %v1813 = vor.u32 %v1808, %v1812
        %v1815 = vshll.u32 %v1780, 16
        %v1817 = vrot.slane %v1815, 1
        %v1818 = vsel %vm1245, %v1813, %v1817
        %v1820 = vshrl.u32 %v1733, 16
        %v1822 = vshll.u32 %v1733, 16
        %v1824 = vrot.slane %v1822, 1
        %v1825 = vor.u32 %v1820, %v1824
        %v1827 = vshll.u32 %v1781, 16
        %v1829 = vrot.slane %v1827, 1
        %v1830 = vsel %vm1245, %v1825, %v1829
        %v1832 = vshrl.u32 %v1734, 16
        %v1834 = vshll.u32 %v1734, 16
        %v1836 = vrot.slane %v1834, 1
        %v1837 = vor.u32 %v1832, %v1836
        %v1839 = vshll.u32 %v1782, 16
        %v1841 = vrot.slane %v1839, 1
        %v1842 = vsel %vm1245, %v1837, %v1841
        %v1844 = vshrl.u32 %v1735, 16
        %v1846 = vshll.u32 %v1735, 16
        %v1848 = vrot.slane %v1846, 1
        %v1849 = vor.u32 %v1844, %v1848
        %v1851 = vshll.u32 %v1783, 16
        %v1853 = vrot.slane %v1851, 1
        %v1854 = vsel %vm1245, %v1849, %v1853
        %v1856 = vshrl.u32 %v1736, 16
        %v1858 = vshll.u32 %v1736, 16
        %v1860 = vrot.slane %v1858, 1
        %v1861 = vor.u32 %v1856, %v1860
        %v1863 = vshll.u32 %v1784, 16
        %v1865 = vrot.slane %v1863, 1
        %v1866 = vsel %vm1245, %v1861, %v1865
        %v1868 = vshrl.u32 %v1737, 16
        %v1870 = vshll.u32 %v1737, 16
        %v1872 = vrot.slane %v1870, 1
        %v1873 = vor.u32 %v1868, %v1872
        %v1875 = vshll.u32 %v1785, 16
        %v1877 = vrot.slane %v1875, 1
        %v1878 = vsel %vm1245, %v1873, %v1877
        %v1880 = vshrl.u32 %v1738, 16
        %v1882 = vshll.u32 %v1738, 16
        %v1884 = vrot.slane %v1882, 1
        %v1885 = vor.u32 %v1880, %v1884
        %v1887 = vshll.u32 %v1786, 16
        %v1889 = vrot.slane %v1887, 1
        %v1890 = vsel %vm1245, %v1885, %v1889
        %v1892 = vshrl.u32 %v1739, 16
        %v1894 = vshll.u32 %v1739, 16
        %v1896 = vrot.slane %v1894, 1
        %v1897 = vor.u32 %v1892, %v1896
        %v1899 = vshll.u32 %v1787, 16
        %v1901 = vrot.slane %v1899, 1
        %v1902 = vsel %vm1245, %v1897, %v1901
        %v1904 = vshrl.u32 %v1740, 16
        %v1906 = vshll.u32 %v1740, 16
        %v1908 = vrot.slane %v1906, 1
        %v1909 = vor.u32 %v1904, %v1908
        %v1911 = vshll.u32 %v1788, 16
        %v1913 = vrot.slane %v1911, 1
        %v1914 = vsel %vm1245, %v1909, %v1913
        %v1916 = vshrl.u32 %v1741, 16
        %v1918 = vshll.u32 %v1741, 16
        %v1920 = vrot.slane %v1918, 1
        %v1921 = vor.u32 %v1916, %v1920
        %v1923 = vshll.u32 %v1789, 16
        %v1925 = vrot.slane %v1923, 1
        %v1926 = vsel %vm1245, %v1921, %v1925
        %v1928 = vshrl.u32 %v1742, 16
        %v1930 = vshll.u32 %v1742, 16
        %v1932 = vrot.slane %v1930, 1
        %v1933 = vor.u32 %v1928, %v1932
        %v1935 = vshll.u32 %v1790, 16
        %v1937 = vrot.slane %v1935, 1
        %v1938 = vsel %vm1245, %v1933, %v1937
        %v1940 = vshrl.u32 %v1743, 16
        %v1942 = vshll.u32 %v1743, 16
        %v1944 = vrot.slane %v1942, 1
        %v1945 = vor.u32 %v1940, %v1944
        %v1947 = vshll.u32 %v1791, 16
        %v1949 = vrot.slane %v1947, 1
        %v1950 = vsel %vm1245, %v1945, %v1949
        %v1952 = vshrl.u32 %v1744, 16
        %v1954 = vshll.u32 %v1744, 16
        %v1956 = vrot.slane %v1954, 1
        %v1957 = vor.u32 %v1952, %v1956
        %v1959 = vshll.u32 %v1792, 16
        %v1961 = vrot.slane %v1959, 1
        %v1962 = vsel %vm1245, %v1957, %v1961
        %v1964 = vshrl.u32 %v1745, 16
        %v1966 = vshll.u32 %v1745, 16
        %v1968 = vrot.slane %v1966, 1
        %v1969 = vor.u32 %v1964, %v1968
        %v1971 = vshll.u32 %v1793, 16
        %v1973 = vrot.slane %v1971, 1
        %v1974 = vsel %vm1245, %v1969, %v1973
        %v1976 = vshrl.u32 %v1746, 16
        %v1978 = vshll.u32 %v1746, 16
        %v1980 = vrot.slane %v1978, 1
        %v1981 = vor.u32 %v1976, %v1980
        %v1983 = vshll.u32 %v1794, 16
        %v1985 = vrot.slane %v1983, 1
        %v1986 = vsel %vm1245, %v1981, %v1985
        %1987 = vrot.lane.b32.xlu0 %v1806, 3
        %v1988 = vpop.permute.xlu0 %1987
        %1989 = vrot.lane.b32.xlu0 %v1818, 3
        %v1990 = vpop.permute.xlu0 %1989
        %1991 = vrot.lane.b32.xlu0 %v1830, 3
        %v1992 = vpop.permute.xlu0 %1991
        %1993 = vrot.lane.b32.xlu0 %v1842, 3
        %v1994 = vpop.permute.xlu0 %1993
        %1995 = vrot.lane.b32.xlu0 %v1854, 3
        %v1996 = vpop.permute.xlu0 %1995
        %1997 = vrot.lane.b32.xlu0 %v1866, 3
        %v1998 = vpop.permute.xlu0 %1997
        %1999 = vrot.lane.b32.xlu0 %v1878, 3
        %v2000 = vpop.permute.xlu0 %1999
        %2001 = vrot.lane.b32.xlu0 %v1890, 3
        %v2002 = vpop.permute.xlu0 %2001
        %2003 = vrot.lane.b32.xlu0 %v1902, 3
        %v2004 = vpop.permute.xlu0 %2003
        %2005 = vrot.lane.b32.xlu0 %v1914, 3
        %v2006 = vpop.permute.xlu0 %2005
        %2007 = vrot.lane.b32.xlu0 %v1926, 3
        %v2008 = vpop.permute.xlu0 %2007
        %2009 = vrot.lane.b32.xlu0 %v1938, 3
        %v2010 = vpop.permute.xlu0 %2009
        %2011 = vrot.lane.b32.xlu0 %v1950, 3
        %v2012 = vpop.permute.xlu0 %2011
        %2013 = vrot.lane.b32.xlu0 %v1962, 3
        %v2014 = vpop.permute.xlu0 %2013
        %2015 = vrot.lane.b32.xlu0 %v1974, 3
        %v2016 = vpop.permute.xlu0 %2015
        %2017 = vrot.lane.b32.xlu0 %v1986, 3
        %v2018 = vpop.permute.xlu0 %2017
        %v2019 = vrot.slane %v1731, 1
        %v2020 = vrot.slane %v1779, 1
        %v2021 = vsel %vm1470, %v2019, %v2020
        %v2022 = vrot.slane %v1732, 1
        %v2023 = vrot.slane %v1780, 1
        %v2024 = vsel %vm1470, %v2022, %v2023
        %v2025 = vrot.slane %v1733, 1
        %v2026 = vrot.slane %v1781, 1
        %v2027 = vsel %vm1470, %v2025, %v2026
        %v2028 = vrot.slane %v1734, 1
        %v2029 = vrot.slane %v1782, 1
        %v2030 = vsel %vm1470, %v2028, %v2029
        %v2031 = vrot.slane %v1735, 1
        %v2032 = vrot.slane %v1783, 1
        %v2033 = vsel %vm1470, %v2031, %v2032
        %v2034 = vrot.slane %v1736, 1
        %v2035 = vrot.slane %v1784, 1
        %v2036 = vsel %vm1470, %v2034, %v2035
        %v2037 = vrot.slane %v1737, 1
        %v2038 = vrot.slane %v1785, 1
        %v2039 = vsel %vm1470, %v2037, %v2038
        %v2040 = vrot.slane %v1738, 1
        %v2041 = vrot.slane %v1786, 1
        %v2042 = vsel %vm1470, %v2040, %v2041
        %v2043 = vrot.slane %v1739, 1
        %v2044 = vrot.slane %v1787, 1
        %v2045 = vsel %vm1470, %v2043, %v2044
        %v2046 = vrot.slane %v1740, 1
        %v2047 = vrot.slane %v1788, 1
        %v2048 = vsel %vm1470, %v2046, %v2047
        %v2049 = vrot.slane %v1741, 1
        %v2050 = vrot.slane %v1789, 1
        %v2051 = vsel %vm1470, %v2049, %v2050
        %v2052 = vrot.slane %v1742, 1
        %v2053 = vrot.slane %v1790, 1
        %v2054 = vsel %vm1470, %v2052, %v2053
        %v2055 = vrot.slane %v1743, 1
        %v2056 = vrot.slane %v1791, 1
        %v2057 = vsel %vm1470, %v2055, %v2056
        %v2058 = vrot.slane %v1744, 1
        %v2059 = vrot.slane %v1792, 1
        %v2060 = vsel %vm1470, %v2058, %v2059
        %v2061 = vrot.slane %v1745, 1
        %v2062 = vrot.slane %v1793, 1
        %v2063 = vsel %vm1470, %v2061, %v2062
        %v2064 = vrot.slane %v1746, 1
        %v2065 = vrot.slane %v1794, 1
        %v2066 = vsel %vm1470, %v2064, %v2065
        %2067 = vrot.lane.b32.xlu0 %v2021, 6
        %v2068 = vpop.permute.xlu0 %2067
        %2069 = vrot.lane.b32.xlu0 %v2024, 6
        %v2070 = vpop.permute.xlu0 %2069
        %2071 = vrot.lane.b32.xlu0 %v2027, 6
        %v2072 = vpop.permute.xlu0 %2071
        %2073 = vrot.lane.b32.xlu0 %v2030, 6
        %v2074 = vpop.permute.xlu0 %2073
        %2075 = vrot.lane.b32.xlu0 %v2033, 6
        %v2076 = vpop.permute.xlu0 %2075
        %2077 = vrot.lane.b32.xlu0 %v2036, 6
        %v2078 = vpop.permute.xlu0 %2077
        %2079 = vrot.lane.b32.xlu0 %v2039, 6
        %v2080 = vpop.permute.xlu0 %2079
        %2081 = vrot.lane.b32.xlu0 %v2042, 6
        %v2082 = vpop.permute.xlu0 %2081
        %2083 = vrot.lane.b32.xlu0 %v2045, 6
        %v2084 = vpop.permute.xlu0 %2083
        %2085 = vrot.lane.b32.xlu0 %v2048, 6
        %v2086 = vpop.permute.xlu0 %2085
        %2087 = vrot.lane.b32.xlu0 %v2051, 6
        %v2088 = vpop.permute.xlu0 %2087
        %2089 = vrot.lane.b32.xlu0 %v2054, 6
        %v2090 = vpop.permute.xlu0 %2089
        %2091 = vrot.lane.b32.xlu0 %v2057, 6
        %v2092 = vpop.permute.xlu0 %2091
        %2093 = vrot.lane.b32.xlu0 %v2060, 6
        %v2094 = vpop.permute.xlu0 %2093
        %2095 = vrot.lane.b32.xlu0 %v2063, 6
        %v2096 = vpop.permute.xlu0 %2095
        %2097 = vrot.lane.b32.xlu0 %v2066, 6
        %v2098 = vpop.permute.xlu0 %2097
        %v2100 = vsel %vm1551, %v1731, %v1988
        %v2102 = vsel %vm1551, %v1732, %v1990
        %v2104 = vsel %vm1551, %v1733, %v1992
        %v2106 = vsel %vm1551, %v1734, %v1994
        %v2108 = vsel %vm1551, %v1735, %v1996
        %v2110 = vsel %vm1551, %v1736, %v1998
        %v2112 = vsel %vm1551, %v1737, %v2000
        %v2114 = vsel %vm1551, %v1738, %v2002
        %v2116 = vsel %vm1551, %v1739, %v2004
        %v2118 = vsel %vm1551, %v1740, %v2006
        %v2120 = vsel %vm1551, %v1741, %v2008
        %v2122 = vsel %vm1551, %v1742, %v2010
        %v2124 = vsel %vm1551, %v1743, %v2012
        %v2126 = vsel %vm1551, %v1744, %v2014
        %v2128 = vsel %vm1551, %v1745, %v2016
        %v2130 = vsel %vm1551, %v1746, %v2018
        %v2132 = vsel %vm1584, %v2100, %v2068
        %v2134 = vsel %vm1584, %v2102, %v2070
        %v2136 = vsel %vm1584, %v2104, %v2072
        %v2138 = vsel %vm1584, %v2106, %v2074
        %v2140 = vsel %vm1584, %v2108, %v2076
        %v2142 = vsel %vm1584, %v2110, %v2078
        %v2144 = vsel %vm1584, %v2112, %v2080
        %v2146 = vsel %vm1584, %v2114, %v2082
        %v2148 = vsel %vm1584, %v2116, %v2084
        %v2150 = vsel %vm1584, %v2118, %v2086
        %v2152 = vsel %vm1584, %v2120, %v2088
        %v2154 = vsel %vm1584, %v2122, %v2090
        %v2156 = vsel %vm1584, %v2124, %v2092
        %v2158 = vsel %vm1584, %v2126, %v2094
        %v2160 = vsel %vm1584, %v2128, %v2096
        %v2162 = vsel %vm1584, %v2130, %v2098
        %s2163 = scalar_lea.vmem %s3, 8
        %v2164 = vld [vmem:[%s2163] sm:$0xf]
        %v2165 = vld [vmem:[%s2163 + $0x4] sm:$0x1]
        %v2168 = vunpack.c.l.b16 %v2164
        %v2169 = vunpack.c.l.b16 %v2165
        %v2170 = vpack.c.b16 %v2169, %v2168
        %vm2171 = vcmask 72704
        %v2172 = vsel %vm2171, %v2132, 0
        %v2174 = vsel %vm2171, %v2134, 0
        %v2176 = vsel %vm2171, %v2136, 0
        %v2178 = vsel %vm2171, %v2138, 0
        %v2180 = vsel %vm2171, %v2140, 0
        %v2182 = vsel %vm2171, %v2142, 0
        %v2184 = vsel %vm2171, %v2144, 0
        %v2186 = vsel %vm2171, %v2146, 0
        %v2188 = vsel %vm2171, %v2148, 0
        %v2190 = vsel %vm2171, %v2150, 0
        %v2192 = vsel %vm2171, %v2152, 0
        %v2194 = vsel %vm2171, %v2154, 0
        %v2196 = vsel %vm2171, %v2156, 0
        %v2198 = vsel %vm2171, %v2158, 0
        %v2200 = vsel %vm2171, %v2160, 0
        %v2202 = vsel %vm2171, %v2162, 0
        %vm2204 = vcmask 1043456
        %vm2205 = vcmask 1044480
        %v2206 = vsel %vm2204, 4294967295, 65535
        %v2207 = vsel %vm2205, %v2206, 0
        %v2209 = vand.u32 %v2170, %v2207
        %2211 = vmatprep.subr.bf16.mxu0 0
        %2212 = vmatpush1.bf16.msra.mxu0 %v2209
        %2213 = vmatprep.subr.bf16.mxu0 0
        %2214 = vmatpush1.bf16.msra.mxu0 0
        %2215 = vmatprep.subr.bf16.mxu0 0
        %2216 = vmatpush1.bf16.msra.mxu0 0
        %2217 = vmatprep.subr.bf16.mxu0 0
        %2218 = vmatpush1.bf16.msra.mxu0 0
        %2219 = vmatprep.subr.bf16.mxu0 0
        %2220 = vmatpush1.bf16.msra.mxu0 0
        %2221 = vmatprep.subr.bf16.mxu0 0
        %2222 = vmatpush1.bf16.msra.mxu0 0
        %2223 = vmatprep.subr.bf16.mxu0 0
        %2224 = vmatpush1.bf16.msra.mxu0 0
        %2225 = vmatprep.subr.bf16.mxu0 0
        %2226 = vmatpush1.bf16.msra.mxu0 0
        %2227 = vmatprep.subr.bf16.mxu0 0
        %2228 = vmatpush1.bf16.msra.mxu0 0
        %2229 = vmatprep.subr.bf16.mxu0 0
        %2230 = vmatpush1.bf16.msra.mxu0 0
        %2231 = vmatprep.subr.bf16.mxu0 0
        %2232 = vmatpush1.bf16.msra.mxu0 0
        %2233 = vmatprep.subr.bf16.mxu0 0
        %2234 = vmatpush1.bf16.msra.mxu0 0
        %2235 = vmatprep.subr.bf16.mxu0 0
        %2236 = vmatpush1.bf16.msra.mxu0 0
        %2237 = vmatprep.subr.bf16.mxu0 0
        %2238 = vmatpush1.bf16.msra.mxu0 0
        %2239 = vmatprep.subr.bf16.mxu0 0
        %2240 = vmatpush1.bf16.msra.mxu0 0
        %2241 = vmatprep.subr.bf16.mxu0 0
        %2242 = vmatpush1.bf16.msra.mxu0 0
        %2243 = vmatprep.mubr.bf16.mxu0 0
        %2244 = vmatmul.mubr.bf16.gmra.mrb[0].mxu0 %v2172
        %v2245 = vpop.f32.mrb[0].mxu0
        %v2246 = vadd.f32 0.0, %v2245
        %v2247 = vpop.f32.mrb[0].mxu0
        %v2248 = vpop.f32.mrb[0].mxu0
        %v2249 = vadd.f32 0.0, %v2248
        %v2250 = vpop.f32.mrb[0].mxu0
        %2251 = vmatprep.mubr.bf16.mxu0 0
        %2252 = vmatmul.mubr.bf16.gmra.mrb[0].mxu0 %v2174
        %v2253 = vpop.f32.mrb[0].mxu0
        %v2254 = vadd.f32 0.0, %v2253
        %v2255 = vpop.f32.mrb[0].mxu0
        %v2256 = vpop.f32.mrb[0].mxu0
        %v2257 = vadd.f32 0.0, %v2256
        %v2258 = vpop.f32.mrb[0].mxu0
        %2259 = vmatprep.mubr.bf16.mxu0 0
        %2260 = vmatmul.mubr.bf16.gmra.mrb[0].mxu0 %v2176
        %v2261 = vpop.f32.mrb[0].mxu0
        %v2262 = vadd.f32 0.0, %v2261
        %v2263 = vpop.f32.mrb[0].mxu0
        %v2264 = vpop.f32.mrb[0].mxu0
        %v2265 = vadd.f32 0.0, %v2264
        %v2266 = vpop.f32.mrb[0].mxu0
        %2267 = vmatprep.mubr.bf16.mxu0 0
        %2268 = vmatmul.mubr.bf16.gmra.mrb[0].mxu0 %v2178
        %v2269 = vpop.f32.mrb[0].mxu0
        %v2270 = vadd.f32 0.0, %v2269
        %v2271 = vpop.f32.mrb[0].mxu0
        %v2272 = vpop.f32.mrb[0].mxu0
        %v2273 = vadd.f32 0.0, %v2272
        %v2274 = vpop.f32.mrb[0].mxu0
        %2275 = vmatprep.mubr.bf16.mxu0 0
        %2276 = vmatmul.mubr.bf16.gmra.mrb[0].mxu0 %v2180
        %v2277 = vpop.f32.mrb[0].mxu0
        %v2278 = vadd.f32 0.0, %v2277
        %v2279 = vpop.f32.mrb[0].mxu0
        %v2280 = vpop.f32.mrb[0].mxu0
        %v2281 = vadd.f32 0.0, %v2280
        %v2282 = vpop.f32.mrb[0].mxu0
        %2283 = vmatprep.mubr.bf16.mxu0 0
        %2284 = vmatmul.mubr.bf16.gmra.mrb[0].mxu0 %v2182
        %v2285 = vpop.f32.mrb[0].mxu0
        %v2286 = vadd.f32 0.0, %v2285
        %v2287 = vpop.f32.mrb[0].mxu0
        %v2288 = vpop.f32.mrb[0].mxu0
        %v2289 = vadd.f32 0.0, %v2288
        %v2290 = vpop.f32.mrb[0].mxu0
        %2291 = vmatprep.mubr.bf16.mxu0 0
        %2292 = vmatmul.mubr.bf16.gmra.mrb[0].mxu0 %v2184
        %v2293 = vpop.f32.mrb[0].mxu0
        %v2294 = vadd.f32 0.0, %v2293
        %v2295 = vpop.f32.mrb[0].mxu0
        %v2296 = vpop.f32.mrb[0].mxu0
        %v2297 = vadd.f32 0.0, %v2296
        %v2298 = vpop.f32.mrb[0].mxu0
        %2299 = vmatprep.mubr.bf16.mxu0 0
        %2300 = vmatmul.mubr.bf16.gmra.mrb[0].mxu0 %v2186
        %v2301 = vpop.f32.mrb[0].mxu0
        %v2302 = vadd.f32 0.0, %v2301
        %v2303 = vpop.f32.mrb[0].mxu0
        %v2304 = vpop.f32.mrb[0].mxu0
        %v2305 = vadd.f32 0.0, %v2304
        %v2306 = vpop.f32.mrb[0].mxu0
        %2307 = vmatprep.mubr.bf16.mxu0 0
        %2308 = vmatmul.mubr.bf16.gmra.mrb[0].mxu0 %v2188
        %v2309 = vpop.f32.mrb[0].mxu0
        %v2310 = vadd.f32 0.0, %v2309
        %v2311 = vpop.f32.mrb[0].mxu0
        %v2312 = vpop.f32.mrb[0].mxu0
        %v2313 = vadd.f32 0.0, %v2312
        %v2314 = vpop.f32.mrb[0].mxu0
        %2315 = vmatprep.mubr.bf16.mxu0 0
        %2316 = vmatmul.mubr.bf16.gmra.mrb[0].mxu0 %v2190
        %v2317 = vpop.f32.mrb[0].mxu0
        %v2318 = vadd.f32 0.0, %v2317
        %v2319 = vpop.f32.mrb[0].mxu0
        %v2320 = vpop.f32.mrb[0].mxu0
        %v2321 = vadd.f32 0.0, %v2320
        %v2322 = vpop.f32.mrb[0].mxu0
        %2323 = vmatprep.mubr.bf16.mxu0 0
        %2324 = vmatmul.mubr.bf16.gmra.mrb[0].mxu0 %v2192
        %v2325 = vpop.f32.mrb[0].mxu0
        %v2326 = vadd.f32 0.0, %v2325
        %v2327 = vpop.f32.mrb[0].mxu0
        %v2328 = vpop.f32.mrb[0].mxu0
        %v2329 = vadd.f32 0.0, %v2328
        %v2330 = vpop.f32.mrb[0].mxu0
        %2331 = vmatprep.mubr.bf16.mxu0 0
        %2332 = vmatmul.mubr.bf16.gmra.mrb[0].mxu0 %v2194
        %v2333 = vpop.f32.mrb[0].mxu0
        %v2334 = vadd.f32 0.0, %v2333
        %v2335 = vpop.f32.mrb[0].mxu0
        %v2336 = vpop.f32.mrb[0].mxu0
        %v2337 = vadd.f32 0.0, %v2336
        %v2338 = vpop.f32.mrb[0].mxu0
        %2339 = vmatprep.mubr.bf16.mxu0 0
        %2340 = vmatmul.mubr.bf16.gmra.mrb[0].mxu0 %v2196
        %v2341 = vpop.f32.mrb[0].mxu0
        %v2342 = vadd.f32 0.0, %v2341
        %v2343 = vpop.f32.mrb[0].mxu0
        %v2344 = vpop.f32.mrb[0].mxu0
        %v2345 = vadd.f32 0.0, %v2344
        %v2346 = vpop.f32.mrb[0].mxu0
        %2347 = vmatprep.mubr.bf16.mxu0 0
        %2348 = vmatmul.mubr.bf16.gmra.mrb[0].mxu0 %v2198
        %v2349 = vpop.f32.mrb[0].mxu0
        %v2350 = vadd.f32 0.0, %v2349
        %v2351 = vpop.f32.mrb[0].mxu0
        %v2352 = vpop.f32.mrb[0].mxu0
        %v2353 = vadd.f32 0.0, %v2352
        %v2354 = vpop.f32.mrb[0].mxu0
        %2355 = vmatprep.mubr.bf16.mxu0 0
        %2356 = vmatmul.mubr.bf16.gmra.mrb[0].mxu0 %v2200
        %v2357 = vpop.f32.mrb[0].mxu0
        %v2358 = vadd.f32 0.0, %v2357
        %v2359 = vpop.f32.mrb[0].mxu0
        %v2360 = vpop.f32.mrb[0].mxu0
        %v2361 = vadd.f32 0.0, %v2360
        %v2362 = vpop.f32.mrb[0].mxu0
        %2363 = vmatprep.mubr.bf16.mxu0 0
        %2364 = vmatmul.mubr.bf16.gmra.mrb[0].mxu0 %v2202
        %v2365 = vpop.f32.mrb[0].mxu0
        %v2366 = vadd.f32 0.0, %v2365
        %v2367 = vpop.f32.mrb[0].mxu0
        %v2368 = vpop.f32.mrb[0].mxu0
        %v2369 = vadd.f32 0.0, %v2368
        %v2370 = vpop.f32.mrb[0].mxu0
        %2371 = vdwg.mxu0
        %v2374 = vunpack.c.l.b16 %v1617
        %v2375 = vunpack.c.l.b16 %v1618
        %v2376 = vpack.c.b16 %v2375, %v2374
        %v2377 = vsel %vm2171, %v1586, 0
        %v2379 = vsel %vm2171, %v1588, 0
        %v2381 = vsel %vm2171, %v1590, 0
        %v2383 = vsel %vm2171, %v1592, 0
        %v2385 = vsel %vm2171, %v1594, 0
        %v2387 = vsel %vm2171, %v1596, 0
        %v2389 = vsel %vm2171, %v1598, 0
        %v2391 = vsel %vm2171, %v1600, 0
        %v2393 = vsel %vm2171, %v1602, 0
        %v2395 = vsel %vm2171, %v1604, 0
        %v2397 = vsel %vm2171, %v1606, 0
        %v2399 = vsel %vm2171, %v1608, 0
        %v2401 = vsel %vm2171, %v1610, 0
        %v2403 = vsel %vm2171, %v1612, 0
        %v2405 = vsel %vm2171, %v1614, 0
        %v2407 = vsel %vm2171, %v1616, 0
        %v2410 = vand.u32 %v2376, %v2207
        %2412 = vmatprep.subr.bf16.mxu0 0
        %2413 = vmatpush1.bf16.msra.mxu0 %v2410
        %2414 = vmatprep.subr.bf16.mxu0 0
        %2415 = vmatpush1.bf16.msra.mxu0 0
        %2416 = vmatprep.subr.bf16.mxu0 0
        %2417 = vmatpush1.bf16.msra.mxu0 0
        %2418 = vmatprep.subr.bf16.mxu0 0
        %2419 = vmatpush1.bf16.msra.mxu0 0
        %2420 = vmatprep.subr.bf16.mxu0 0
        %2421 = vmatpush1.bf16.msra.mxu0 0
        %2422 = vmatprep.subr.bf16.mxu0 0
        %2423 = vmatpush1.bf16.msra.mxu0 0
        %2424 = vmatprep.subr.bf16.mxu0 0
        %2425 = vmatpush1.bf16.msra.mxu0 0
        %2426 = vmatprep.subr.bf16.mxu0 0
        %2427 = vmatpush1.bf16.msra.mxu0 0
        %2428 = vmatprep.subr.bf16.mxu0 0
        %2429 = vmatpush1.bf16.msra.mxu0 0
        %2430 = vmatprep.subr.bf16.mxu0 0
        %2431 = vmatpush1.bf16.msra.mxu0 0
        %2432 = vmatprep.subr.bf16.mxu0 0
        %2433 = vmatpush1.bf16.msra.mxu0 0
        %2434 = vmatprep.subr.bf16.mxu0 0
        %2435 = vmatpush1.bf16.msra.mxu0 0
        %2436 = vmatprep.subr.bf16.mxu0 0
        %2437 = vmatpush1.bf16.msra.mxu0 0
        %2438 = vmatprep.subr.bf16.mxu0 0
        %2439 = vmatpush1.bf16.msra.mxu0 0
        %2440 = vmatprep.subr.bf16.mxu0 0
        %2441 = vmatpush1.bf16.msra.mxu0 0
        %2442 = vmatprep.subr.bf16.mxu0 0
        %2443 = vmatpush1.bf16.msra.mxu0 0
        %2444 = vmatprep.mubr.bf16.mxu0 0
        %2445 = vmatmul.mubr.bf16.gmra.mrb[0].mxu0 %v2377
        %v2446 = vpop.f32.mrb[0].mxu0
        %v2447 = vadd.f32 %v2246, %v2446
        %v2448 = vpop.f32.mrb[0].mxu0
        %v2449 = vpop.f32.mrb[0].mxu0
        %v2450 = vadd.f32 %v2249, %v2449
        %v2451 = vpop.f32.mrb[0].mxu0
        %2452 = vmatprep.mubr.bf16.mxu0 0
        %2453 = vmatmul.mubr.bf16.gmra.mrb[0].mxu0 %v2379
        %v2454 = vpop.f32.mrb[0].mxu0
        %v2455 = vadd.f32 %v2254, %v2454
        %v2456 = vpop.f32.mrb[0].mxu0
        %v2457 = vpop.f32.mrb[0].mxu0
        %v2458 = vadd.f32 %v2257, %v2457
        %v2459 = vpop.f32.mrb[0].mxu0
        %2460 = vmatprep.mubr.bf16.mxu0 0
        %2461 = vmatmul.mubr.bf16.gmra.mrb[0].mxu0 %v2381
        %v2462 = vpop.f32.mrb[0].mxu0
        %v2463 = vadd.f32 %v2262, %v2462
        %v2464 = vpop.f32.mrb[0].mxu0
        %v2465 = vpop.f32.mrb[0].mxu0
        %v2466 = vadd.f32 %v2265, %v2465
        %v2467 = vpop.f32.mrb[0].mxu0
        %2468 = vmatprep.mubr.bf16.mxu0 0
        %2469 = vmatmul.mubr.bf16.gmra.mrb[0].mxu0 %v2383
        %v2470 = vpop.f32.mrb[0].mxu0
        %v2471 = vadd.f32 %v2270, %v2470
        %v2472 = vpop.f32.mrb[0].mxu0
        %v2473 = vpop.f32.mrb[0].mxu0
        %v2474 = vadd.f32 %v2273, %v2473
        %v2475 = vpop.f32.mrb[0].mxu0
        %2476 = vmatprep.mubr.bf16.mxu0 0
        %2477 = vmatmul.mubr.bf16.gmra.mrb[0].mxu0 %v2385
        %v2478 = vpop.f32.mrb[0].mxu0
        %v2479 = vadd.f32 %v2278, %v2478
        %v2480 = vpop.f32.mrb[0].mxu0
        %v2481 = vpop.f32.mrb[0].mxu0
        %v2482 = vadd.f32 %v2281, %v2481
        %v2483 = vpop.f32.mrb[0].mxu0
        %2484 = vmatprep.mubr.bf16.mxu0 0
        %2485 = vmatmul.mubr.bf16.gmra.mrb[0].mxu0 %v2387
        %v2486 = vpop.f32.mrb[0].mxu0
        %v2487 = vadd.f32 %v2286, %v2486
        %v2488 = vpop.f32.mrb[0].mxu0
        %v2489 = vpop.f32.mrb[0].mxu0
        %v2490 = vadd.f32 %v2289, %v2489
        %v2491 = vpop.f32.mrb[0].mxu0
        %2492 = vmatprep.mubr.bf16.mxu0 0
        %2493 = vmatmul.mubr.bf16.gmra.mrb[0].mxu0 %v2389
        %v2494 = vpop.f32.mrb[0].mxu0
        %v2495 = vadd.f32 %v2294, %v2494
        %v2496 = vpop.f32.mrb[0].mxu0
        %v2497 = vpop.f32.mrb[0].mxu0
        %v2498 = vadd.f32 %v2297, %v2497
        %v2499 = vpop.f32.mrb[0].mxu0
        %2500 = vmatprep.mubr.bf16.mxu0 0
        %2501 = vmatmul.mubr.bf16.gmra.mrb[0].mxu0 %v2391
        %v2502 = vpop.f32.mrb[0].mxu0
        %v2503 = vadd.f32 %v2302, %v2502
        %v2504 = vpop.f32.mrb[0].mxu0
        %v2505 = vpop.f32.mrb[0].mxu0
        %v2506 = vadd.f32 %v2305, %v2505
        %v2507 = vpop.f32.mrb[0].mxu0
        %2508 = vmatprep.mubr.bf16.mxu0 0
        %2509 = vmatmul.mubr.bf16.gmra.mrb[0].mxu0 %v2393
        %v2510 = vpop.f32.mrb[0].mxu0
        %v2511 = vadd.f32 %v2310, %v2510
        %v2512 = vpop.f32.mrb[0].mxu0
        %v2513 = vpop.f32.mrb[0].mxu0
        %v2514 = vadd.f32 %v2313, %v2513
        %v2515 = vpop.f32.mrb[0].mxu0
        %2516 = vmatprep.mubr.bf16.mxu0 0
        %2517 = vmatmul.mubr.bf16.gmra.mrb[0].mxu0 %v2395
        %v2518 = vpop.f32.mrb[0].mxu0
        %v2519 = vadd.f32 %v2318, %v2518
        %v2520 = vpop.f32.mrb[0].mxu0
        %v2521 = vpop.f32.mrb[0].mxu0
        %v2522 = vadd.f32 %v2321, %v2521
        %v2523 = vpop.f32.mrb[0].mxu0
        %2524 = vmatprep.mubr.bf16.mxu0 0
        %2525 = vmatmul.mubr.bf16.gmra.mrb[0].mxu0 %v2397
        %v2526 = vpop.f32.mrb[0].mxu0
        %v2527 = vadd.f32 %v2326, %v2526
        %v2528 = vpop.f32.mrb[0].mxu0
        %v2529 = vpop.f32.mrb[0].mxu0
        %v2530 = vadd.f32 %v2329, %v2529
        %v2531 = vpop.f32.mrb[0].mxu0
        %2532 = vmatprep.mubr.bf16.mxu0 0
        %2533 = vmatmul.mubr.bf16.gmra.mrb[0].mxu0 %v2399
        %v2534 = vpop.f32.mrb[0].mxu0
        %v2535 = vadd.f32 %v2334, %v2534
        %v2536 = vpop.f32.mrb[0].mxu0
        %v2537 = vpop.f32.mrb[0].mxu0
        %v2538 = vadd.f32 %v2337, %v2537
        %v2539 = vpop.f32.mrb[0].mxu0
        %2540 = vmatprep.mubr.bf16.mxu0 0
        %2541 = vmatmul.mubr.bf16.gmra.mrb[0].mxu0 %v2401
        %v2542 = vpop.f32.mrb[0].mxu0
        %v2543 = vadd.f32 %v2342, %v2542
        %v2544 = vpop.f32.mrb[0].mxu0
        %v2545 = vpop.f32.mrb[0].mxu0
        %v2546 = vadd.f32 %v2345, %v2545
        %v2547 = vpop.f32.mrb[0].mxu0
        %2548 = vmatprep.mubr.bf16.mxu0 0
        %2549 = vmatmul.mubr.bf16.gmra.mrb[0].mxu0 %v2403
        %v2550 = vpop.f32.mrb[0].mxu0
        %v2551 = vadd.f32 %v2350, %v2550
        %v2552 = vpop.f32.mrb[0].mxu0
        %v2553 = vpop.f32.mrb[0].mxu0
        %v2554 = vadd.f32 %v2353, %v2553
        %v2555 = vpop.f32.mrb[0].mxu0
        %2556 = vmatprep.mubr.bf16.mxu0 0
        %2557 = vmatmul.mubr.bf16.gmra.mrb[0].mxu0 %v2405
        %v2558 = vpop.f32.mrb[0].mxu0
        %v2559 = vadd.f32 %v2358, %v2558
        %v2560 = vpop.f32.mrb[0].mxu0
        %v2561 = vpop.f32.mrb[0].mxu0
        %v2562 = vadd.f32 %v2361, %v2561
        %v2563 = vpop.f32.mrb[0].mxu0
        %2564 = vmatprep.mubr.bf16.mxu0 0
        %2565 = vmatmul.mubr.bf16.gmra.mrb[0].mxu0 %v2407
        %v2566 = vpop.f32.mrb[0].mxu0
        %v2567 = vadd.f32 %v2366, %v2566
        %v2568 = vpop.f32.mrb[0].mxu0
        %v2569 = vpop.f32.mrb[0].mxu0
        %v2570 = vadd.f32 %v2369, %v2569
        %v2571 = vpop.f32.mrb[0].mxu0
        %2572 = vdwg.mxu0
        %s2573 = scalar_lea.vmem [#allocation2], 24
        %v2574 = vld [vmem:[%s2573] sm:$0xf]
        %v2575 = vld [vmem:[%s2573 + $0x4] sm:$0xf]
        %v2576 = vld [vmem:[%s2573 + $0x8] sm:$0x1]
        %v2577 = vld [vmem:[%s2573 + $0xc] sm:$0xf]
        %v2578 = vld [vmem:[%s2573 + $0x10] sm:$0xf]
        %v2579 = vld [vmem:[%s2573 + $0x14] sm:$0x1]
        %v2580 = vld [vmem:[%s2573 + $0x18] sm:$0xf]
        %v2581 = vld [vmem:[%s2573 + $0x1c] sm:$0xf]
        %v2582 = vld [vmem:[%s2573 + $0x20] sm:$0x1]
        %v2583 = vld [vmem:[%s2573 + $0x24] sm:$0xf]
        %v2584 = vld [vmem:[%s2573 + $0x28] sm:$0xf]
        %v2585 = vld [vmem:[%s2573 + $0x2c] sm:$0x1]
        %v2586 = vld [vmem:[%s2573 + $0x30] sm:$0xf]
        %v2587 = vld [vmem:[%s2573 + $0x34] sm:$0xf]
        %v2588 = vld [vmem:[%s2573 + $0x38] sm:$0x1]
        %v2589 = vld [vmem:[%s2573 + $0x3c] sm:$0xf]
        %v2590 = vld [vmem:[%s2573 + $0x40] sm:$0xf]
        %v2591 = vld [vmem:[%s2573 + $0x44] sm:$0x1]
        %v2592 = vld [vmem:[%s2573 + $0x48] sm:$0xf]
        %v2593 = vld [vmem:[%s2573 + $0x4c] sm:$0xf]
        %v2594 = vld [vmem:[%s2573 + $0x50] sm:$0x1]
        %v2595 = vld [vmem:[%s2573 + $0x54] sm:$0xf]
        %v2596 = vld [vmem:[%s2573 + $0x58] sm:$0xf]
        %v2597 = vld [vmem:[%s2573 + $0x5c] sm:$0x1]
        %v2598 = vld [vmem:[%s2573 + $0x60] sm:$0xf]
        %v2599 = vld [vmem:[%s2573 + $0x64] sm:$0xf]
        %v2600 = vld [vmem:[%s2573 + $0x68] sm:$0x1]
        %v2601 = vld [vmem:[%s2573 + $0x6c] sm:$0xf]
        %v2602 = vld [vmem:[%s2573 + $0x70] sm:$0xf]
        %v2603 = vld [vmem:[%s2573 + $0x74] sm:$0x1]
        %v2604 = vld [vmem:[%s2573 + $0x78] sm:$0xf]
        %v2605 = vld [vmem:[%s2573 + $0x7c] sm:$0xf]
        %v2606 = vld [vmem:[%s2573 + $0x80] sm:$0x1]
        %v2607 = vld [vmem:[%s2573 + $0x84] sm:$0xf]
        %v2608 = vld [vmem:[%s2573 + $0x88] sm:$0xf]
        %v2609 = vld [vmem:[%s2573 + $0x8c] sm:$0x1]
        %v2610 = vld [vmem:[%s2573 + $0x90] sm:$0xf]
        %v2611 = vld [vmem:[%s2573 + $0x94] sm:$0xf]
        %v2612 = vld [vmem:[%s2573 + $0x98] sm:$0x1]
        %v2613 = vld [vmem:[%s2573 + $0x9c] sm:$0xf]
        %v2614 = vld [vmem:[%s2573 + $0xa0] sm:$0xf]
        %v2615 = vld [vmem:[%s2573 + $0xa4] sm:$0x1]
        %v2616 = vld [vmem:[%s2573 + $0xa8] sm:$0xf]
        %v2617 = vld [vmem:[%s2573 + $0xac] sm:$0xf]
        %v2618 = vld [vmem:[%s2573 + $0xb0] sm:$0x1]
        %v2619 = vld [vmem:[%s2573 + $0xb4] sm:$0xf]
        %v2620 = vld [vmem:[%s2573 + $0xb8] sm:$0xf]
        %v2621 = vld [vmem:[%s2573 + $0xbc] sm:$0x1]
        %v2654 = vunpack.c.l.b16 %v2574
        %v2655 = vunpack.c.l.b16 %v2575
        %v2656 = vunpack.c.l.b16 %v2577
        %v2657 = vunpack.c.l.b16 %v2578
        %v2658 = vunpack.c.l.b16 %v2580
        %v2659 = vunpack.c.l.b16 %v2581
        %v2660 = vunpack.c.l.b16 %v2583
        %v2661 = vunpack.c.l.b16 %v2584
        %v2662 = vunpack.c.l.b16 %v2586
        %v2663 = vunpack.c.l.b16 %v2587
        %v2664 = vunpack.c.l.b16 %v2589
        %v2665 = vunpack.c.l.b16 %v2590
        %v2666 = vunpack.c.l.b16 %v2592
        %v2667 = vunpack.c.l.b16 %v2593
        %v2668 = vunpack.c.l.b16 %v2595
        %v2669 = vunpack.c.l.b16 %v2596
        %v2670 = vunpack.c.l.b16 %v2598
        %v2671 = vunpack.c.l.b16 %v2599
        %v2672 = vunpack.c.l.b16 %v2601
        %v2673 = vunpack.c.l.b16 %v2602
        %v2674 = vunpack.c.l.b16 %v2604
        %v2675 = vunpack.c.l.b16 %v2605
        %v2676 = vunpack.c.l.b16 %v2607
        %v2677 = vunpack.c.l.b16 %v2608
        %v2678 = vunpack.c.l.b16 %v2610
        %v2679 = vunpack.c.l.b16 %v2611
        %v2680 = vunpack.c.l.b16 %v2613
        %v2681 = vunpack.c.l.b16 %v2614
        %v2682 = vunpack.c.l.b16 %v2616
        %v2683 = vunpack.c.l.b16 %v2617
        %v2684 = vunpack.c.l.b16 %v2619
        %v2685 = vunpack.c.l.b16 %v2620
        %v2686 = vpack.c.b16 %v2655, %v2654
        %v2687 = vpack.c.b16 %v2657, %v2656
        %v2688 = vpack.c.b16 %v2659, %v2658
        %v2689 = vpack.c.b16 %v2661, %v2660
        %v2690 = vpack.c.b16 %v2663, %v2662
        %v2691 = vpack.c.b16 %v2665, %v2664
        %v2692 = vpack.c.b16 %v2667, %v2666
        %v2693 = vpack.c.b16 %v2669, %v2668
        %v2694 = vpack.c.b16 %v2671, %v2670
        %v2695 = vpack.c.b16 %v2673, %v2672
        %v2696 = vpack.c.b16 %v2675, %v2674
        %v2697 = vpack.c.b16 %v2677, %v2676
        %v2698 = vpack.c.b16 %v2679, %v2678
        %v2699 = vpack.c.b16 %v2681, %v2680
        %v2700 = vpack.c.b16 %v2683, %v2682
        %v2701 = vpack.c.b16 %v2685, %v2684
        %v2718 = vunpack.c.l.b16 %v2576
        %v2719 = vunpack.c.l.b16 %v2579
        %v2720 = vunpack.c.l.b16 %v2582
        %v2721 = vunpack.c.l.b16 %v2585
        %v2722 = vunpack.c.l.b16 %v2588
        %v2723 = vunpack.c.l.b16 %v2591
        %v2724 = vunpack.c.l.b16 %v2594
        %v2725 = vunpack.c.l.b16 %v2597
        %v2726 = vunpack.c.l.b16 %v2600
        %v2727 = vunpack.c.l.b16 %v2603
        %v2728 = vunpack.c.l.b16 %v2606
        %v2729 = vunpack.c.l.b16 %v2609
        %v2730 = vunpack.c.l.b16 %v2612
        %v2731 = vunpack.c.l.b16 %v2615
        %v2732 = vunpack.c.l.b16 %v2618
        %v2733 = vunpack.c.l.b16 %v2621
        %v2734 = vpack.c.b16 %v2718, %v2718
        %v2735 = vpack.c.b16 %v2719, %v2719
        %v2736 = vpack.c.b16 %v2720, %v2720
        %v2737 = vpack.c.b16 %v2721, %v2721
        %v2738 = vpack.c.b16 %v2722, %v2722
        %v2739 = vpack.c.b16 %v2723, %v2723
        %v2740 = vpack.c.b16 %v2724, %v2724
        %v2741 = vpack.c.b16 %v2725, %v2725
        %v2742 = vpack.c.b16 %v2726, %v2726
        %v2743 = vpack.c.b16 %v2727, %v2727
        %v2744 = vpack.c.b16 %v2728, %v2728
        %v2745 = vpack.c.b16 %v2729, %v2729
        %v2746 = vpack.c.b16 %v2730, %v2730
        %v2747 = vpack.c.b16 %v2731, %v2731
        %v2748 = vpack.c.b16 %v2732, %v2732
        %v2749 = vpack.c.b16 %v2733, %v2733
        %v2751 = vshrl.u32 %v2686, 16
        %v2753 = vshll.u32 %v2686, 16
        %v2755 = vrot.slane %v2753, 1
        %v2756 = vor.u32 %v2751, %v2755
        %v2758 = vshll.u32 %v2734, 16
        %v2760 = vrot.slane %v2758, 1
        %v2761 = vsel %vm1245, %v2756, %v2760
        %v2763 = vshrl.u32 %v2687, 16
        %v2765 = vshll.u32 %v2687, 16
        %v2767 = vrot.slane %v2765, 1
        %v2768 = vor.u32 %v2763, %v2767
        %v2770 = vshll.u32 %v2735, 16
        %v2772 = vrot.slane %v2770, 1
        %v2773 = vsel %vm1245, %v2768, %v2772
        %v2775 = vshrl.u32 %v2688, 16
        %v2777 = vshll.u32 %v2688, 16
        %v2779 = vrot.slane %v2777, 1
        %v2780 = vor.u32 %v2775, %v2779
        %v2782 = vshll.u32 %v2736, 16
        %v2784 = vrot.slane %v2782, 1
        %v2785 = vsel %vm1245, %v2780, %v2784
        %v2787 = vshrl.u32 %v2689, 16
        %v2789 = vshll.u32 %v2689, 16
        %v2791 = vrot.slane %v2789, 1
        %v2792 = vor.u32 %v2787, %v2791
        %v2794 = vshll.u32 %v2737, 16
        %v2796 = vrot.slane %v2794, 1
        %v2797 = vsel %vm1245, %v2792, %v2796
        %v2799 = vshrl.u32 %v2690, 16
        %v2801 = vshll.u32 %v2690, 16
        %v2803 = vrot.slane %v2801, 1
        %v2804 = vor.u32 %v2799, %v2803
        %v2806 = vshll.u32 %v2738, 16
        %v2808 = vrot.slane %v2806, 1
        %v2809 = vsel %vm1245, %v2804, %v2808
        %v2811 = vshrl.u32 %v2691, 16
        %v2813 = vshll.u32 %v2691, 16
        %v2815 = vrot.slane %v2813, 1
        %v2816 = vor.u32 %v2811, %v2815
        %v2818 = vshll.u32 %v2739, 16
        %v2820 = vrot.slane %v2818, 1
        %v2821 = vsel %vm1245, %v2816, %v2820
        %v2823 = vshrl.u32 %v2692, 16
        %v2825 = vshll.u32 %v2692, 16
        %v2827 = vrot.slane %v2825, 1
        %v2828 = vor.u32 %v2823, %v2827
        %v2830 = vshll.u32 %v2740, 16
        %v2832 = vrot.slane %v2830, 1
        %v2833 = vsel %vm1245, %v2828, %v2832
        %v2835 = vshrl.u32 %v2693, 16
        %v2837 = vshll.u32 %v2693, 16
        %v2839 = vrot.slane %v2837, 1
        %v2840 = vor.u32 %v2835, %v2839
        %v2842 = vshll.u32 %v2741, 16
        %v2844 = vrot.slane %v2842, 1
        %v2845 = vsel %vm1245, %v2840, %v2844
        %v2847 = vshrl.u32 %v2694, 16
        %v2849 = vshll.u32 %v2694, 16
        %v2851 = vrot.slane %v2849, 1
        %v2852 = vor.u32 %v2847, %v2851
        %v2854 = vshll.u32 %v2742, 16
        %v2856 = vrot.slane %v2854, 1
        %v2857 = vsel %vm1245, %v2852, %v2856
        %v2859 = vshrl.u32 %v2695, 16
        %v2861 = vshll.u32 %v2695, 16
        %v2863 = vrot.slane %v2861, 1
        %v2864 = vor.u32 %v2859, %v2863
        %v2866 = vshll.u32 %v2743, 16
        %v2868 = vrot.slane %v2866, 1
        %v2869 = vsel %vm1245, %v2864, %v2868
        %v2871 = vshrl.u32 %v2696, 16
        %v2873 = vshll.u32 %v2696, 16
        %v2875 = vrot.slane %v2873, 1
        %v2876 = vor.u32 %v2871, %v2875
        %v2878 = vshll.u32 %v2744, 16
        %v2880 = vrot.slane %v2878, 1
        %v2881 = vsel %vm1245, %v2876, %v2880
        %v2883 = vshrl.u32 %v2697, 16
        %v2885 = vshll.u32 %v2697, 16
        %v2887 = vrot.slane %v2885, 1
        %v2888 = vor.u32 %v2883, %v2887
        %v2890 = vshll.u32 %v2745, 16
        %v2892 = vrot.slane %v2890, 1
        %v2893 = vsel %vm1245, %v2888, %v2892
        %v2895 = vshrl.u32 %v2698, 16
        %v2897 = vshll.u32 %v2698, 16
        %v2899 = vrot.slane %v2897, 1
        %v2900 = vor.u32 %v2895, %v2899
        %v2902 = vshll.u32 %v2746, 16
        %v2904 = vrot.slane %v2902, 1
        %v2905 = vsel %vm1245, %v2900, %v2904
        %v2907 = vshrl.u32 %v2699, 16
        %v2909 = vshll.u32 %v2699, 16
        %v2911 = vrot.slane %v2909, 1
        %v2912 = vor.u32 %v2907, %v2911
        %v2914 = vshll.u32 %v2747, 16
        %v2916 = vrot.slane %v2914, 1
        %v2917 = vsel %vm1245, %v2912, %v2916
        %v2919 = vshrl.u32 %v2700, 16
        %v2921 = vshll.u32 %v2700, 16
        %v2923 = vrot.slane %v2921, 1
        %v2924 = vor.u32 %v2919, %v2923
        %v2926 = vshll.u32 %v2748, 16
        %v2928 = vrot.slane %v2926, 1
        %v2929 = vsel %vm1245, %v2924, %v2928
        %v2931 = vshrl.u32 %v2701, 16
        %v2933 = vshll.u32 %v2701, 16
        %v2935 = vrot.slane %v2933, 1
        %v2936 = vor.u32 %v2931, %v2935
        %v2938 = vshll.u32 %v2749, 16
        %v2940 = vrot.slane %v2938, 1
        %v2941 = vsel %vm1245, %v2936, %v2940
        %2942 = vrot.lane.b32.xlu0 %v2761, 3
        %v2943 = vpop.permute.xlu0 %2942
        %2944 = vrot.lane.b32.xlu0 %v2773, 3
        %v2945 = vpop.permute.xlu0 %2944
        %2946 = vrot.lane.b32.xlu0 %v2785, 3
        %v2947 = vpop.permute.xlu0 %2946
        %2948 = vrot.lane.b32.xlu0 %v2797, 3
        %v2949 = vpop.permute.xlu0 %2948
        %2950 = vrot.lane.b32.xlu0 %v2809, 3
        %v2951 = vpop.permute.xlu0 %2950
        %2952 = vrot.lane.b32.xlu0 %v2821, 3
        %v2953 = vpop.permute.xlu0 %2952
        %2954 = vrot.lane.b32.xlu0 %v2833, 3
        %v2955 = vpop.permute.xlu0 %2954
        %2956 = vrot.lane.b32.xlu0 %v2845, 3
        %v2957 = vpop.permute.xlu0 %2956
        %2958 = vrot.lane.b32.xlu0 %v2857, 3
        %v2959 = vpop.permute.xlu0 %2958
        %2960 = vrot.lane.b32.xlu0 %v2869, 3
        %v2961 = vpop.permute.xlu0 %2960
        %2962 = vrot.lane.b32.xlu0 %v2881, 3
        %v2963 = vpop.permute.xlu0 %2962
        %2964 = vrot.lane.b32.xlu0 %v2893, 3
        %v2965 = vpop.permute.xlu0 %2964
        %2966 = vrot.lane.b32.xlu0 %v2905, 3
        %v2967 = vpop.permute.xlu0 %2966
        %2968 = vrot.lane.b32.xlu0 %v2917, 3
        %v2969 = vpop.permute.xlu0 %2968
        %2970 = vrot.lane.b32.xlu0 %v2929, 3
        %v2971 = vpop.permute.xlu0 %2970
        %2972 = vrot.lane.b32.xlu0 %v2941, 3
        %v2973 = vpop.permute.xlu0 %2972
        %v2974 = vrot.slane %v2686, 1
        %v2975 = vrot.slane %v2734, 1
        %v2976 = vsel %vm1470, %v2974, %v2975
        %v2977 = vrot.slane %v2687, 1
        %v2978 = vrot.slane %v2735, 1
        %v2979 = vsel %vm1470, %v2977, %v2978
        %v2980 = vrot.slane %v2688, 1
        %v2981 = vrot.slane %v2736, 1
        %v2982 = vsel %vm1470, %v2980, %v2981
        %v2983 = vrot.slane %v2689, 1
        %v2984 = vrot.slane %v2737, 1
        %v2985 = vsel %vm1470, %v2983, %v2984
        %v2986 = vrot.slane %v2690, 1
        %v2987 = vrot.slane %v2738, 1
        %v2988 = vsel %vm1470, %v2986, %v2987
        %v2989 = vrot.slane %v2691, 1
        %v2990 = vrot.slane %v2739, 1
        %v2991 = vsel %vm1470, %v2989, %v2990
        %v2992 = vrot.slane %v2692, 1
        %v2993 = vrot.slane %v2740, 1
        %v2994 = vsel %vm1470, %v2992, %v2993
        %v2995 = vrot.slane %v2693, 1
        %v2996 = vrot.slane %v2741, 1
        %v2997 = vsel %vm1470, %v2995, %v2996
        %v2998 = vrot.slane %v2694, 1
        %v2999 = vrot.slane %v2742, 1
        %v3000 = vsel %vm1470, %v2998, %v2999
        %v3001 = vrot.slane %v2695, 1
        %v3002 = vrot.slane %v2743, 1
        %v3003 = vsel %vm1470, %v3001, %v3002
        %v3004 = vrot.slane %v2696, 1
        %v3005 = vrot.slane %v2744, 1
        %v3006 = vsel %vm1470, %v3004, %v3005
        %v3007 = vrot.slane %v2697, 1
        %v3008 = vrot.slane %v2745, 1
        %v3009 = vsel %vm1470, %v3007, %v3008
        %v3010 = vrot.slane %v2698, 1
        %v3011 = vrot.slane %v2746, 1
        %v3012 = vsel %vm1470, %v3010, %v3011
        %v3013 = vrot.slane %v2699, 1
        %v3014 = vrot.slane %v2747, 1
        %v3015 = vsel %vm1470, %v3013, %v3014
        %v3016 = vrot.slane %v2700, 1
        %v3017 = vrot.slane %v2748, 1
        %v3018 = vsel %vm1470, %v3016, %v3017
        %v3019 = vrot.slane %v2701, 1
        %v3020 = vrot.slane %v2749, 1
        %v3021 = vsel %vm1470, %v3019, %v3020
        %3022 = vrot.lane.b32.xlu0 %v2976, 6
        %v3023 = vpop.permute.xlu0 %3022
        %3024 = vrot.lane.b32.xlu0 %v2979, 6
        %v3025 = vpop.permute.xlu0 %3024
        %3026 = vrot.lane.b32.xlu0 %v2982, 6
        %v3027 = vpop.permute.xlu0 %3026
        %3028 = vrot.lane.b32.xlu0 %v2985, 6
        %v3029 = vpop.permute.xlu0 %3028
        %3030 = vrot.lane.b32.xlu0 %v2988, 6
        %v3031 = vpop.permute.xlu0 %3030
        %3032 = vrot.lane.b32.xlu0 %v2991, 6
        %v3033 = vpop.permute.xlu0 %3032
        %3034 = vrot.lane.b32.xlu0 %v2994, 6
        %v3035 = vpop.permute.xlu0 %3034
        %3036 = vrot.lane.b32.xlu0 %v2997, 6
        %v3037 = vpop.permute.xlu0 %3036
        %3038 = vrot.lane.b32.xlu0 %v3000, 6
        %v3039 = vpop.permute.xlu0 %3038
        %3040 = vrot.lane.b32.xlu0 %v3003, 6
        %v3041 = vpop.permute.xlu0 %3040
        %3042 = vrot.lane.b32.xlu0 %v3006, 6
        %v3043 = vpop.permute.xlu0 %3042
        %3044 = vrot.lane.b32.xlu0 %v3009, 6
        %v3045 = vpop.permute.xlu0 %3044
        %3046 = vrot.lane.b32.xlu0 %v3012, 6
        %v3047 = vpop.permute.xlu0 %3046
        %3048 = vrot.lane.b32.xlu0 %v3015, 6
        %v3049 = vpop.permute.xlu0 %3048
        %3050 = vrot.lane.b32.xlu0 %v3018, 6
        %v3051 = vpop.permute.xlu0 %3050
        %3052 = vrot.lane.b32.xlu0 %v3021, 6
        %v3053 = vpop.permute.xlu0 %3052
        %v3055 = vsel %vm1551, %v2686, %v2943
        %v3057 = vsel %vm1551, %v2687, %v2945
        %v3059 = vsel %vm1551, %v2688, %v2947
        %v3061 = vsel %vm1551, %v2689, %v2949
        %v3063 = vsel %vm1551, %v2690, %v2951
        %v3065 = vsel %vm1551, %v2691, %v2953
        %v3067 = vsel %vm1551, %v2692, %v2955
        %v3069 = vsel %vm1551, %v2693, %v2957
        %v3071 = vsel %vm1551, %v2694, %v2959
        %v3073 = vsel %vm1551, %v2695, %v2961
        %v3075 = vsel %vm1551, %v2696, %v2963
        %v3077 = vsel %vm1551, %v2697, %v2965
        %v3079 = vsel %vm1551, %v2698, %v2967
        %v3081 = vsel %vm1551, %v2699, %v2969
        %v3083 = vsel %vm1551, %v2700, %v2971
        %v3085 = vsel %vm1551, %v2701, %v2973
        %v3087 = vsel %vm1584, %v3055, %v3023
        %v3089 = vsel %vm1584, %v3057, %v3025
        %v3091 = vsel %vm1584, %v3059, %v3027
        %v3093 = vsel %vm1584, %v3061, %v3029
        %v3095 = vsel %vm1584, %v3063, %v3031
        %v3097 = vsel %vm1584, %v3065, %v3033
        %v3099 = vsel %vm1584, %v3067, %v3035
        %v3101 = vsel %vm1584, %v3069, %v3037
        %v3103 = vsel %vm1584, %v3071, %v3039
        %v3105 = vsel %vm1584, %v3073, %v3041
        %v3107 = vsel %vm1584, %v3075, %v3043
        %v3109 = vsel %vm1584, %v3077, %v3045
        %v3111 = vsel %vm1584, %v3079, %v3047
        %v3113 = vsel %vm1584, %v3081, %v3049
        %v3115 = vsel %vm1584, %v3083, %v3051
        %v3117 = vsel %vm1584, %v3085, %v3053
        %s3118 = scalar_lea.vmem %s3, 16
        %v3119 = vld [vmem:[%s3118] sm:$0xf]
        %v3120 = vld [vmem:[%s3118 + $0x4] sm:$0x1]
        %v3123 = vunpack.c.l.b16 %v3119
        %v3124 = vunpack.c.l.b16 %v3120
        %v3125 = vpack.c.b16 %v3124, %v3123
        %v3126 = vsel %vm2171, %v3087, 0
        %v3128 = vsel %vm2171, %v3089, 0
        %v3130 = vsel %vm2171, %v3091, 0
        %v3132 = vsel %vm2171, %v3093, 0
        %v3134 = vsel %vm2171, %v3095, 0
        %v3136 = vsel %vm2171, %v3097, 0
        %v3138 = vsel %vm2171, %v3099, 0
        %v3140 = vsel %vm2171, %v3101, 0
        %v3142 = vsel %vm2171, %v3103, 0
        %v3144 = vsel %vm2171, %v3105, 0
        %v3146 = vsel %vm2171, %v3107, 0
        %v3148 = vsel %vm2171, %v3109, 0
        %v3150 = vsel %vm2171, %v3111, 0
        %v3152 = vsel %vm2171, %v3113, 0
        %v3154 = vsel %vm2171, %v3115, 0
        %v3156 = vsel %vm2171, %v3117, 0
        %v3159 = vand.u32 %v3125, %v2207
        %3161 = vmatprep.subr.bf16.mxu0 0
        %3162 = vmatpush1.bf16.msra.mxu0 %v3159
        %3163 = vmatprep.subr.bf16.mxu0 0
        %3164 = vmatpush1.bf16.msra.mxu0 0
        %3165 = vmatprep.subr.bf16.mxu0 0
        %3166 = vmatpush1.bf16.msra.mxu0 0
        %3167 = vmatprep.subr.bf16.mxu0 0
        %3168 = vmatpush1.bf16.msra.mxu0 0
        %3169 = vmatprep.subr.bf16.mxu0 0
        %3170 = vmatpush1.bf16.msra.mxu0 0
        %3171 = vmatprep.subr.bf16.mxu0 0
        %3172 = vmatpush1.bf16.msra.mxu0 0
        %3173 = vmatprep.subr.bf16.mxu0 0
        %3174 = vmatpush1.bf16.msra.mxu0 0
        %3175 = vmatprep.subr.bf16.mxu0 0
        %3176 = vmatpush1.bf16.msra.mxu0 0
        %3177 = vmatprep.subr.bf16.mxu0 0
        %3178 = vmatpush1.bf16.msra.mxu0 0
        %3179 = vmatprep.subr.bf16.mxu0 0
        %3180 = vmatpush1.bf16.msra.mxu0 0
        %3181 = vmatprep.subr.bf16.mxu0 0
        %3182 = vmatpush1.bf16.msra.mxu0 0
        %3183 = vmatprep.subr.bf16.mxu0 0
        %3184 = vmatpush1.bf16.msra.mxu0 0
        %3185 = vmatprep.subr.bf16.mxu0 0
        %3186 = vmatpush1.bf16.msra.mxu0 0
        %3187 = vmatprep.subr.bf16.mxu0 0
        %3188 = vmatpush1.bf16.msra.mxu0 0
        %3189 = vmatprep.subr.bf16.mxu0 0
        %3190 = vmatpush1.bf16.msra.mxu0 0
        %3191 = vmatprep.subr.bf16.mxu0 0
        %3192 = vmatpush1.bf16.msra.mxu0 0
        %3193 = vmatprep.mubr.bf16.mxu0 0
        %3194 = vmatmul.mubr.bf16.gmra.mrb[0].mxu0 %v3126
        %v3195 = vpop.f32.mrb[0].mxu0
        %v3196 = vadd.f32 0.0, %v3195
        %v3197 = vpop.f32.mrb[0].mxu0
        %v3198 = vpop.f32.mrb[0].mxu0
        %v3199 = vadd.f32 0.0, %v3198
        %v3200 = vpop.f32.mrb[0].mxu0
        %3201 = vmatprep.mubr.bf16.mxu0 0
        %3202 = vmatmul.mubr.bf16.gmra.mrb[0].mxu0 %v3128
        %v3203 = vpop.f32.mrb[0].mxu0
        %v3204 = vadd.f32 0.0, %v3203
        %v3205 = vpop.f32.mrb[0].mxu0
        %v3206 = vpop.f32.mrb[0].mxu0
        %v3207 = vadd.f32 0.0, %v3206
        %v3208 = vpop.f32.mrb[0].mxu0
        %3209 = vmatprep.mubr.bf16.mxu0 0
        %3210 = vmatmul.mubr.bf16.gmra.mrb[0].mxu0 %v3130
        %v3211 = vpop.f32.mrb[0].mxu0
        %v3212 = vadd.f32 0.0, %v3211
        %v3213 = vpop.f32.mrb[0].mxu0
        %v3214 = vpop.f32.mrb[0].mxu0
        %v3215 = vadd.f32 0.0, %v3214
        %v3216 = vpop.f32.mrb[0].mxu0
        %3217 = vmatprep.mubr.bf16.mxu0 0
        %3218 = vmatmul.mubr.bf16.gmra.mrb[0].mxu0 %v3132
        %v3219 = vpop.f32.mrb[0].mxu0
        %v3220 = vadd.f32 0.0, %v3219
        %v3221 = vpop.f32.mrb[0].mxu0
        %v3222 = vpop.f32.mrb[0].mxu0
        %v3223 = vadd.f32 0.0, %v3222
        %v3224 = vpop.f32.mrb[0].mxu0
        %3225 = vmatprep.mubr.bf16.mxu0 0
        %3226 = vmatmul.mubr.bf16.gmra.mrb[0].mxu0 %v3134
        %v3227 = vpop.f32.mrb[0].mxu0
        %v3228 = vadd.f32 0.0, %v3227
        %v3229 = vpop.f32.mrb[0].mxu0
        %v3230 = vpop.f32.mrb[0].mxu0
        %v3231 = vadd.f32 0.0, %v3230
        %v3232 = vpop.f32.mrb[0].mxu0
        %3233 = vmatprep.mubr.bf16.mxu0 0
        %3234 = vmatmul.mubr.bf16.gmra.mrb[0].mxu0 %v3136
        %v3235 = vpop.f32.mrb[0].mxu0
        %v3236 = vadd.f32 0.0, %v3235
        %v3237 = vpop.f32.mrb[0].mxu0
        %v3238 = vpop.f32.mrb[0].mxu0
        %v3239 = vadd.f32 0.0, %v3238
        %v3240 = vpop.f32.mrb[0].mxu0
        %3241 = vmatprep.mubr.bf16.mxu0 0
        %3242 = vmatmul.mubr.bf16.gmra.mrb[0].mxu0 %v3138
        %v3243 = vpop.f32.mrb[0].mxu0
        %v3244 = vadd.f32 0.0, %v3243
        %v3245 = vpop.f32.mrb[0].mxu0
        %v3246 = vpop.f32.mrb[0].mxu0
        %v3247 = vadd.f32 0.0, %v3246
        %v3248 = vpop.f32.mrb[0].mxu0
        %3249 = vmatprep.mubr.bf16.mxu0 0
        %3250 = vmatmul.mubr.bf16.gmra.mrb[0].mxu0 %v3140
        %v3251 = vpop.f32.mrb[0].mxu0
        %v3252 = vadd.f32 0.0, %v3251
        %v3253 = vpop.f32.mrb[0].mxu0
        %v3254 = vpop.f32.mrb[0].mxu0
        %v3255 = vadd.f32 0.0, %v3254
        %v3256 = vpop.f32.mrb[0].mxu0
        %3257 = vmatprep.mubr.bf16.mxu0 0
        %3258 = vmatmul.mubr.bf16.gmra.mrb[0].mxu0 %v3142
        %v3259 = vpop.f32.mrb[0].mxu0
        %v3260 = vadd.f32 0.0, %v3259
        %v3261 = vpop.f32.mrb[0].mxu0
        %v3262 = vpop.f32.mrb[0].mxu0
        %v3263 = vadd.f32 0.0, %v3262
        %v3264 = vpop.f32.mrb[0].mxu0
        %3265 = vmatprep.mubr.bf16.mxu0 0
        %3266 = vmatmul.mubr.bf16.gmra.mrb[0].mxu0 %v3144
        %v3267 = vpop.f32.mrb[0].mxu0
        %v3268 = vadd.f32 0.0, %v3267
        %v3269 = vpop.f32.mrb[0].mxu0
        %v3270 = vpop.f32.mrb[0].mxu0
        %v3271 = vadd.f32 0.0, %v3270
        %v3272 = vpop.f32.mrb[0].mxu0
        %3273 = vmatprep.mubr.bf16.mxu0 0
        %3274 = vmatmul.mubr.bf16.gmra.mrb[0].mxu0 %v3146
        %v3275 = vpop.f32.mrb[0].mxu0
        %v3276 = vadd.f32 0.0, %v3275
        %v3277 = vpop.f32.mrb[0].mxu0
        %v3278 = vpop.f32.mrb[0].mxu0
        %v3279 = vadd.f32 0.0, %v3278
        %v3280 = vpop.f32.mrb[0].mxu0
        %3281 = vmatprep.mubr.bf16.mxu0 0
        %3282 = vmatmul.mubr.bf16.gmra.mrb[0].mxu0 %v3148
        %v3283 = vpop.f32.mrb[0].mxu0
        %v3284 = vadd.f32 0.0, %v3283
        %v3285 = vpop.f32.mrb[0].mxu0
        %v3286 = vpop.f32.mrb[0].mxu0
        %v3287 = vadd.f32 0.0, %v3286
        %v3288 = vpop.f32.mrb[0].mxu0
        %3289 = vmatprep.mubr.bf16.mxu0 0
        %3290 = vmatmul.mubr.bf16.gmra.mrb[0].mxu0 %v3150
        %v3291 = vpop.f32.mrb[0].mxu0
        %v3292 = vadd.f32 0.0, %v3291
        %v3293 = vpop.f32.mrb[0].mxu0
        %v3294 = vpop.f32.mrb[0].mxu0
        %v3295 = vadd.f32 0.0, %v3294
        %v3296 = vpop.f32.mrb[0].mxu0
        %3297 = vmatprep.mubr.bf16.mxu0 0
        %3298 = vmatmul.mubr.bf16.gmra.mrb[0].mxu0 %v3152
        %v3299 = vpop.f32.mrb[0].mxu0
        %v3300 = vadd.f32 0.0, %v3299
        %v3301 = vpop.f32.mrb[0].mxu0
        %v3302 = vpop.f32.mrb[0].mxu0
        %v3303 = vadd.f32 0.0, %v3302
        %v3304 = vpop.f32.mrb[0].mxu0
        %3305 = vmatprep.mubr.bf16.mxu0 0
        %3306 = vmatmul.mubr.bf16.gmra.mrb[0].mxu0 %v3154
        %v3307 = vpop.f32.mrb[0].mxu0
        %v3308 = vadd.f32 0.0, %v3307
        %v3309 = vpop.f32.mrb[0].mxu0
        %v3310 = vpop.f32.mrb[0].mxu0
        %v3311 = vadd.f32 0.0, %v3310
        %v3312 = vpop.f32.mrb[0].mxu0
        %3313 = vmatprep.mubr.bf16.mxu0 0
        %3314 = vmatmul.mubr.bf16.gmra.mrb[0].mxu0 %v3156
        %v3315 = vpop.f32.mrb[0].mxu0
        %v3316 = vadd.f32 0.0, %v3315
        %v3317 = vpop.f32.mrb[0].mxu0
        %v3318 = vpop.f32.mrb[0].mxu0
        %v3319 = vadd.f32 0.0, %v3318
        %v3320 = vpop.f32.mrb[0].mxu0
        %3321 = vdwg.mxu0
        %v3322 = vadd.f32 %v2447, %v3196
        %v3323 = vadd.f32 %v2450, %v3199
        %v3324 = vadd.f32 %v2455, %v3204
        %v3325 = vadd.f32 %v2458, %v3207
        %v3326 = vadd.f32 %v2463, %v3212
        %v3327 = vadd.f32 %v2466, %v3215
        %v3328 = vadd.f32 %v2471, %v3220
        %v3329 = vadd.f32 %v2474, %v3223
        %v3330 = vadd.f32 %v2479, %v3228
        %v3331 = vadd.f32 %v2482, %v3231
        %v3332 = vadd.f32 %v2487, %v3236
        %v3333 = vadd.f32 %v2490, %v3239
        %v3334 = vadd.f32 %v2495, %v3244
        %v3335 = vadd.f32 %v2498, %v3247
        %v3336 = vadd.f32 %v2503, %v3252
        %v3337 = vadd.f32 %v2506, %v3255
        %v3338 = vadd.f32 %v2511, %v3260
        %v3339 = vadd.f32 %v2514, %v3263
        %v3340 = vadd.f32 %v2519, %v3268
        %v3341 = vadd.f32 %v2522, %v3271
        %v3342 = vadd.f32 %v2527, %v3276
        %v3343 = vadd.f32 %v2530, %v3279
        %v3344 = vadd.f32 %v2535, %v3284
        %v3345 = vadd.f32 %v2538, %v3287
        %v3346 = vadd.f32 %v2543, %v3292
        %v3347 = vadd.f32 %v2546, %v3295
        %v3348 = vadd.f32 %v2551, %v3300
        %v3349 = vadd.f32 %v2554, %v3303
        %v3350 = vadd.f32 %v2559, %v3308
        %v3351 = vadd.f32 %v2562, %v3311
        %v3352 = vadd.f32 %v2567, %v3316
        %v3353 = vadd.f32 %v2570, %v3319
        %v3354 = vld [vmem:[%s4] sm:$0x1]
        %v3356 = vlaneseq
        %v3357 = vshrl.u32 %v3356, 7
        %v3358 = vsub.s32 0, %v3357
        %v3359 = vrot.slane %v3354, %v3358
        %v3361 = vmul.f32 %v3322, %v3359
        %v3362 = vmul.f32 %v3323, %v3359
        %v3363 = vmul.f32 %v3324, %v3359
        %v3364 = vmul.f32 %v3325, %v3359
        %v3365 = vmul.f32 %v3326, %v3359
        %v3366 = vmul.f32 %v3327, %v3359
        %v3367 = vmul.f32 %v3328, %v3359
        %v3368 = vmul.f32 %v3329, %v3359
        %v3369 = vmul.f32 %v3330, %v3359
        %v3370 = vmul.f32 %v3331, %v3359
        %v3371 = vmul.f32 %v3332, %v3359
        %v3372 = vmul.f32 %v3333, %v3359
        %v3373 = vmul.f32 %v3334, %v3359
        %v3374 = vmul.f32 %v3335, %v3359
        %v3375 = vmul.f32 %v3336, %v3359
        %v3376 = vmul.f32 %v3337, %v3359
        %v3377 = vmul.f32 %v3338, %v3359
        %v3378 = vmul.f32 %v3339, %v3359
        %v3379 = vmul.f32 %v3340, %v3359
        %v3380 = vmul.f32 %v3341, %v3359
        %v3381 = vmul.f32 %v3342, %v3359
        %v3382 = vmul.f32 %v3343, %v3359
        %v3383 = vmul.f32 %v3344, %v3359
        %v3384 = vmul.f32 %v3345, %v3359
        %v3385 = vmul.f32 %v3346, %v3359
        %v3386 = vmul.f32 %v3347, %v3359
        %v3387 = vmul.f32 %v3348, %v3359
        %v3388 = vmul.f32 %v3349, %v3359
        %v3389 = vmul.f32 %v3350, %v3359
        %v3390 = vmul.f32 %v3351, %v3359
        %v3391 = vmul.f32 %v3352, %v3359
        %v3392 = vmul.f32 %v3353, %v3359
        %v3393 = vld [vmem:[%s5] sm:$0x1]
        %v3395 = vlaneseq
        %v3396 = vshrl.u32 %v3395, 7
        %v3397 = vsub.s32 0, %v3396
        %v3398 = vrot.slane %v3393, %v3397
        %v3400 = vadd.f32 %v3361, %v3398
        %v3401 = vadd.f32 %v3362, %v3398
        %v3402 = vadd.f32 %v3363, %v3398
        %v3403 = vadd.f32 %v3364, %v3398
        %v3404 = vadd.f32 %v3365, %v3398
        %v3405 = vadd.f32 %v3366, %v3398
        %v3406 = vadd.f32 %v3367, %v3398
        %v3407 = vadd.f32 %v3368, %v3398
        %v3408 = vadd.f32 %v3369, %v3398
        %v3409 = vadd.f32 %v3370, %v3398
        %v3410 = vadd.f32 %v3371, %v3398
        %v3411 = vadd.f32 %v3372, %v3398
        %v3412 = vadd.f32 %v3373, %v3398
        %v3413 = vadd.f32 %v3374, %v3398
        %v3414 = vadd.f32 %v3375, %v3398
        %v3415 = vadd.f32 %v3376, %v3398
        %v3416 = vadd.f32 %v3377, %v3398
        %v3417 = vadd.f32 %v3378, %v3398
        %v3418 = vadd.f32 %v3379, %v3398
        %v3419 = vadd.f32 %v3380, %v3398
        %v3420 = vadd.f32 %v3381, %v3398
        %v3421 = vadd.f32 %v3382, %v3398
        %v3422 = vadd.f32 %v3383, %v3398
        %v3423 = vadd.f32 %v3384, %v3398
        %v3424 = vadd.f32 %v3385, %v3398
        %v3425 = vadd.f32 %v3386, %v3398
        %v3426 = vadd.f32 %v3387, %v3398
        %v3427 = vadd.f32 %v3388, %v3398
        %v3428 = vadd.f32 %v3389, %v3398
        %v3429 = vadd.f32 %v3390, %v3398
        %v3430 = vadd.f32 %v3391, %v3398
        %v3431 = vadd.f32 %v3392, %v3398
        %v3432 = vmax.f32 %v3400, 0.0
        %v3433 = vmax.f32 %v3401, 0.0
        %v3434 = vmax.f32 %v3402, 0.0
        %v3435 = vmax.f32 %v3403, 0.0
        %v3436 = vmax.f32 %v3404, 0.0
        %v3437 = vmax.f32 %v3405, 0.0
        %v3438 = vmax.f32 %v3406, 0.0
        %v3439 = vmax.f32 %v3407, 0.0
        %v3440 = vmax.f32 %v3408, 0.0
        %v3441 = vmax.f32 %v3409, 0.0
        %v3442 = vmax.f32 %v3410, 0.0
        %v3443 = vmax.f32 %v3411, 0.0
        %v3444 = vmax.f32 %v3412, 0.0
        %v3445 = vmax.f32 %v3413, 0.0
        %v3446 = vmax.f32 %v3414, 0.0
        %v3447 = vmax.f32 %v3415, 0.0
        %v3448 = vmax.f32 %v3416, 0.0
        %v3449 = vmax.f32 %v3417, 0.0
        %v3450 = vmax.f32 %v3418, 0.0
        %v3451 = vmax.f32 %v3419, 0.0
        %v3452 = vmax.f32 %v3420, 0.0
        %v3453 = vmax.f32 %v3421, 0.0
        %v3454 = vmax.f32 %v3422, 0.0
        %v3455 = vmax.f32 %v3423, 0.0
        %v3456 = vmax.f32 %v3424, 0.0
        %v3457 = vmax.f32 %v3425, 0.0
        %v3458 = vmax.f32 %v3426, 0.0
        %v3459 = vmax.f32 %v3427, 0.0
        %v3460 = vmax.f32 %v3428, 0.0
        %v3461 = vmax.f32 %v3429, 0.0
        %v3462 = vmax.f32 %v3430, 0.0
        %v3463 = vmax.f32 %v3431, 0.0
        %v3464 = vpack.c.bf16 %v3433, %v3432
        %v3465 = vpack.c.bf16 %v3435, %v3434
        %v3466 = vpack.c.bf16 %v3437, %v3436
        %v3467 = vpack.c.bf16 %v3439, %v3438
        %v3468 = vpack.c.bf16 %v3441, %v3440
        %v3469 = vpack.c.bf16 %v3443, %v3442
        %v3470 = vpack.c.bf16 %v3445, %v3444
        %v3471 = vpack.c.bf16 %v3447, %v3446
        %v3472 = vpack.c.bf16 %v3449, %v3448
        %v3473 = vpack.c.bf16 %v3451, %v3450
        %v3474 = vpack.c.bf16 %v3453, %v3452
        %v3475 = vpack.c.bf16 %v3455, %v3454
        %v3476 = vpack.c.bf16 %v3457, %v3456
        %v3477 = vpack.c.bf16 %v3459, %v3458
        %v3478 = vpack.c.bf16 %v3461, %v3460
        %v3479 = vpack.c.bf16 %v3463, %v3462
        %v3480 = vmax.bf16 %v3464, %v3465
        %v3481 = vmax.bf16 %v3466, %v3467
        %v3482 = vmax.bf16 %v3468, %v3469
        %v3483 = vmax.bf16 %v3470, %v3471
        %v3484 = vmax.bf16 %v3472, %v3473
        %v3485 = vmax.bf16 %v3474, %v3475
        %v3486 = vmax.bf16 %v3476, %v3477
        %v3487 = vmax.bf16 %v3478, %v3479
        %v3496 = vcombine.high %v3480, %v3480
        %v3498 = vunpack.c.l.s4 1966171168
        %v3499 = vunpack.c.0.s8 %v3498
        %v3500 = vlaneseq
        %v3501 = vshrl.u32 %v3500, 7
        %v3502 = vsub.s32 %v3499, %v3501
        %v3503 = vrot.slane %v3480, %v3502
        %v3505 = vunpack.c.l.s4 1966171168
        %v3506 = vunpack.c.0.s8 %v3505
        %v3507 = vlaneseq
        %v3508 = vshrl.u32 %v3507, 7
        %v3509 = vsub.s32 %v3506, %v3508
        %v3510 = vrot.slane %v3496, %v3509
        %v3511 = vcombine.high %v3503, %v3503
        %v3512 = vcombine.high %v3510, %v3510
        %v3514 = vunpack.c.l.s4 1966171168
        %v3515 = vunpack.c.0.s8 %v3514
        %v3516 = vlaneseq
        %v3517 = vshrl.u32 %v3516, 7
        %v3518 = vsub.s32 %v3515, %v3517
        %v3519 = vrot.slane %v3503, %v3518
        %v3521 = vunpack.c.l.s4 1966171168
        %v3522 = vunpack.c.0.s8 %v3521
        %v3523 = vlaneseq
        %v3524 = vshrl.u32 %v3523, 7
        %v3525 = vsub.s32 %v3522, %v3524
        %v3526 = vrot.slane %v3510, %v3525
        %v3528 = vunpack.c.l.s4 1966171168
        %v3529 = vunpack.c.0.s8 %v3528
        %v3530 = vlaneseq
        %v3531 = vshrl.u32 %v3530, 7
        %v3532 = vsub.s32 %v3529, %v3531
        %v3533 = vrot.slane %v3511, %v3532
        %v3535 = vunpack.c.l.s4 1966171168
        %v3536 = vunpack.c.0.s8 %v3535
        %v3537 = vlaneseq
        %v3538 = vshrl.u32 %v3537, 7
        %v3539 = vsub.s32 %v3536, %v3538
        %v3540 = vrot.slane %v3512, %v3539
        %v3541 = vcombine.high %v3519, %v3519
        %v3542 = vcombine.high %v3526, %v3526
        %v3543 = vcombine.high %v3533, %v3533
        %v3544 = vcombine.high %v3540, %v3540
        %v3545 = vcombine.high %v3481, %v3481
        %v3547 = vunpack.c.l.s4 1966171168
        %v3548 = vunpack.c.0.s8 %v3547
        %v3549 = vlaneseq
        %v3550 = vshrl.u32 %v3549, 7
        %v3551 = vsub.s32 %v3548, %v3550
        %v3552 = vrot.slane %v3481, %v3551
        %v3554 = vunpack.c.l.s4 1966171168
        %v3555 = vunpack.c.0.s8 %v3554
        %v3556 = vlaneseq
        %v3557 = vshrl.u32 %v3556, 7
        %v3558 = vsub.s32 %v3555, %v3557
        %v3559 = vrot.slane %v3545, %v3558
        %v3560 = vcombine.high %v3552, %v3552
        %v3561 = vcombine.high %v3559, %v3559
        %v3563 = vunpack.c.l.s4 1966171168
        %v3564 = vunpack.c.0.s8 %v3563
        %v3565 = vlaneseq
        %v3566 = vshrl.u32 %v3565, 7
        %v3567 = vsub.s32 %v3564, %v3566
        %v3568 = vrot.slane %v3552, %v3567
        %v3570 = vunpack.c.l.s4 1966171168
        %v3571 = vunpack.c.0.s8 %v3570
        %v3572 = vlaneseq
        %v3573 = vshrl.u32 %v3572, 7
        %v3574 = vsub.s32 %v3571, %v3573
        %v3575 = vrot.slane %v3559, %v3574
        %v3577 = vunpack.c.l.s4 1966171168
        %v3578 = vunpack.c.0.s8 %v3577
        %v3579 = vlaneseq
        %v3580 = vshrl.u32 %v3579, 7
        %v3581 = vsub.s32 %v3578, %v3580
        %v3582 = vrot.slane %v3560, %v3581
        %v3584 = vunpack.c.l.s4 1966171168
        %v3585 = vunpack.c.0.s8 %v3584
        %v3586 = vlaneseq
        %v3587 = vshrl.u32 %v3586, 7
        %v3588 = vsub.s32 %v3585, %v3587
        %v3589 = vrot.slane %v3561, %v3588
        %v3590 = vcombine.high %v3568, %v3568
        %v3591 = vcombine.high %v3575, %v3575
        %v3592 = vcombine.high %v3582, %v3582
        %v3593 = vcombine.high %v3589, %v3589
        %v3594 = vcombine.high %v3482, %v3482
        %v3596 = vunpack.c.l.s4 1966171168
        %v3597 = vunpack.c.0.s8 %v3596
        %v3598 = vlaneseq
        %v3599 = vshrl.u32 %v3598, 7
        %v3600 = vsub.s32 %v3597, %v3599
        %v3601 = vrot.slane %v3482, %v3600
        %v3603 = vunpack.c.l.s4 1966171168
        %v3604 = vunpack.c.0.s8 %v3603
        %v3605 = vlaneseq
        %v3606 = vshrl.u32 %v3605, 7
        %v3607 = vsub.s32 %v3604, %v3606
        %v3608 = vrot.slane %v3594, %v3607
        %v3609 = vcombine.high %v3601, %v3601
        %v3610 = vcombine.high %v3608, %v3608
        %v3612 = vunpack.c.l.s4 1966171168
        %v3613 = vunpack.c.0.s8 %v3612
        %v3614 = vlaneseq
        %v3615 = vshrl.u32 %v3614, 7
        %v3616 = vsub.s32 %v3613, %v3615
        %v3617 = vrot.slane %v3601, %v3616
        %v3619 = vunpack.c.l.s4 1966171168
        %v3620 = vunpack.c.0.s8 %v3619
        %v3621 = vlaneseq
        %v3622 = vshrl.u32 %v3621, 7
        %v3623 = vsub.s32 %v3620, %v3622
        %v3624 = vrot.slane %v3608, %v3623
        %v3626 = vunpack.c.l.s4 1966171168
        %v3627 = vunpack.c.0.s8 %v3626
        %v3628 = vlaneseq
        %v3629 = vshrl.u32 %v3628, 7
        %v3630 = vsub.s32 %v3627, %v3629
        %v3631 = vrot.slane %v3609, %v3630
        %v3633 = vunpack.c.l.s4 1966171168
        %v3634 = vunpack.c.0.s8 %v3633
        %v3635 = vlaneseq
        %v3636 = vshrl.u32 %v3635, 7
        %v3637 = vsub.s32 %v3634, %v3636
        %v3638 = vrot.slane %v3610, %v3637
        %v3639 = vcombine.high %v3617, %v3617
        %v3640 = vcombine.high %v3624, %v3624
        %v3641 = vcombine.high %v3631, %v3631
        %v3642 = vcombine.high %v3638, %v3638
        %v3643 = vcombine.high %v3483, %v3483
        %v3645 = vunpack.c.l.s4 1966171168
        %v3646 = vunpack.c.0.s8 %v3645
        %v3647 = vlaneseq
        %v3648 = vshrl.u32 %v3647, 7
        %v3649 = vsub.s32 %v3646, %v3648
        %v3650 = vrot.slane %v3483, %v3649
        %v3652 = vunpack.c.l.s4 1966171168
        %v3653 = vunpack.c.0.s8 %v3652
        %v3654 = vlaneseq
        %v3655 = vshrl.u32 %v3654, 7
        %v3656 = vsub.s32 %v3653, %v3655
        %v3657 = vrot.slane %v3643, %v3656
        %v3658 = vcombine.high %v3650, %v3650
        %v3659 = vcombine.high %v3657, %v3657
        %v3661 = vunpack.c.l.s4 1966171168
        %v3662 = vunpack.c.0.s8 %v3661
        %v3663 = vlaneseq
        %v3664 = vshrl.u32 %v3663, 7
        %v3665 = vsub.s32 %v3662, %v3664
        %v3666 = vrot.slane %v3650, %v3665
        %v3668 = vunpack.c.l.s4 1966171168
        %v3669 = vunpack.c.0.s8 %v3668
        %v3670 = vlaneseq
        %v3671 = vshrl.u32 %v3670, 7
        %v3672 = vsub.s32 %v3669, %v3671
        %v3673 = vrot.slane %v3657, %v3672
        %v3675 = vunpack.c.l.s4 1966171168
        %v3676 = vunpack.c.0.s8 %v3675
        %v3677 = vlaneseq
        %v3678 = vshrl.u32 %v3677, 7
        %v3679 = vsub.s32 %v3676, %v3678
        %v3680 = vrot.slane %v3658, %v3679
        %v3682 = vunpack.c.l.s4 1966171168
        %v3683 = vunpack.c.0.s8 %v3682
        %v3684 = vlaneseq
        %v3685 = vshrl.u32 %v3684, 7
        %v3686 = vsub.s32 %v3683, %v3685
        %v3687 = vrot.slane %v3659, %v3686
        %v3688 = vcombine.high %v3666, %v3666
        %v3689 = vcombine.high %v3673, %v3673
        %v3690 = vcombine.high %v3680, %v3680
        %v3691 = vcombine.high %v3687, %v3687
        %v3692 = vcombine.high %v3484, %v3484
        %v3694 = vunpack.c.l.s4 1966171168
        %v3695 = vunpack.c.0.s8 %v3694
        %v3696 = vlaneseq
        %v3697 = vshrl.u32 %v3696, 7
        %v3698 = vsub.s32 %v3695, %v3697
        %v3699 = vrot.slane %v3484, %v3698
        %v3701 = vunpack.c.l.s4 1966171168
        %v3702 = vunpack.c.0.s8 %v3701
        %v3703 = vlaneseq
        %v3704 = vshrl.u32 %v3703, 7
        %v3705 = vsub.s32 %v3702, %v3704
        %v3706 = vrot.slane %v3692, %v3705
        %v3707 = vcombine.high %v3699, %v3699
        %v3708 = vcombine.high %v3706, %v3706
        %v3710 = vunpack.c.l.s4 1966171168
        %v3711 = vunpack.c.0.s8 %v3710
        %v3712 = vlaneseq
        %v3713 = vshrl.u32 %v3712, 7
        %v3714 = vsub.s32 %v3711, %v3713
        %v3715 = vrot.slane %v3699, %v3714
        %v3717 = vunpack.c.l.s4 1966171168
        %v3718 = vunpack.c.0.s8 %v3717
        %v3719 = vlaneseq
        %v3720 = vshrl.u32 %v3719, 7
        %v3721 = vsub.s32 %v3718, %v3720
        %v3722 = vrot.slane %v3706, %v3721
        %v3724 = vunpack.c.l.s4 1966171168
        %v3725 = vunpack.c.0.s8 %v3724
        %v3726 = vlaneseq
        %v3727 = vshrl.u32 %v3726, 7
        %v3728 = vsub.s32 %v3725, %v3727
        %v3729 = vrot.slane %v3707, %v3728
        %v3731 = vunpack.c.l.s4 1966171168
        %v3732 = vunpack.c.0.s8 %v3731
        %v3733 = vlaneseq
        %v3734 = vshrl.u32 %v3733, 7
        %v3735 = vsub.s32 %v3732, %v3734
        %v3736 = vrot.slane %v3708, %v3735
        %v3737 = vcombine.high %v3715, %v3715
        %v3738 = vcombine.high %v3722, %v3722
        %v3739 = vcombine.high %v3729, %v3729
        %v3740 = vcombine.high %v3736, %v3736
        %v3741 = vcombine.high %v3485, %v3485
        %v3743 = vunpack.c.l.s4 1966171168
        %v3744 = vunpack.c.0.s8 %v3743
        %v3745 = vlaneseq
        %v3746 = vshrl.u32 %v3745, 7
        %v3747 = vsub.s32 %v3744, %v3746
        %v3748 = vrot.slane %v3485, %v3747
        %v3750 = vunpack.c.l.s4 1966171168
        %v3751 = vunpack.c.0.s8 %v3750
        %v3752 = vlaneseq
        %v3753 = vshrl.u32 %v3752, 7
        %v3754 = vsub.s32 %v3751, %v3753
        %v3755 = vrot.slane %v3741, %v3754
        %v3756 = vcombine.high %v3748, %v3748
        %v3757 = vcombine.high %v3755, %v3755
        %v3759 = vunpack.c.l.s4 1966171168
        %v3760 = vunpack.c.0.s8 %v3759
        %v3761 = vlaneseq
        %v3762 = vshrl.u32 %v3761, 7
        %v3763 = vsub.s32 %v3760, %v3762
        %v3764 = vrot.slane %v3748, %v3763
        %v3766 = vunpack.c.l.s4 1966171168
        %v3767 = vunpack.c.0.s8 %v3766
        %v3768 = vlaneseq
        %v3769 = vshrl.u32 %v3768, 7
        %v3770 = vsub.s32 %v3767, %v3769
        %v3771 = vrot.slane %v3755, %v3770
        %v3773 = vunpack.c.l.s4 1966171168
        %v3774 = vunpack.c.0.s8 %v3773
        %v3775 = vlaneseq
        %v3776 = vshrl.u32 %v3775, 7
        %v3777 = vsub.s32 %v3774, %v3776
        %v3778 = vrot.slane %v3756, %v3777
        %v3780 = vunpack.c.l.s4 1966171168
        %v3781 = vunpack.c.0.s8 %v3780
        %v3782 = vlaneseq
        %v3783 = vshrl.u32 %v3782, 7
        %v3784 = vsub.s32 %v3781, %v3783
        %v3785 = vrot.slane %v3757, %v3784
        %v3786 = vcombine.high %v3764, %v3764
        %v3787 = vcombine.high %v3771, %v3771
        %v3788 = vcombine.high %v3778, %v3778
        %v3789 = vcombine.high %v3785, %v3785
        %v3790 = vcombine.high %v3486, %v3486
        %v3792 = vunpack.c.l.s4 1966171168
        %v3793 = vunpack.c.0.s8 %v3792
        %v3794 = vlaneseq
        %v3795 = vshrl.u32 %v3794, 7
        %v3796 = vsub.s32 %v3793, %v3795
        %v3797 = vrot.slane %v3486, %v3796
        %v3799 = vunpack.c.l.s4 1966171168
        %v3800 = vunpack.c.0.s8 %v3799
        %v3801 = vlaneseq
        %v3802 = vshrl.u32 %v3801, 7
        %v3803 = vsub.s32 %v3800, %v3802
        %v3804 = vrot.slane %v3790, %v3803
        %v3805 = vcombine.high %v3797, %v3797
        %v3806 = vcombine.high %v3804, %v3804
        %v3808 = vunpack.c.l.s4 1966171168
        %v3809 = vunpack.c.0.s8 %v3808
        %v3810 = vlaneseq
        %v3811 = vshrl.u32 %v3810, 7
        %v3812 = vsub.s32 %v3809, %v3811
        %v3813 = vrot.slane %v3797, %v3812
        %v3815 = vunpack.c.l.s4 1966171168
        %v3816 = vunpack.c.0.s8 %v3815
        %v3817 = vlaneseq
        %v3818 = vshrl.u32 %v3817, 7
        %v3819 = vsub.s32 %v3816, %v3818
        %v3820 = vrot.slane %v3804, %v3819
        %v3822 = vunpack.c.l.s4 1966171168
        %v3823 = vunpack.c.0.s8 %v3822
        %v3824 = vlaneseq
        %v3825 = vshrl.u32 %v3824, 7
        %v3826 = vsub.s32 %v3823, %v3825
        %v3827 = vrot.slane %v3805, %v3826
        %v3829 = vunpack.c.l.s4 1966171168
        %v3830 = vunpack.c.0.s8 %v3829
        %v3831 = vlaneseq
        %v3832 = vshrl.u32 %v3831, 7
        %v3833 = vsub.s32 %v3830, %v3832
        %v3834 = vrot.slane %v3806, %v3833
        %v3835 = vcombine.high %v3813, %v3813
        %v3836 = vcombine.high %v3820, %v3820
        %v3837 = vcombine.high %v3827, %v3827
        %v3838 = vcombine.high %v3834, %v3834
        %v3839 = vcombine.high %v3487, %v3487
        %v3841 = vunpack.c.l.s4 1966171168
        %v3842 = vunpack.c.0.s8 %v3841
        %v3843 = vlaneseq
        %v3844 = vshrl.u32 %v3843, 7
        %v3845 = vsub.s32 %v3842, %v3844
        %v3846 = vrot.slane %v3487, %v3845
        %v3848 = vunpack.c.l.s4 1966171168
        %v3849 = vunpack.c.0.s8 %v3848
        %v3850 = vlaneseq
        %v3851 = vshrl.u32 %v3850, 7
        %v3852 = vsub.s32 %v3849, %v3851
        %v3853 = vrot.slane %v3839, %v3852
        %v3854 = vcombine.high %v3846, %v3846
        %v3855 = vcombine.high %v3853, %v3853
        %v3857 = vunpack.c.l.s4 1966171168
        %v3858 = vunpack.c.0.s8 %v3857
        %v3859 = vlaneseq
        %v3860 = vshrl.u32 %v3859, 7
        %v3861 = vsub.s32 %v3858, %v3860
        %v3862 = vrot.slane %v3846, %v3861
        %v3864 = vunpack.c.l.s4 1966171168
        %v3865 = vunpack.c.0.s8 %v3864
        %v3866 = vlaneseq
        %v3867 = vshrl.u32 %v3866, 7
        %v3868 = vsub.s32 %v3865, %v3867
        %v3869 = vrot.slane %v3853, %v3868
        %v3871 = vunpack.c.l.s4 1966171168
        %v3872 = vunpack.c.0.s8 %v3871
        %v3873 = vlaneseq
        %v3874 = vshrl.u32 %v3873, 7
        %v3875 = vsub.s32 %v3872, %v3874
        %v3876 = vrot.slane %v3854, %v3875
        %v3878 = vunpack.c.l.s4 1966171168
        %v3879 = vunpack.c.0.s8 %v3878
        %v3880 = vlaneseq
        %v3881 = vshrl.u32 %v3880, 7
        %v3882 = vsub.s32 %v3879, %v3881
        %v3883 = vrot.slane %v3855, %v3882
        %v3884 = vcombine.high %v3862, %v3862
        %v3885 = vcombine.high %v3869, %v3869
        %v3886 = vcombine.high %v3876, %v3876
        %v3887 = vcombine.high %v3883, %v3883
        %v3953 = vshrl.u32 %v3519, 16
        %v3955 = vrot.slane %v3953, 7
        %v3956 = vrot.slane %v3955, 1
        %v3958 = vshrl.u32 %v3533, 16
        %v3960 = vrot.slane %v3958, 7
        %v3961 = vrot.slane %v3960, 1
        %v3963 = vshrl.u32 %v3541, 16
        %v3965 = vrot.slane %v3963, 7
        %v3966 = vrot.slane %v3965, 1
        %v3968 = vshrl.u32 %v3543, 16
        %v3970 = vrot.slane %v3968, 7
        %v3971 = vrot.slane %v3970, 1
        %v3973 = vshrl.u32 %v3526, 16
        %v3975 = vrot.slane %v3973, 7
        %v3976 = vrot.slane %v3975, 1
        %v3978 = vshrl.u32 %v3540, 16
        %v3980 = vrot.slane %v3978, 7
        %v3981 = vrot.slane %v3980, 1
        %v3983 = vshrl.u32 %v3542, 16
        %v3985 = vrot.slane %v3983, 7
        %v3986 = vrot.slane %v3985, 1
        %v3988 = vshrl.u32 %v3544, 16
        %v3990 = vrot.slane %v3988, 7
        %v3991 = vrot.slane %v3990, 1
        %v3993 = vshrl.u32 %v3568, 16
        %v3995 = vrot.slane %v3993, 7
        %v3996 = vrot.slane %v3995, 1
        %v3998 = vshrl.u32 %v3582, 16
        %v4000 = vrot.slane %v3998, 7
        %v4001 = vrot.slane %v4000, 1
        %v4003 = vshrl.u32 %v3590, 16
        %v4005 = vrot.slane %v4003, 7
        %v4006 = vrot.slane %v4005, 1
        %v4008 = vshrl.u32 %v3592, 16
        %v4010 = vrot.slane %v4008, 7
        %v4011 = vrot.slane %v4010, 1
        %v4013 = vshrl.u32 %v3575, 16
        %v4015 = vrot.slane %v4013, 7
        %v4016 = vrot.slane %v4015, 1
        %v4018 = vshrl.u32 %v3589, 16
        %v4020 = vrot.slane %v4018, 7
        %v4021 = vrot.slane %v4020, 1
        %v4023 = vshrl.u32 %v3591, 16
        %v4025 = vrot.slane %v4023, 7
        %v4026 = vrot.slane %v4025, 1
        %v4028 = vshrl.u32 %v3593, 16
        %v4030 = vrot.slane %v4028, 7
        %v4031 = vrot.slane %v4030, 1
        %v4033 = vshrl.u32 %v3617, 16
        %v4035 = vrot.slane %v4033, 7
        %v4036 = vrot.slane %v4035, 1
        %v4038 = vshrl.u32 %v3631, 16
        %v4040 = vrot.slane %v4038, 7
        %v4041 = vrot.slane %v4040, 1
        %v4043 = vshrl.u32 %v3639, 16
        %v4045 = vrot.slane %v4043, 7
        %v4046 = vrot.slane %v4045, 1
        %v4048 = vshrl.u32 %v3641, 16
        %v4050 = vrot.slane %v4048, 7
        %v4051 = vrot.slane %v4050, 1
        %v4053 = vshrl.u32 %v3624, 16
        %v4055 = vrot.slane %v4053, 7
        %v4056 = vrot.slane %v4055, 1
        %v4058 = vshrl.u32 %v3638, 16
        %v4060 = vrot.slane %v4058, 7
        %v4061 = vrot.slane %v4060, 1
        %v4063 = vshrl.u32 %v3640, 16
        %v4065 = vrot.slane %v4063, 7
        %v4066 = vrot.slane %v4065, 1
        %v4068 = vshrl.u32 %v3642, 16
        %v4070 = vrot.slane %v4068, 7
        %v4071 = vrot.slane %v4070, 1
        %v4073 = vshrl.u32 %v3666, 16
        %v4075 = vrot.slane %v4073, 7
        %v4076 = vrot.slane %v4075, 1
        %v4078 = vshrl.u32 %v3680, 16
        %v4080 = vrot.slane %v4078, 7
        %v4081 = vrot.slane %v4080, 1
        %v4083 = vshrl.u32 %v3688, 16
        %v4085 = vrot.slane %v4083, 7
        %v4086 = vrot.slane %v4085, 1
        %v4088 = vshrl.u32 %v3690, 16
        %v4090 = vrot.slane %v4088, 7
        %v4091 = vrot.slane %v4090, 1
        %v4093 = vshrl.u32 %v3673, 16
        %v4095 = vrot.slane %v4093, 7
        %v4096 = vrot.slane %v4095, 1
        %v4098 = vshrl.u32 %v3687, 16
        %v4100 = vrot.slane %v4098, 7
        %v4101 = vrot.slane %v4100, 1
        %v4103 = vshrl.u32 %v3689, 16
        %v4105 = vrot.slane %v4103, 7
        %v4106 = vrot.slane %v4105, 1
        %v4108 = vshrl.u32 %v3691, 16
        %v4110 = vrot.slane %v4108, 7
        %v4111 = vrot.slane %v4110, 1
        %v4113 = vshrl.u32 %v3715, 16
        %v4115 = vrot.slane %v4113, 7
        %v4116 = vrot.slane %v4115, 1
        %v4118 = vshrl.u32 %v3729, 16
        %v4120 = vrot.slane %v4118, 7
        %v4121 = vrot.slane %v4120, 1
        %v4123 = vshrl.u32 %v3737, 16
        %v4125 = vrot.slane %v4123, 7
        %v4126 = vrot.slane %v4125, 1
        %v4128 = vshrl.u32 %v3739, 16
        %v4130 = vrot.slane %v4128, 7
        %v4131 = vrot.slane %v4130, 1
        %v4133 = vshrl.u32 %v3722, 16
        %v4135 = vrot.slane %v4133, 7
        %v4136 = vrot.slane %v4135, 1
        %v4138 = vshrl.u32 %v3736, 16
        %v4140 = vrot.slane %v4138, 7
        %v4141 = vrot.slane %v4140, 1
        %v4143 = vshrl.u32 %v3738, 16
        %v4145 = vrot.slane %v4143, 7
        %v4146 = vrot.slane %v4145, 1
        %v4148 = vshrl.u32 %v3740, 16
        %v4150 = vrot.slane %v4148, 7
        %v4151 = vrot.slane %v4150, 1
        %v4153 = vshrl.u32 %v3764, 16
        %v4155 = vrot.slane %v4153, 7
        %v4156 = vrot.slane %v4155, 1
        %v4158 = vshrl.u32 %v3778, 16
        %v4160 = vrot.slane %v4158, 7
        %v4161 = vrot.slane %v4160, 1
        %v4163 = vshrl.u32 %v3786, 16
        %v4165 = vrot.slane %v4163, 7
        %v4166 = vrot.slane %v4165, 1
        %v4168 = vshrl.u32 %v3788, 16
        %v4170 = vrot.slane %v4168, 7
        %v4171 = vrot.slane %v4170, 1
        %v4173 = vshrl.u32 %v3771, 16
        %v4175 = vrot.slane %v4173, 7
        %v4176 = vrot.slane %v4175, 1
        %v4178 = vshrl.u32 %v3785, 16
        %v4180 = vrot.slane %v4178, 7
        %v4181 = vrot.slane %v4180, 1
        %v4183 = vshrl.u32 %v3787, 16
        %v4185 = vrot.slane %v4183, 7
        %v4186 = vrot.slane %v4185, 1
        %v4188 = vshrl.u32 %v3789, 16
        %v4190 = vrot.slane %v4188, 7
        %v4191 = vrot.slane %v4190, 1
        %v4193 = vshrl.u32 %v3813, 16
        %v4195 = vrot.slane %v4193, 7
        %v4196 = vrot.slane %v4195, 1
        %v4198 = vshrl.u32 %v3827, 16
        %v4200 = vrot.slane %v4198, 7
        %v4201 = vrot.slane %v4200, 1
        %v4203 = vshrl.u32 %v3835, 16
        %v4205 = vrot.slane %v4203, 7
        %v4206 = vrot.slane %v4205, 1
        %v4208 = vshrl.u32 %v3837, 16
        %v4210 = vrot.slane %v4208, 7
        %v4211 = vrot.slane %v4210, 1
        %v4213 = vshrl.u32 %v3820, 16
        %v4215 = vrot.slane %v4213, 7
        %v4216 = vrot.slane %v4215, 1
        %v4218 = vshrl.u32 %v3834, 16
        %v4220 = vrot.slane %v4218, 7
        %v4221 = vrot.slane %v4220, 1
        %v4223 = vshrl.u32 %v3836, 16
        %v4225 = vrot.slane %v4223, 7
        %v4226 = vrot.slane %v4225, 1
        %v4228 = vshrl.u32 %v3838, 16
        %v4230 = vrot.slane %v4228, 7
        %v4231 = vrot.slane %v4230, 1
        %v4233 = vshrl.u32 %v3862, 16
        %v4235 = vrot.slane %v4233, 7
        %v4236 = vrot.slane %v4235, 1
        %v4238 = vshrl.u32 %v3876, 16
        %v4240 = vrot.slane %v4238, 7
        %v4241 = vrot.slane %v4240, 1
        %v4243 = vshrl.u32 %v3884, 16
        %v4245 = vrot.slane %v4243, 7
        %v4246 = vrot.slane %v4245, 1
        %v4248 = vshrl.u32 %v3886, 16
        %v4250 = vrot.slane %v4248, 7
        %v4251 = vrot.slane %v4250, 1
        %v4253 = vshrl.u32 %v3869, 16
        %v4255 = vrot.slane %v4253, 7
        %v4256 = vrot.slane %v4255, 1
        %v4258 = vshrl.u32 %v3883, 16
        %v4260 = vrot.slane %v4258, 7
        %v4261 = vrot.slane %v4260, 1
        %v4263 = vshrl.u32 %v3885, 16
        %v4265 = vrot.slane %v4263, 7
        %v4266 = vrot.slane %v4265, 1
        %v4268 = vshrl.u32 %v3887, 16
        %v4270 = vrot.slane %v4268, 7
        %v4271 = vrot.slane %v4270, 1
        %v4336 = vmax.bf16 %v3519, %v3956
        %v4337 = vmax.bf16 %v3533, %v3961
        %v4338 = vmax.bf16 %v3541, %v3966
        %v4339 = vmax.bf16 %v3543, %v3971
        %v4340 = vmax.bf16 %v3526, %v3976
        %v4341 = vmax.bf16 %v3540, %v3981
        %v4342 = vmax.bf16 %v3542, %v3986
        %v4343 = vmax.bf16 %v3544, %v3991
        %v4344 = vmax.bf16 %v3568, %v3996
        %v4345 = vmax.bf16 %v3582, %v4001
        %v4346 = vmax.bf16 %v3590, %v4006
        %v4347 = vmax.bf16 %v3592, %v4011
        %v4348 = vmax.bf16 %v3575, %v4016
        %v4349 = vmax.bf16 %v3589, %v4021
        %v4350 = vmax.bf16 %v3591, %v4026
        %v4351 = vmax.bf16 %v3593, %v4031
        %v4352 = vmax.bf16 %v3617, %v4036
        %v4353 = vmax.bf16 %v3631, %v4041
        %v4354 = vmax.bf16 %v3639, %v4046
        %v4355 = vmax.bf16 %v3641, %v4051
        %v4356 = vmax.bf16 %v3624, %v4056
        %v4357 = vmax.bf16 %v3638, %v4061
        %v4358 = vmax.bf16 %v3640, %v4066
        %v4359 = vmax.bf16 %v3642, %v4071
        %v4360 = vmax.bf16 %v3666, %v4076
        %v4361 = vmax.bf16 %v3680, %v4081
        %v4362 = vmax.bf16 %v3688, %v4086
        %v4363 = vmax.bf16 %v3690, %v4091
        %v4364 = vmax.bf16 %v3673, %v4096
        %v4365 = vmax.bf16 %v3687, %v4101
        %v4366 = vmax.bf16 %v3689, %v4106
        %v4367 = vmax.bf16 %v3691, %v4111
        %v4368 = vmax.bf16 %v3715, %v4116
        %v4369 = vmax.bf16 %v3729, %v4121
        %v4370 = vmax.bf16 %v3737, %v4126
        %v4371 = vmax.bf16 %v3739, %v4131
        %v4372 = vmax.bf16 %v3722, %v4136
        %v4373 = vmax.bf16 %v3736, %v4141
        %v4374 = vmax.bf16 %v3738, %v4146
        %v4375 = vmax.bf16 %v3740, %v4151
        %v4376 = vmax.bf16 %v3764, %v4156
        %v4377 = vmax.bf16 %v3778, %v4161
        %v4378 = vmax.bf16 %v3786, %v4166
        %v4379 = vmax.bf16 %v3788, %v4171
        %v4380 = vmax.bf16 %v3771, %v4176
        %v4381 = vmax.bf16 %v3785, %v4181
        %v4382 = vmax.bf16 %v3787, %v4186
        %v4383 = vmax.bf16 %v3789, %v4191
        %v4384 = vmax.bf16 %v3813, %v4196
        %v4385 = vmax.bf16 %v3827, %v4201
        %v4386 = vmax.bf16 %v3835, %v4206
        %v4387 = vmax.bf16 %v3837, %v4211
        %v4388 = vmax.bf16 %v3820, %v4216
        %v4389 = vmax.bf16 %v3834, %v4221
        %v4390 = vmax.bf16 %v3836, %v4226
        %v4391 = vmax.bf16 %v3838, %v4231
        %v4392 = vmax.bf16 %v3862, %v4236
        %v4393 = vmax.bf16 %v3876, %v4241
        %v4394 = vmax.bf16 %v3884, %v4246
        %v4395 = vmax.bf16 %v3886, %v4251
        %v4396 = vmax.bf16 %v3869, %v4256
        %v4397 = vmax.bf16 %v3883, %v4261
        %v4398 = vmax.bf16 %v3885, %v4266
        %v4399 = vmax.bf16 %v3887, %v4271
        %v4433 = vunpack.c.l.s4 1966171168
        %v4434 = vunpack.c.0.s8 %v4433
        %v4435 = vlaneseq
        %v4436 = vshrl.u32 %v4435, 7
        %v4437 = vsub.s32 %v4434, %v4436
        %v4438 = vrot.slane %v4336, %v4437
        %v4440 = vunpack.c.l.s4 1966171168
        %v4441 = vunpack.c.0.s8 %v4440
        %v4442 = vlaneseq
        %v4443 = vshrl.u32 %v4442, 7
        %v4444 = vsub.s32 %v4441, %v4443
        %v4445 = vrot.slane %v4438, %v4444
        %v4447 = vunpack.c.l.s4 1966171168
        %v4448 = vunpack.c.0.s8 %v4447
        %v4449 = vlaneseq
        %v4450 = vshrl.u32 %v4449, 7
        %v4451 = vsub.s32 %v4448, %v4450
        %v4452 = vrot.slane %v4338, %v4451
        %v4454 = vunpack.c.l.s4 1966171168
        %v4455 = vunpack.c.0.s8 %v4454
        %v4456 = vlaneseq
        %v4457 = vshrl.u32 %v4456, 7
        %v4458 = vsub.s32 %v4455, %v4457
        %v4459 = vrot.slane %v4452, %v4458
        %v4461 = vunpack.c.l.s4 1966171168
        %v4462 = vunpack.c.0.s8 %v4461
        %v4463 = vlaneseq
        %v4464 = vshrl.u32 %v4463, 7
        %v4465 = vsub.s32 %v4462, %v4464
        %v4466 = vrot.slane %v4340, %v4465
        %v4468 = vunpack.c.l.s4 1966171168
        %v4469 = vunpack.c.0.s8 %v4468
        %v4470 = vlaneseq
        %v4471 = vshrl.u32 %v4470, 7
        %v4472 = vsub.s32 %v4469, %v4471
        %v4473 = vrot.slane %v4466, %v4472
        %v4475 = vunpack.c.l.s4 1966171168
        %v4476 = vunpack.c.0.s8 %v4475
        %v4477 = vlaneseq
        %v4478 = vshrl.u32 %v4477, 7
        %v4479 = vsub.s32 %v4476, %v4478
        %v4480 = vrot.slane %v4342, %v4479
        %v4482 = vunpack.c.l.s4 1966171168
        %v4483 = vunpack.c.0.s8 %v4482
        %v4484 = vlaneseq
        %v4485 = vshrl.u32 %v4484, 7
        %v4486 = vsub.s32 %v4483, %v4485
        %v4487 = vrot.slane %v4480, %v4486
        %v4489 = vunpack.c.l.s4 1966171168
        %v4490 = vunpack.c.0.s8 %v4489
        %v4491 = vlaneseq
        %v4492 = vshrl.u32 %v4491, 7
        %v4493 = vsub.s32 %v4490, %v4492
        %v4494 = vrot.slane %v4344, %v4493
        %v4496 = vunpack.c.l.s4 1966171168
        %v4497 = vunpack.c.0.s8 %v4496
        %v4498 = vlaneseq
        %v4499 = vshrl.u32 %v4498, 7
        %v4500 = vsub.s32 %v4497, %v4499
        %v4501 = vrot.slane %v4494, %v4500
        %v4503 = vunpack.c.l.s4 1966171168
        %v4504 = vunpack.c.0.s8 %v4503
        %v4505 = vlaneseq
        %v4506 = vshrl.u32 %v4505, 7
        %v4507 = vsub.s32 %v4504, %v4506
        %v4508 = vrot.slane %v4346, %v4507
        %v4510 = vunpack.c.l.s4 1966171168
        %v4511 = vunpack.c.0.s8 %v4510
        %v4512 = vlaneseq
        %v4513 = vshrl.u32 %v4512, 7
        %v4514 = vsub.s32 %v4511, %v4513
        %v4515 = vrot.slane %v4508, %v4514
        %v4517 = vunpack.c.l.s4 1966171168
        %v4518 = vunpack.c.0.s8 %v4517
        %v4519 = vlaneseq
        %v4520 = vshrl.u32 %v4519, 7
        %v4521 = vsub.s32 %v4518, %v4520
        %v4522 = vrot.slane %v4348, %v4521
        %v4524 = vunpack.c.l.s4 1966171168
        %v4525 = vunpack.c.0.s8 %v4524
        %v4526 = vlaneseq
        %v4527 = vshrl.u32 %v4526, 7
        %v4528 = vsub.s32 %v4525, %v4527
        %v4529 = vrot.slane %v4522, %v4528
        %v4531 = vunpack.c.l.s4 1966171168
        %v4532 = vunpack.c.0.s8 %v4531
        %v4533 = vlaneseq
        %v4534 = vshrl.u32 %v4533, 7
        %v4535 = vsub.s32 %v4532, %v4534
        %v4536 = vrot.slane %v4350, %v4535
        %v4538 = vunpack.c.l.s4 1966171168
        %v4539 = vunpack.c.0.s8 %v4538
        %v4540 = vlaneseq
        %v4541 = vshrl.u32 %v4540, 7
        %v4542 = vsub.s32 %v4539, %v4541
        %v4543 = vrot.slane %v4536, %v4542
        %v4545 = vunpack.c.l.s4 1966171168
        %v4546 = vunpack.c.0.s8 %v4545
        %v4547 = vlaneseq
        %v4548 = vshrl.u32 %v4547, 7
        %v4549 = vsub.s32 %v4546, %v4548
        %v4550 = vrot.slane %v4352, %v4549
        %v4552 = vunpack.c.l.s4 1966171168
        %v4553 = vunpack.c.0.s8 %v4552
        %v4554 = vlaneseq
        %v4555 = vshrl.u32 %v4554, 7
        %v4556 = vsub.s32 %v4553, %v4555
        %v4557 = vrot.slane %v4550, %v4556
        %v4559 = vunpack.c.l.s4 1966171168
        %v4560 = vunpack.c.0.s8 %v4559
        %v4561 = vlaneseq
        %v4562 = vshrl.u32 %v4561, 7
        %v4563 = vsub.s32 %v4560, %v4562
        %v4564 = vrot.slane %v4354, %v4563
        %v4566 = vunpack.c.l.s4 1966171168
        %v4567 = vunpack.c.0.s8 %v4566
        %v4568 = vlaneseq
        %v4569 = vshrl.u32 %v4568, 7
        %v4570 = vsub.s32 %v4567, %v4569
        %v4571 = vrot.slane %v4564, %v4570
        %v4573 = vunpack.c.l.s4 1966171168
        %v4574 = vunpack.c.0.s8 %v4573
        %v4575 = vlaneseq
        %v4576 = vshrl.u32 %v4575, 7
        %v4577 = vsub.s32 %v4574, %v4576
        %v4578 = vrot.slane %v4356, %v4577
        %v4580 = vunpack.c.l.s4 1966171168
        %v4581 = vunpack.c.0.s8 %v4580
        %v4582 = vlaneseq
        %v4583 = vshrl.u32 %v4582, 7
        %v4584 = vsub.s32 %v4581, %v4583
        %v4585 = vrot.slane %v4578, %v4584
        %v4587 = vunpack.c.l.s4 1966171168
        %v4588 = vunpack.c.0.s8 %v4587
        %v4589 = vlaneseq
        %v4590 = vshrl.u32 %v4589, 7
        %v4591 = vsub.s32 %v4588, %v4590
        %v4592 = vrot.slane %v4358, %v4591
        %v4594 = vunpack.c.l.s4 1966171168
        %v4595 = vunpack.c.0.s8 %v4594
        %v4596 = vlaneseq
        %v4597 = vshrl.u32 %v4596, 7
        %v4598 = vsub.s32 %v4595, %v4597
        %v4599 = vrot.slane %v4592, %v4598
        %v4601 = vunpack.c.l.s4 1966171168
        %v4602 = vunpack.c.0.s8 %v4601
        %v4603 = vlaneseq
        %v4604 = vshrl.u32 %v4603, 7
        %v4605 = vsub.s32 %v4602, %v4604
        %v4606 = vrot.slane %v4360, %v4605
        %v4608 = vunpack.c.l.s4 1966171168
        %v4609 = vunpack.c.0.s8 %v4608
        %v4610 = vlaneseq
        %v4611 = vshrl.u32 %v4610, 7
        %v4612 = vsub.s32 %v4609, %v4611
        %v4613 = vrot.slane %v4606, %v4612
        %v4615 = vunpack.c.l.s4 1966171168
        %v4616 = vunpack.c.0.s8 %v4615
        %v4617 = vlaneseq
        %v4618 = vshrl.u32 %v4617, 7
        %v4619 = vsub.s32 %v4616, %v4618
        %v4620 = vrot.slane %v4362, %v4619
        %v4622 = vunpack.c.l.s4 1966171168
        %v4623 = vunpack.c.0.s8 %v4622
        %v4624 = vlaneseq
        %v4625 = vshrl.u32 %v4624, 7
        %v4626 = vsub.s32 %v4623, %v4625
        %v4627 = vrot.slane %v4620, %v4626
        %v4629 = vunpack.c.l.s4 1966171168
        %v4630 = vunpack.c.0.s8 %v4629
        %v4631 = vlaneseq
        %v4632 = vshrl.u32 %v4631, 7
        %v4633 = vsub.s32 %v4630, %v4632
        %v4634 = vrot.slane %v4364, %v4633
        %v4636 = vunpack.c.l.s4 1966171168
        %v4637 = vunpack.c.0.s8 %v4636
        %v4638 = vlaneseq
        %v4639 = vshrl.u32 %v4638, 7
        %v4640 = vsub.s32 %v4637, %v4639
        %v4641 = vrot.slane %v4634, %v4640
        %v4643 = vunpack.c.l.s4 1966171168
        %v4644 = vunpack.c.0.s8 %v4643
        %v4645 = vlaneseq
        %v4646 = vshrl.u32 %v4645, 7
        %v4647 = vsub.s32 %v4644, %v4646
        %v4648 = vrot.slane %v4366, %v4647
        %v4650 = vunpack.c.l.s4 1966171168
        %v4651 = vunpack.c.0.s8 %v4650
        %v4652 = vlaneseq
        %v4653 = vshrl.u32 %v4652, 7
        %v4654 = vsub.s32 %v4651, %v4653
        %v4655 = vrot.slane %v4648, %v4654
        %v4657 = vunpack.c.l.s4 1966171168
        %v4658 = vunpack.c.0.s8 %v4657
        %v4659 = vlaneseq
        %v4660 = vshrl.u32 %v4659, 7
        %v4661 = vsub.s32 %v4658, %v4660
        %v4662 = vrot.slane %v4368, %v4661
        %v4664 = vunpack.c.l.s4 1966171168
        %v4665 = vunpack.c.0.s8 %v4664
        %v4666 = vlaneseq
        %v4667 = vshrl.u32 %v4666, 7
        %v4668 = vsub.s32 %v4665, %v4667
        %v4669 = vrot.slane %v4662, %v4668
        %v4671 = vunpack.c.l.s4 1966171168
        %v4672 = vunpack.c.0.s8 %v4671
        %v4673 = vlaneseq
        %v4674 = vshrl.u32 %v4673, 7
        %v4675 = vsub.s32 %v4672, %v4674
        %v4676 = vrot.slane %v4370, %v4675
        %v4678 = vunpack.c.l.s4 1966171168
        %v4679 = vunpack.c.0.s8 %v4678
        %v4680 = vlaneseq
        %v4681 = vshrl.u32 %v4680, 7
        %v4682 = vsub.s32 %v4679, %v4681
        %v4683 = vrot.slane %v4676, %v4682
        %v4685 = vunpack.c.l.s4 1966171168
        %v4686 = vunpack.c.0.s8 %v4685
        %v4687 = vlaneseq
        %v4688 = vshrl.u32 %v4687, 7
        %v4689 = vsub.s32 %v4686, %v4688
        %v4690 = vrot.slane %v4372, %v4689
        %v4692 = vunpack.c.l.s4 1966171168
        %v4693 = vunpack.c.0.s8 %v4692
        %v4694 = vlaneseq
        %v4695 = vshrl.u32 %v4694, 7
        %v4696 = vsub.s32 %v4693, %v4695
        %v4697 = vrot.slane %v4690, %v4696
        %v4699 = vunpack.c.l.s4 1966171168
        %v4700 = vunpack.c.0.s8 %v4699
        %v4701 = vlaneseq
        %v4702 = vshrl.u32 %v4701, 7
        %v4703 = vsub.s32 %v4700, %v4702
        %v4704 = vrot.slane %v4374, %v4703
        %v4706 = vunpack.c.l.s4 1966171168
        %v4707 = vunpack.c.0.s8 %v4706
        %v4708 = vlaneseq
        %v4709 = vshrl.u32 %v4708, 7
        %v4710 = vsub.s32 %v4707, %v4709
        %v4711 = vrot.slane %v4704, %v4710
        %v4713 = vunpack.c.l.s4 1966171168
        %v4714 = vunpack.c.0.s8 %v4713
        %v4715 = vlaneseq
        %v4716 = vshrl.u32 %v4715, 7
        %v4717 = vsub.s32 %v4714, %v4716
        %v4718 = vrot.slane %v4376, %v4717
        %v4720 = vunpack.c.l.s4 1966171168
        %v4721 = vunpack.c.0.s8 %v4720
        %v4722 = vlaneseq
        %v4723 = vshrl.u32 %v4722, 7
        %v4724 = vsub.s32 %v4721, %v4723
        %v4725 = vrot.slane %v4718, %v4724
        %v4727 = vunpack.c.l.s4 1966171168
        %v4728 = vunpack.c.0.s8 %v4727
        %v4729 = vlaneseq
        %v4730 = vshrl.u32 %v4729, 7
        %v4731 = vsub.s32 %v4728, %v4730
        %v4732 = vrot.slane %v4378, %v4731
        %v4734 = vunpack.c.l.s4 1966171168
        %v4735 = vunpack.c.0.s8 %v4734
        %v4736 = vlaneseq
        %v4737 = vshrl.u32 %v4736, 7
        %v4738 = vsub.s32 %v4735, %v4737
        %v4739 = vrot.slane %v4732, %v4738
        %v4741 = vunpack.c.l.s4 1966171168
        %v4742 = vunpack.c.0.s8 %v4741
        %v4743 = vlaneseq
        %v4744 = vshrl.u32 %v4743, 7
        %v4745 = vsub.s32 %v4742, %v4744
        %v4746 = vrot.slane %v4380, %v4745
        %v4748 = vunpack.c.l.s4 1966171168
        %v4749 = vunpack.c.0.s8 %v4748
        %v4750 = vlaneseq
        %v4751 = vshrl.u32 %v4750, 7
        %v4752 = vsub.s32 %v4749, %v4751
        %v4753 = vrot.slane %v4746, %v4752
        %v4755 = vunpack.c.l.s4 1966171168
        %v4756 = vunpack.c.0.s8 %v4755
        %v4757 = vlaneseq
        %v4758 = vshrl.u32 %v4757, 7
        %v4759 = vsub.s32 %v4756, %v4758
        %v4760 = vrot.slane %v4382, %v4759
        %v4762 = vunpack.c.l.s4 1966171168
        %v4763 = vunpack.c.0.s8 %v4762
        %v4764 = vlaneseq
        %v4765 = vshrl.u32 %v4764, 7
        %v4766 = vsub.s32 %v4763, %v4765
        %v4767 = vrot.slane %v4760, %v4766
        %v4769 = vunpack.c.l.s4 1966171168
        %v4770 = vunpack.c.0.s8 %v4769
        %v4771 = vlaneseq
        %v4772 = vshrl.u32 %v4771, 7
        %v4773 = vsub.s32 %v4770, %v4772
        %v4774 = vrot.slane %v4384, %v4773
        %v4776 = vunpack.c.l.s4 1966171168
        %v4777 = vunpack.c.0.s8 %v4776
        %v4778 = vlaneseq
        %v4779 = vshrl.u32 %v4778, 7
        %v4780 = vsub.s32 %v4777, %v4779
        %v4781 = vrot.slane %v4774, %v4780
        %v4783 = vunpack.c.l.s4 1966171168
        %v4784 = vunpack.c.0.s8 %v4783
        %v4785 = vlaneseq
        %v4786 = vshrl.u32 %v4785, 7
        %v4787 = vsub.s32 %v4784, %v4786
        %v4788 = vrot.slane %v4386, %v4787
        %v4790 = vunpack.c.l.s4 1966171168
        %v4791 = vunpack.c.0.s8 %v4790
        %v4792 = vlaneseq
        %v4793 = vshrl.u32 %v4792, 7
        %v4794 = vsub.s32 %v4791, %v4793
        %v4795 = vrot.slane %v4788, %v4794
        %v4797 = vunpack.c.l.s4 1966171168
        %v4798 = vunpack.c.0.s8 %v4797
        %v4799 = vlaneseq
        %v4800 = vshrl.u32 %v4799, 7
        %v4801 = vsub.s32 %v4798, %v4800
        %v4802 = vrot.slane %v4388, %v4801
        %v4804 = vunpack.c.l.s4 1966171168
        %v4805 = vunpack.c.0.s8 %v4804
        %v4806 = vlaneseq
        %v4807 = vshrl.u32 %v4806, 7
        %v4808 = vsub.s32 %v4805, %v4807
        %v4809 = vrot.slane %v4802, %v4808
        %v4811 = vunpack.c.l.s4 1966171168
        %v4812 = vunpack.c.0.s8 %v4811
        %v4813 = vlaneseq
        %v4814 = vshrl.u32 %v4813, 7
        %v4815 = vsub.s32 %v4812, %v4814
        %v4816 = vrot.slane %v4390, %v4815
        %v4818 = vunpack.c.l.s4 1966171168
        %v4819 = vunpack.c.0.s8 %v4818
        %v4820 = vlaneseq
        %v4821 = vshrl.u32 %v4820, 7
        %v4822 = vsub.s32 %v4819, %v4821
        %v4823 = vrot.slane %v4816, %v4822
        %v4825 = vunpack.c.l.s4 1966171168
        %v4826 = vunpack.c.0.s8 %v4825
        %v4827 = vlaneseq
        %v4828 = vshrl.u32 %v4827, 7
        %v4829 = vsub.s32 %v4826, %v4828
        %v4830 = vrot.slane %v4392, %v4829
        %v4832 = vunpack.c.l.s4 1966171168
        %v4833 = vunpack.c.0.s8 %v4832
        %v4834 = vlaneseq
        %v4835 = vshrl.u32 %v4834, 7
        %v4836 = vsub.s32 %v4833, %v4835
        %v4837 = vrot.slane %v4830, %v4836
        %v4839 = vunpack.c.l.s4 1966171168
        %v4840 = vunpack.c.0.s8 %v4839
        %v4841 = vlaneseq
        %v4842 = vshrl.u32 %v4841, 7
        %v4843 = vsub.s32 %v4840, %v4842
        %v4844 = vrot.slane %v4394, %v4843
        %v4846 = vunpack.c.l.s4 1966171168
        %v4847 = vunpack.c.0.s8 %v4846
        %v4848 = vlaneseq
        %v4849 = vshrl.u32 %v4848, 7
        %v4850 = vsub.s32 %v4847, %v4849
        %v4851 = vrot.slane %v4844, %v4850
        %v4853 = vunpack.c.l.s4 1966171168
        %v4854 = vunpack.c.0.s8 %v4853
        %v4855 = vlaneseq
        %v4856 = vshrl.u32 %v4855, 7
        %v4857 = vsub.s32 %v4854, %v4856
        %v4858 = vrot.slane %v4396, %v4857
        %v4860 = vunpack.c.l.s4 1966171168
        %v4861 = vunpack.c.0.s8 %v4860
        %v4862 = vlaneseq
        %v4863 = vshrl.u32 %v4862, 7
        %v4864 = vsub.s32 %v4861, %v4863
        %v4865 = vrot.slane %v4858, %v4864
        %v4867 = vunpack.c.l.s4 1966171168
        %v4868 = vunpack.c.0.s8 %v4867
        %v4869 = vlaneseq
        %v4870 = vshrl.u32 %v4869, 7
        %v4871 = vsub.s32 %v4868, %v4870
        %v4872 = vrot.slane %v4398, %v4871
        %v4874 = vunpack.c.l.s4 1966171168
        %v4875 = vunpack.c.0.s8 %v4874
        %v4876 = vlaneseq
        %v4877 = vshrl.u32 %v4876, 7
        %v4878 = vsub.s32 %v4875, %v4877
        %v4879 = vrot.slane %v4872, %v4878
        %v4880 = vunpack.c.l.b16 %v4445
        %v4881 = vunpack.c.l.b16 %v4459
        %v4882 = vunpack.c.l.b16 %v4473
        %v4883 = vunpack.c.l.b16 %v4487
        %v4884 = vunpack.c.l.b16 %v4501
        %v4885 = vunpack.c.l.b16 %v4515
        %v4886 = vunpack.c.l.b16 %v4529
        %v4887 = vunpack.c.l.b16 %v4543
        %v4888 = vunpack.c.l.b16 %v4557
        %v4889 = vunpack.c.l.b16 %v4571
        %v4890 = vunpack.c.l.b16 %v4585
        %v4891 = vunpack.c.l.b16 %v4599
        %v4892 = vunpack.c.l.b16 %v4613
        %v4893 = vunpack.c.l.b16 %v4627
        %v4894 = vunpack.c.l.b16 %v4641
        %v4895 = vunpack.c.l.b16 %v4655
        %v4896 = vunpack.c.l.b16 %v4669
        %v4897 = vunpack.c.l.b16 %v4683
        %v4898 = vunpack.c.l.b16 %v4697
        %v4899 = vunpack.c.l.b16 %v4711
        %v4900 = vunpack.c.l.b16 %v4725
        %v4901 = vunpack.c.l.b16 %v4739
        %v4902 = vunpack.c.l.b16 %v4753
        %v4903 = vunpack.c.l.b16 %v4767
        %v4904 = vunpack.c.l.b16 %v4781
        %v4905 = vunpack.c.l.b16 %v4795
        %v4906 = vunpack.c.l.b16 %v4809
        %v4907 = vunpack.c.l.b16 %v4823
        %v4908 = vunpack.c.l.b16 %v4837
        %v4909 = vunpack.c.l.b16 %v4851
        %v4910 = vunpack.c.l.b16 %v4865
        %v4911 = vunpack.c.l.b16 %v4879
        %v4912 = vrot.slane %v4881, 7
        %vm4913 = vcmask 1041409
        %v4914 = vsel %vm4913, %v4912, %v4880
        %v4915 = vrot.slane %v4882, 6
        %vm4916 = vcmask 1042434
        %v4917 = vsel %vm4916, %v4915, %v4914
        %v4918 = vrot.slane %v4883, 5
        %vm4919 = vcmask 1043459
        %v4920 = vsel %vm4919, %v4918, %v4917
        %v4921 = vrot.slane %v4885, 7
        %v4922 = vsel %vm4913, %v4921, %v4884
        %v4923 = vrot.slane %v4886, 6
        %v4924 = vsel %vm4916, %v4923, %v4922
        %v4925 = vrot.slane %v4887, 5
        %v4926 = vsel %vm4919, %v4925, %v4924
        %v4927 = vrot.slane %v4889, 7
        %v4928 = vsel %vm4913, %v4927, %v4888
        %v4929 = vrot.slane %v4890, 6
        %v4930 = vsel %vm4916, %v4929, %v4928
        %v4931 = vrot.slane %v4891, 5
        %v4932 = vsel %vm4919, %v4931, %v4930
        %v4933 = vrot.slane %v4893, 7
        %v4934 = vsel %vm4913, %v4933, %v4892
        %v4935 = vrot.slane %v4894, 6
        %v4936 = vsel %vm4916, %v4935, %v4934
        %v4937 = vrot.slane %v4895, 5
        %v4938 = vsel %vm4919, %v4937, %v4936
        %v4939 = vrot.slane %v4897, 7
        %v4940 = vsel %vm4913, %v4939, %v4896
        %v4941 = vrot.slane %v4898, 6
        %v4942 = vsel %vm4916, %v4941, %v4940
        %v4943 = vrot.slane %v4899, 5
        %v4944 = vsel %vm4919, %v4943, %v4942
        %v4945 = vrot.slane %v4901, 7
        %v4946 = vsel %vm4913, %v4945, %v4900
        %v4947 = vrot.slane %v4902, 6
        %v4948 = vsel %vm4916, %v4947, %v4946
        %v4949 = vrot.slane %v4903, 5
        %v4950 = vsel %vm4919, %v4949, %v4948
        %v4951 = vrot.slane %v4905, 7
        %v4952 = vsel %vm4913, %v4951, %v4904
        %v4953 = vrot.slane %v4906, 6
        %v4954 = vsel %vm4916, %v4953, %v4952
        %v4955 = vrot.slane %v4907, 5
        %v4956 = vsel %vm4919, %v4955, %v4954
        %v4957 = vrot.slane %v4909, 7
        %v4958 = vsel %vm4913, %v4957, %v4908
        %v4959 = vrot.slane %v4910, 6
        %v4960 = vsel %vm4916, %v4959, %v4958
        %v4961 = vrot.slane %v4911, 5
        %v4962 = vsel %vm4919, %v4961, %v4960
        %v4963 = vpack.c.b16 %v4920, %v4920
        %v4964 = vpack.c.b16 %v4926, %v4926
        %v4965 = vpack.c.b16 %v4932, %v4932
        %v4966 = vpack.c.b16 %v4938, %v4938
        %v4967 = vpack.c.b16 %v4944, %v4944
        %v4968 = vpack.c.b16 %v4950, %v4950
        %v4969 = vpack.c.b16 %v4956, %v4956
        %v4970 = vpack.c.b16 %v4962, %v4962
        %v5004 = vunpack.c.l.s4 1966171168
        %v5005 = vunpack.c.0.s8 %v5004
        %v5006 = vlaneseq
        %v5007 = vshrl.u32 %v5006, 7
        %v5008 = vsub.s32 %v5005, %v5007
        %v5009 = vrot.slane %v4337, %v5008
        %v5011 = vunpack.c.l.s4 1966171168
        %v5012 = vunpack.c.0.s8 %v5011
        %v5013 = vlaneseq
        %v5014 = vshrl.u32 %v5013, 7
        %v5015 = vsub.s32 %v5012, %v5014
        %v5016 = vrot.slane %v5009, %v5015
        %v5018 = vunpack.c.l.s4 1966171168
        %v5019 = vunpack.c.0.s8 %v5018
        %v5020 = vlaneseq
        %v5021 = vshrl.u32 %v5020, 7
        %v5022 = vsub.s32 %v5019, %v5021
        %v5023 = vrot.slane %v4339, %v5022
        %v5025 = vunpack.c.l.s4 1966171168
        %v5026 = vunpack.c.0.s8 %v5025
        %v5027 = vlaneseq
        %v5028 = vshrl.u32 %v5027, 7
        %v5029 = vsub.s32 %v5026, %v5028
        %v5030 = vrot.slane %v5023, %v5029
        %v5032 = vunpack.c.l.s4 1966171168
        %v5033 = vunpack.c.0.s8 %v5032
        %v5034 = vlaneseq
        %v5035 = vshrl.u32 %v5034, 7
        %v5036 = vsub.s32 %v5033, %v5035
        %v5037 = vrot.slane %v4341, %v5036
        %v5039 = vunpack.c.l.s4 1966171168
        %v5040 = vunpack.c.0.s8 %v5039
        %v5041 = vlaneseq
        %v5042 = vshrl.u32 %v5041, 7
        %v5043 = vsub.s32 %v5040, %v5042
        %v5044 = vrot.slane %v5037, %v5043
        %v5046 = vunpack.c.l.s4 1966171168
        %v5047 = vunpack.c.0.s8 %v5046
        %v5048 = vlaneseq
        %v5049 = vshrl.u32 %v5048, 7
        %v5050 = vsub.s32 %v5047, %v5049
        %v5051 = vrot.slane %v4343, %v5050
        %v5053 = vunpack.c.l.s4 1966171168
        %v5054 = vunpack.c.0.s8 %v5053
        %v5055 = vlaneseq
        %v5056 = vshrl.u32 %v5055, 7
        %v5057 = vsub.s32 %v5054, %v5056
        %v5058 = vrot.slane %v5051, %v5057
        %v5060 = vunpack.c.l.s4 1966171168
        %v5061 = vunpack.c.0.s8 %v5060
        %v5062 = vlaneseq
        %v5063 = vshrl.u32 %v5062, 7
        %v5064 = vsub.s32 %v5061, %v5063
        %v5065 = vrot.slane %v4345, %v5064
        %v5067 = vunpack.c.l.s4 1966171168
        %v5068 = vunpack.c.0.s8 %v5067
        %v5069 = vlaneseq
        %v5070 = vshrl.u32 %v5069, 7
        %v5071 = vsub.s32 %v5068, %v5070
        %v5072 = vrot.slane %v5065, %v5071
        %v5074 = vunpack.c.l.s4 1966171168
        %v5075 = vunpack.c.0.s8 %v5074
        %v5076 = vlaneseq
        %v5077 = vshrl.u32 %v5076, 7
        %v5078 = vsub.s32 %v5075, %v5077
        %v5079 = vrot.slane %v4347, %v5078
        %v5081 = vunpack.c.l.s4 1966171168
        %v5082 = vunpack.c.0.s8 %v5081
        %v5083 = vlaneseq
        %v5084 = vshrl.u32 %v5083, 7
        %v5085 = vsub.s32 %v5082, %v5084
        %v5086 = vrot.slane %v5079, %v5085
        %v5088 = vunpack.c.l.s4 1966171168
        %v5089 = vunpack.c.0.s8 %v5088
        %v5090 = vlaneseq
        %v5091 = vshrl.u32 %v5090, 7
        %v5092 = vsub.s32 %v5089, %v5091
        %v5093 = vrot.slane %v4349, %v5092
        %v5095 = vunpack.c.l.s4 1966171168
        %v5096 = vunpack.c.0.s8 %v5095
        %v5097 = vlaneseq
        %v5098 = vshrl.u32 %v5097, 7
        %v5099 = vsub.s32 %v5096, %v5098
        %v5100 = vrot.slane %v5093, %v5099
        %v5102 = vunpack.c.l.s4 1966171168
        %v5103 = vunpack.c.0.s8 %v5102
        %v5104 = vlaneseq
        %v5105 = vshrl.u32 %v5104, 7
        %v5106 = vsub.s32 %v5103, %v5105
        %v5107 = vrot.slane %v4351, %v5106
        %v5109 = vunpack.c.l.s4 1966171168
        %v5110 = vunpack.c.0.s8 %v5109
        %v5111 = vlaneseq
        %v5112 = vshrl.u32 %v5111, 7
        %v5113 = vsub.s32 %v5110, %v5112
        %v5114 = vrot.slane %v5107, %v5113
        %v5116 = vunpack.c.l.s4 1966171168
        %v5117 = vunpack.c.0.s8 %v5116
        %v5118 = vlaneseq
        %v5119 = vshrl.u32 %v5118, 7
        %v5120 = vsub.s32 %v5117, %v5119
        %v5121 = vrot.slane %v4353, %v5120
        %v5123 = vunpack.c.l.s4 1966171168
        %v5124 = vunpack.c.0.s8 %v5123
        %v5125 = vlaneseq
        %v5126 = vshrl.u32 %v5125, 7
        %v5127 = vsub.s32 %v5124, %v5126
        %v5128 = vrot.slane %v5121, %v5127
        %v5130 = vunpack.c.l.s4 1966171168
        %v5131 = vunpack.c.0.s8 %v5130
        %v5132 = vlaneseq
        %v5133 = vshrl.u32 %v5132, 7
        %v5134 = vsub.s32 %v5131, %v5133
        %v5135 = vrot.slane %v4355, %v5134
        %v5137 = vunpack.c.l.s4 1966171168
        %v5138 = vunpack.c.0.s8 %v5137
        %v5139 = vlaneseq
        %v5140 = vshrl.u32 %v5139, 7
        %v5141 = vsub.s32 %v5138, %v5140
        %v5142 = vrot.slane %v5135, %v5141
        %v5144 = vunpack.c.l.s4 1966171168
        %v5145 = vunpack.c.0.s8 %v5144
        %v5146 = vlaneseq
        %v5147 = vshrl.u32 %v5146, 7
        %v5148 = vsub.s32 %v5145, %v5147
        %v5149 = vrot.slane %v4357, %v5148
        %v5151 = vunpack.c.l.s4 1966171168
        %v5152 = vunpack.c.0.s8 %v5151
        %v5153 = vlaneseq
        %v5154 = vshrl.u32 %v5153, 7
        %v5155 = vsub.s32 %v5152, %v5154
        %v5156 = vrot.slane %v5149, %v5155
        %v5158 = vunpack.c.l.s4 1966171168
        %v5159 = vunpack.c.0.s8 %v5158
        %v5160 = vlaneseq
        %v5161 = vshrl.u32 %v5160, 7
        %v5162 = vsub.s32 %v5159, %v5161
        %v5163 = vrot.slane %v4359, %v5162
        %v5165 = vunpack.c.l.s4 1966171168
        %v5166 = vunpack.c.0.s8 %v5165
        %v5167 = vlaneseq
        %v5168 = vshrl.u32 %v5167, 7
        %v5169 = vsub.s32 %v5166, %v5168
        %v5170 = vrot.slane %v5163, %v5169
        %v5172 = vunpack.c.l.s4 1966171168
        %v5173 = vunpack.c.0.s8 %v5172
        %v5174 = vlaneseq
        %v5175 = vshrl.u32 %v5174, 7
        %v5176 = vsub.s32 %v5173, %v5175
        %v5177 = vrot.slane %v4361, %v5176
        %v5179 = vunpack.c.l.s4 1966171168
        %v5180 = vunpack.c.0.s8 %v5179
        %v5181 = vlaneseq
        %v5182 = vshrl.u32 %v5181, 7
        %v5183 = vsub.s32 %v5180, %v5182
        %v5184 = vrot.slane %v5177, %v5183
        %v5186 = vunpack.c.l.s4 1966171168
        %v5187 = vunpack.c.0.s8 %v5186
        %v5188 = vlaneseq
        %v5189 = vshrl.u32 %v5188, 7
        %v5190 = vsub.s32 %v5187, %v5189
        %v5191 = vrot.slane %v4363, %v5190
        %v5193 = vunpack.c.l.s4 1966171168
        %v5194 = vunpack.c.0.s8 %v5193
        %v5195 = vlaneseq
        %v5196 = vshrl.u32 %v5195, 7
        %v5197 = vsub.s32 %v5194, %v5196
        %v5198 = vrot.slane %v5191, %v5197
        %v5200 = vunpack.c.l.s4 1966171168
        %v5201 = vunpack.c.0.s8 %v5200
        %v5202 = vlaneseq
        %v5203 = vshrl.u32 %v5202, 7
        %v5204 = vsub.s32 %v5201, %v5203
        %v5205 = vrot.slane %v4365, %v5204
        %v5207 = vunpack.c.l.s4 1966171168
        %v5208 = vunpack.c.0.s8 %v5207
        %v5209 = vlaneseq
        %v5210 = vshrl.u32 %v5209, 7
        %v5211 = vsub.s32 %v5208, %v5210
        %v5212 = vrot.slane %v5205, %v5211
        %v5214 = vunpack.c.l.s4 1966171168
        %v5215 = vunpack.c.0.s8 %v5214
        %v5216 = vlaneseq
        %v5217 = vshrl.u32 %v5216, 7
        %v5218 = vsub.s32 %v5215, %v5217
        %v5219 = vrot.slane %v4367, %v5218
        %v5221 = vunpack.c.l.s4 1966171168
        %v5222 = vunpack.c.0.s8 %v5221
        %v5223 = vlaneseq
        %v5224 = vshrl.u32 %v5223, 7
        %v5225 = vsub.s32 %v5222, %v5224
        %v5226 = vrot.slane %v5219, %v5225
        %v5228 = vunpack.c.l.s4 1966171168
        %v5229 = vunpack.c.0.s8 %v5228
        %v5230 = vlaneseq
        %v5231 = vshrl.u32 %v5230, 7
        %v5232 = vsub.s32 %v5229, %v5231
        %v5233 = vrot.slane %v4369, %v5232
        %v5235 = vunpack.c.l.s4 1966171168
        %v5236 = vunpack.c.0.s8 %v5235
        %v5237 = vlaneseq
        %v5238 = vshrl.u32 %v5237, 7
        %v5239 = vsub.s32 %v5236, %v5238
        %v5240 = vrot.slane %v5233, %v5239
        %v5242 = vunpack.c.l.s4 1966171168
        %v5243 = vunpack.c.0.s8 %v5242
        %v5244 = vlaneseq
        %v5245 = vshrl.u32 %v5244, 7
        %v5246 = vsub.s32 %v5243, %v5245
        %v5247 = vrot.slane %v4371, %v5246
        %v5249 = vunpack.c.l.s4 1966171168
        %v5250 = vunpack.c.0.s8 %v5249
        %v5251 = vlaneseq
        %v5252 = vshrl.u32 %v5251, 7
        %v5253 = vsub.s32 %v5250, %v5252
        %v5254 = vrot.slane %v5247, %v5253
        %v5256 = vunpack.c.l.s4 1966171168
        %v5257 = vunpack.c.0.s8 %v5256
        %v5258 = vlaneseq
        %v5259 = vshrl.u32 %v5258, 7
        %v5260 = vsub.s32 %v5257, %v5259
        %v5261 = vrot.slane %v4373, %v5260
        %v5263 = vunpack.c.l.s4 1966171168
        %v5264 = vunpack.c.0.s8 %v5263
        %v5265 = vlaneseq
        %v5266 = vshrl.u32 %v5265, 7
        %v5267 = vsub.s32 %v5264, %v5266
        %v5268 = vrot.slane %v5261, %v5267
        %v5270 = vunpack.c.l.s4 1966171168
        %v5271 = vunpack.c.0.s8 %v5270
        %v5272 = vlaneseq
        %v5273 = vshrl.u32 %v5272, 7
        %v5274 = vsub.s32 %v5271, %v5273
        %v5275 = vrot.slane %v4375, %v5274
        %v5277 = vunpack.c.l.s4 1966171168
        %v5278 = vunpack.c.0.s8 %v5277
        %v5279 = vlaneseq
        %v5280 = vshrl.u32 %v5279, 7
        %v5281 = vsub.s32 %v5278, %v5280
        %v5282 = vrot.slane %v5275, %v5281
        %v5284 = vunpack.c.l.s4 1966171168
        %v5285 = vunpack.c.0.s8 %v5284
        %v5286 = vlaneseq
        %v5287 = vshrl.u32 %v5286, 7
        %v5288 = vsub.s32 %v5285, %v5287
        %v5289 = vrot.slane %v4377, %v5288
        %v5291 = vunpack.c.l.s4 1966171168
        %v5292 = vunpack.c.0.s8 %v5291
        %v5293 = vlaneseq
        %v5294 = vshrl.u32 %v5293, 7
        %v5295 = vsub.s32 %v5292, %v5294
        %v5296 = vrot.slane %v5289, %v5295
        %v5298 = vunpack.c.l.s4 1966171168
        %v5299 = vunpack.c.0.s8 %v5298
        %v5300 = vlaneseq
        %v5301 = vshrl.u32 %v5300, 7
        %v5302 = vsub.s32 %v5299, %v5301
        %v5303 = vrot.slane %v4379, %v5302
        %v5305 = vunpack.c.l.s4 1966171168
        %v5306 = vunpack.c.0.s8 %v5305
        %v5307 = vlaneseq
        %v5308 = vshrl.u32 %v5307, 7
        %v5309 = vsub.s32 %v5306, %v5308
        %v5310 = vrot.slane %v5303, %v5309
        %v5312 = vunpack.c.l.s4 1966171168
        %v5313 = vunpack.c.0.s8 %v5312
        %v5314 = vlaneseq
        %v5315 = vshrl.u32 %v5314, 7
        %v5316 = vsub.s32 %v5313, %v5315
        %v5317 = vrot.slane %v4381, %v5316
        %v5319 = vunpack.c.l.s4 1966171168
        %v5320 = vunpack.c.0.s8 %v5319
        %v5321 = vlaneseq
        %v5322 = vshrl.u32 %v5321, 7
        %v5323 = vsub.s32 %v5320, %v5322
        %v5324 = vrot.slane %v5317, %v5323
        %v5326 = vunpack.c.l.s4 1966171168
        %v5327 = vunpack.c.0.s8 %v5326
        %v5328 = vlaneseq
        %v5329 = vshrl.u32 %v5328, 7
        %v5330 = vsub.s32 %v5327, %v5329
        %v5331 = vrot.slane %v4383, %v5330
        %v5333 = vunpack.c.l.s4 1966171168
        %v5334 = vunpack.c.0.s8 %v5333
        %v5335 = vlaneseq
        %v5336 = vshrl.u32 %v5335, 7
        %v5337 = vsub.s32 %v5334, %v5336
        %v5338 = vrot.slane %v5331, %v5337
        %v5340 = vunpack.c.l.s4 1966171168
        %v5341 = vunpack.c.0.s8 %v5340
        %v5342 = vlaneseq
        %v5343 = vshrl.u32 %v5342, 7
        %v5344 = vsub.s32 %v5341, %v5343
        %v5345 = vrot.slane %v4385, %v5344
        %v5347 = vunpack.c.l.s4 1966171168
        %v5348 = vunpack.c.0.s8 %v5347
        %v5349 = vlaneseq
        %v5350 = vshrl.u32 %v5349, 7
        %v5351 = vsub.s32 %v5348, %v5350
        %v5352 = vrot.slane %v5345, %v5351
        %v5354 = vunpack.c.l.s4 1966171168
        %v5355 = vunpack.c.0.s8 %v5354
        %v5356 = vlaneseq
        %v5357 = vshrl.u32 %v5356, 7
        %v5358 = vsub.s32 %v5355, %v5357
        %v5359 = vrot.slane %v4387, %v5358
        %v5361 = vunpack.c.l.s4 1966171168
        %v5362 = vunpack.c.0.s8 %v5361
        %v5363 = vlaneseq
        %v5364 = vshrl.u32 %v5363, 7
        %v5365 = vsub.s32 %v5362, %v5364
        %v5366 = vrot.slane %v5359, %v5365
        %v5368 = vunpack.c.l.s4 1966171168
        %v5369 = vunpack.c.0.s8 %v5368
        %v5370 = vlaneseq
        %v5371 = vshrl.u32 %v5370, 7
        %v5372 = vsub.s32 %v5369, %v5371
        %v5373 = vrot.slane %v4389, %v5372
        %v5375 = vunpack.c.l.s4 1966171168
        %v5376 = vunpack.c.0.s8 %v5375
        %v5377 = vlaneseq
        %v5378 = vshrl.u32 %v5377, 7
        %v5379 = vsub.s32 %v5376, %v5378
        %v5380 = vrot.slane %v5373, %v5379
        %v5382 = vunpack.c.l.s4 1966171168
        %v5383 = vunpack.c.0.s8 %v5382
        %v5384 = vlaneseq
        %v5385 = vshrl.u32 %v5384, 7
        %v5386 = vsub.s32 %v5383, %v5385
        %v5387 = vrot.slane %v4391, %v5386
        %v5389 = vunpack.c.l.s4 1966171168
        %v5390 = vunpack.c.0.s8 %v5389
        %v5391 = vlaneseq
        %v5392 = vshrl.u32 %v5391, 7
        %v5393 = vsub.s32 %v5390, %v5392
        %v5394 = vrot.slane %v5387, %v5393
        %v5396 = vunpack.c.l.s4 1966171168
        %v5397 = vunpack.c.0.s8 %v5396
        %v5398 = vlaneseq
        %v5399 = vshrl.u32 %v5398, 7
        %v5400 = vsub.s32 %v5397, %v5399
        %v5401 = vrot.slane %v4393, %v5400
        %v5403 = vunpack.c.l.s4 1966171168
        %v5404 = vunpack.c.0.s8 %v5403
        %v5405 = vlaneseq
        %v5406 = vshrl.u32 %v5405, 7
        %v5407 = vsub.s32 %v5404, %v5406
        %v5408 = vrot.slane %v5401, %v5407
        %v5410 = vunpack.c.l.s4 1966171168
        %v5411 = vunpack.c.0.s8 %v5410
        %v5412 = vlaneseq
        %v5413 = vshrl.u32 %v5412, 7
        %v5414 = vsub.s32 %v5411, %v5413
        %v5415 = vrot.slane %v4395, %v5414
        %v5417 = vunpack.c.l.s4 1966171168
        %v5418 = vunpack.c.0.s8 %v5417
        %v5419 = vlaneseq
        %v5420 = vshrl.u32 %v5419, 7
        %v5421 = vsub.s32 %v5418, %v5420
        %v5422 = vrot.slane %v5415, %v5421
        %v5424 = vunpack.c.l.s4 1966171168
        %v5425 = vunpack.c.0.s8 %v5424
        %v5426 = vlaneseq
        %v5427 = vshrl.u32 %v5426, 7
        %v5428 = vsub.s32 %v5425, %v5427
        %v5429 = vrot.slane %v4397, %v5428
        %v5431 = vunpack.c.l.s4 1966171168
        %v5432 = vunpack.c.0.s8 %v5431
        %v5433 = vlaneseq
        %v5434 = vshrl.u32 %v5433, 7
        %v5435 = vsub.s32 %v5432, %v5434
        %v5436 = vrot.slane %v5429, %v5435
        %v5438 = vunpack.c.l.s4 1966171168
        %v5439 = vunpack.c.0.s8 %v5438
        %v5440 = vlaneseq
        %v5441 = vshrl.u32 %v5440, 7
        %v5442 = vsub.s32 %v5439, %v5441
        %v5443 = vrot.slane %v4399, %v5442
        %v5445 = vunpack.c.l.s4 1966171168
        %v5446 = vunpack.c.0.s8 %v5445
        %v5447 = vlaneseq
        %v5448 = vshrl.u32 %v5447, 7
        %v5449 = vsub.s32 %v5446, %v5448
        %v5450 = vrot.slane %v5443, %v5449
        %v5451 = vunpack.c.l.b16 %v5016
        %v5452 = vunpack.c.l.b16 %v5030
        %v5453 = vunpack.c.l.b16 %v5044
        %v5454 = vunpack.c.l.b16 %v5058
        %v5455 = vunpack.c.l.b16 %v5072
        %v5456 = vunpack.c.l.b16 %v5086
        %v5457 = vunpack.c.l.b16 %v5100
        %v5458 = vunpack.c.l.b16 %v5114
        %v5459 = vunpack.c.l.b16 %v5128
        %v5460 = vunpack.c.l.b16 %v5142
        %v5461 = vunpack.c.l.b16 %v5156
        %v5462 = vunpack.c.l.b16 %v5170
        %v5463 = vunpack.c.l.b16 %v5184
        %v5464 = vunpack.c.l.b16 %v5198
        %v5465 = vunpack.c.l.b16 %v5212
        %v5466 = vunpack.c.l.b16 %v5226
        %v5467 = vunpack.c.l.b16 %v5240
        %v5468 = vunpack.c.l.b16 %v5254
        %v5469 = vunpack.c.l.b16 %v5268
        %v5470 = vunpack.c.l.b16 %v5282
        %v5471 = vunpack.c.l.b16 %v5296
        %v5472 = vunpack.c.l.b16 %v5310
        %v5473 = vunpack.c.l.b16 %v5324
        %v5474 = vunpack.c.l.b16 %v5338
        %v5475 = vunpack.c.l.b16 %v5352
        %v5476 = vunpack.c.l.b16 %v5366
        %v5477 = vunpack.c.l.b16 %v5380
        %v5478 = vunpack.c.l.b16 %v5394
        %v5479 = vunpack.c.l.b16 %v5408
        %v5480 = vunpack.c.l.b16 %v5422
        %v5481 = vunpack.c.l.b16 %v5436
        %v5482 = vunpack.c.l.b16 %v5450
        %v5483 = vrot.slane %v5452, 7
        %v5484 = vsel %vm4913, %v5483, %v5451
        %v5485 = vrot.slane %v5453, 6
        %v5486 = vsel %vm4916, %v5485, %v5484
        %v5487 = vrot.slane %v5454, 5
        %v5488 = vsel %vm4919, %v5487, %v5486
        %v5489 = vrot.slane %v5456, 7
        %v5490 = vsel %vm4913, %v5489, %v5455
        %v5491 = vrot.slane %v5457, 6
        %v5492 = vsel %vm4916, %v5491, %v5490
        %v5493 = vrot.slane %v5458, 5
        %v5494 = vsel %vm4919, %v5493, %v5492
        %v5495 = vrot.slane %v5460, 7
        %v5496 = vsel %vm4913, %v5495, %v5459
        %v5497 = vrot.slane %v5461, 6
        %v5498 = vsel %vm4916, %v5497, %v5496
        %v5499 = vrot.slane %v5462, 5
        %v5500 = vsel %vm4919, %v5499, %v5498
        %v5501 = vrot.slane %v5464, 7
        %v5502 = vsel %vm4913, %v5501, %v5463
        %v5503 = vrot.slane %v5465, 6
        %v5504 = vsel %vm4916, %v5503, %v5502
        %v5505 = vrot.slane %v5466, 5
        %v5506 = vsel %vm4919, %v5505, %v5504
        %v5507 = vrot.slane %v5468, 7
        %v5508 = vsel %vm4913, %v5507, %v5467
        %v5509 = vrot.slane %v5469, 6
        %v5510 = vsel %vm4916, %v5509, %v5508
        %v5511 = vrot.slane %v5470, 5
        %v5512 = vsel %vm4919, %v5511, %v5510
        %v5513 = vrot.slane %v5472, 7
        %v5514 = vsel %vm4913, %v5513, %v5471
        %v5515 = vrot.slane %v5473, 6
        %v5516 = vsel %vm4916, %v5515, %v5514
        %v5517 = vrot.slane %v5474, 5
        %v5518 = vsel %vm4919, %v5517, %v5516
        %v5519 = vrot.slane %v5476, 7
        %v5520 = vsel %vm4913, %v5519, %v5475
        %v5521 = vrot.slane %v5477, 6
        %v5522 = vsel %vm4916, %v5521, %v5520
        %v5523 = vrot.slane %v5478, 5
        %v5524 = vsel %vm4919, %v5523, %v5522
        %v5525 = vrot.slane %v5480, 7
        %v5526 = vsel %vm4913, %v5525, %v5479
        %v5527 = vrot.slane %v5481, 6
        %v5528 = vsel %vm4916, %v5527, %v5526
        %v5529 = vrot.slane %v5482, 5
        %v5530 = vsel %vm4919, %v5529, %v5528
        %v5531 = vpack.c.b16 %v5488, %v5488
        %v5532 = vpack.c.b16 %v5494, %v5494
        %v5533 = vpack.c.b16 %v5500, %v5500
        %v5534 = vpack.c.b16 %v5506, %v5506
        %v5535 = vpack.c.b16 %v5512, %v5512
        %v5536 = vpack.c.b16 %v5518, %v5518
        %v5537 = vpack.c.b16 %v5524, %v5524
        %v5538 = vpack.c.b16 %v5530, %v5530
        %5539 = vrot.lane.b32.xlu0 %v5531, 64
        %v5540 = vpop.permute.xlu0 %5539
        %5541 = vrot.lane.b32.xlu0 %v5532, 64
        %v5542 = vpop.permute.xlu0 %5541
        %5543 = vrot.lane.b32.xlu0 %v5533, 64
        %v5544 = vpop.permute.xlu0 %5543
        %5545 = vrot.lane.b32.xlu0 %v5534, 64
        %v5546 = vpop.permute.xlu0 %5545
        %5547 = vrot.lane.b32.xlu0 %v5535, 64
        %v5548 = vpop.permute.xlu0 %5547
        %5549 = vrot.lane.b32.xlu0 %v5536, 64
        %v5550 = vpop.permute.xlu0 %5549
        %5551 = vrot.lane.b32.xlu0 %v5537, 64
        %v5552 = vpop.permute.xlu0 %5551
        %5553 = vrot.lane.b32.xlu0 %v5538, 64
        %v5554 = vpop.permute.xlu0 %5553
        %vm5555 = vcmask 523264
        %v5558 = vsel %vm5555, %v4963, %v5540
        %v5562 = vsel %vm5555, %v4964, %v5542
        %v5566 = vsel %vm5555, %v4965, %v5544
        %v5570 = vsel %vm5555, %v4966, %v5546
        %v5574 = vsel %vm5555, %v4967, %v5548
        %v5578 = vsel %vm5555, %v4968, %v5550
        %v5582 = vsel %vm5555, %v4969, %v5552
        %v5586 = vsel %vm5555, %v4970, %v5554
        %5588 = vst [vmem:[%s361] sm:$0x3] %v5558
        %5589 = vst [vmem:[%s361 + $0x2] sm:$0x3] %v5562
        %5590 = vst [vmem:[%s361 + $0x4] sm:$0x3] %v5566
        %5591 = vst [vmem:[%s361 + $0x6] sm:$0x3] %v5570
        %5592 = vst [vmem:[%s361 + $0x8] sm:$0x3] %v5574
        %5593 = vst [vmem:[%s361 + $0xa] sm:$0x3] %v5578
        %5594 = vst [vmem:[%s361 + $0xc] sm:$0x3] %v5582
        %5595 = vst [vmem:[%s361 + $0xe] sm:$0x3] %v5586
        %s5596 = sand.u32 %s205, 1
        %s5597 = scalar_lea.sflag [#allocation4], %s5596
        %s5598 = sand.u32 %s205, 1
        %s5599 = smul.addr %s5598, 16
        %s5600 = scalar_lea.vmem [#allocation3], %s5599
        // Predicated region
        $region49: #{tpu_custom_call.1} parent=43 // pred_check
          %p5601 = pneg %p215
        $region50: #{tpu_custom_call.1} parent=43 // pred_check_branch
          %5603 = sbr.rel (%p5601) target = $region52
        $region51: #{tpu_custom_call.1} parent=43 // pred_region
          %s5604 = smul.u32 8, %s25
          %s5606 = ssub.s32 256, 256
          %5607 = vsyncadd %s5597, %s5606
          %s5608 = smul.addr %s24, 8
          %s5609 = sadd.s32 %s5604, %s5608
          %s5610 = smul.addr %s5609, 32
          %s5611 = scalar_lea.hbm %s6, %s5610
          %s5612 = sshll.u32 %s5600, 4
          %s5613 = int_to_ptr.vmem [resolvable:$true] %s5612
          %5618 = dma.vmem_to_hbm [thread:$0]  %s5613, 256, %s5611, %s5597, 32, 32, 2
        $region52: #{tpu_custom_call.1} parent=43 // pred_fallthru
          _
      $region44: #{tpu_custom_call.1} parent=5 // pred_fallthru
        _
      %p5619 = scmp.le.s32.totalorder 2, %s15
      // Predicated region
      $region53: #{tpu_custom_call.1} parent=5 // pred_check
        %p5620 = pneg %p5619
      $region54: #{tpu_custom_call.1} parent=5 // pred_check_branch
        %5622 = sbr.rel (%p5620) target = $region56
      $region55: #{tpu_custom_call.1} parent=5 // pred_region
        %s5623 = ssub.s32 %s15, 2
        // Predicated region
        $region57: #{tpu_custom_call.1} parent=55 // pred_check
          %p5624 = pneg %p221
        $region58: #{tpu_custom_call.1} parent=55 // pred_check_branch
          %5626 = sbr.rel (%p5624) target = $region60
        $region59: #{tpu_custom_call.1} parent=55 // pred_region
          %s5627 = sand.u32 %s206, 1
          %s5628 = scalar_lea.sflag [#allocation4], %s5627
          %s5629 = sand.u32 %s206, 1
          %s5630 = smul.addr %s5629, 16
          %s5631 = scalar_lea.vmem [#allocation3], %s5630
          %5632 = dma.done %s5628, 256
        $region60: #{tpu_custom_call.1} parent=55 // pred_fallthru
          _
      $region56: #{tpu_custom_call.1} parent=5 // pred_fallthru
        _
    $region6: #{tpu_custom_call.1} parent=1 // loop_footer
      %s19 = sadd.s32 1, %s15
    $region7: #{tpu_custom_call.1} parent=1 // loop_footer_branch
      %14 = sbr.rel target = $region3
    $region8: #{tpu_custom_call.1} parent=1 // loop_exit
      _
    %5633 = vsyncpa [#allocation4], 1
    %s5634 = scalar_lea.sflag [#allocation4], 1
    %5635 = vsyncpa %s5634, 1

</llo_original>
